<compile_context>
chip_gen: v7x
topology: tpu7x:2x2x1
jax: 0.10.0
libtpu: 0.0.40
codegen_flags: <defaults>
</compile_context>

<pallas_src>
import functools

import jax
import jax.numpy as jnp
from jax import lax
from jax.experimental import pallas as pl
from jax.experimental.pallas import tpu as pltpu


# ---------------------------------------------------------------------------
# Fully fused kernel: 9-way Linear+ReLU prologue, merged 2-branch propagation,
# BN-folded lin1 epilogue.
#
# grid = (k_step, row_tile, reduction_tile), all "arbitrary" (sequential).
# Resident VMEM scratch:
#   st   : (2*Npad, 6H) bf16   ping-pong propagation state  [x2 | x3]
#   acc  : (Npad,   6H) f32    running sums over k (x1 folded into x2 half)
#   tacc : (tm,     6H) f32    per-row-tile reduction accumulator
# ---------------------------------------------------------------------------
def _gra_inc_pro_kernel(x_ref, w9_ref, b9_ref, a_ref, w1_ref, b1_ref, o_ref,
                        st_ref, acc_ref, tacc_ref,
                        *, k1, k2, c3, tm, tk, n_pad, inv1, inv2):
    t = pl.program_id(0)            # propagation step
    i = pl.program_id(1)            # output row tile
    j = pl.program_id(2)            # reduction tile
    nj = pl.num_programs(2)
    t_last = pl.num_programs(0) - 1

    rd = t % 2                      # ping-pong read slot
    wr = 1 - rd                     # ping-pong write slot

    # ---- one-time prologue: fused 9-way Linear + ReLU, seed state / sums ----
    @pl.when((t == 0) & (i == 0) & (j == 0))
    def _():
        h = jnp.maximum(
            jnp.dot(x_ref[...], w9_ref[...],
                    preferred_element_type=jnp.float32) + b9_ref[...], 0.0)
        x1 = h[:, 0:c3]                       # never propagated
        x23 = h[:, c3:3 * c3]                 # [x2 | x3], (Npad, 6H)
        st_ref[0:n_pad, :] = x23.astype(jnp.bfloat16)       # slot 0
        # fold x1 into the x2 running sum:
        #   (sum_k A^k x2 + (k1+1)*x1) * inv1 == mean_k A^k x2 + x1
        acc_ref[:, 0:c3] = x23[:, 0:c3] + (k1 + 1.0) * x1
        acc_ref[:, c3:2 * c3] = x23[:, c3:2 * c3]

    # ---- per-row-tile reduction accumulator -------------------------------
    @pl.when(j == 0)
    def _():
        tacc_ref[...] = jnp.zeros_like(tacc_ref)

    # ---- merged propagation matmul for BOTH branches: (tm,tk) x (tk,6H) ----
    src = pl.multiple_of(rd * n_pad + j * tk, tk)
    tacc_ref[...] += jnp.dot(a_ref[...], st_ref[pl.ds(src, tk), :],
                             preferred_element_type=jnp.float32)

    # ---- end of reduction for (t, i): commit state / sums, epilogue --------
    @pl.when(j == nj - 1)
    def _():
        os_ = pl.multiple_of(i * tm, tm)
        dst = pl.multiple_of(wr * n_pad + i * tm, tm)
        st_ref[pl.ds(dst, tm), :] = tacc_ref[...].astype(jnp.bfloat16)

        @pl.when(t < k1)                      # x2 branch still accumulating
        def _():
            acc_ref[pl.ds(os_, tm), 0:c3] += tacc_ref[:, 0:c3]

        @pl.when(t < k2)                      # x3 branch still accumulating
        def _():
            acc_ref[pl.ds(os_, tm), c3:2 * c3] += tacc_ref[:, c3:2 * c3]

        # fused epilogue: s = x1 + mean_k(A^k x2) + mean_k(A^k x3), then the
        # BN-folded lin1 matmul into a lane-dense (tm, 128-padded) slab.
        @pl.when(t == t_last)
        def _():
            s = (acc_ref[pl.ds(os_, tm), 0:c3] * inv1
                 + acc_ref[pl.ds(os_, tm), c3:2 * c3] * inv2)
            o_ref[pl.ds(os_, tm), :] = (
                jnp.dot(s, w1_ref[...], preferred_element_type=jnp.float32)
                + b1_ref[...])


def _fused_forward_call(x, w9, b9, a_bf16, w1p, b1p, *, k1, k2, c3, tile):
    n_pad, f = x.shape
    c9 = w9.shape[1]
    cpad = w1p.shape[1]
    tm = tk = tile
    nr, nj = n_pad // tm, n_pad // tk
    kmax = max(k1, k2, 1)            # at least one grid step (gated if K==0)

    kern = functools.partial(_gra_inc_pro_kernel, k1=k1, k2=k2, c3=c3,
                             tm=tm, tk=tk, n_pad=n_pad,
                             inv1=1.0 / (k1 + 1), inv2=1.0 / (k2 + 1))
    return pl.pallas_call(
        kern,
        out_shape=jax.ShapeDtypeStruct((n_pad, cpad), jnp.float32),
        grid_spec=pltpu.PrefetchScalarGridSpec(
            num_scalar_prefetch=0,
            grid=(kmax, nr, nj),
            in_specs=[pl.BlockSpec((n_pad, f), lambda t, i, j: (0, 0)),   # x
                      pl.BlockSpec((f, c9), lambda t, i, j: (0, 0)),      # W9
                      pl.BlockSpec((1, c9), lambda t, i, j: (0, 0)),      # b9
                      pl.BlockSpec((tm, tk), lambda t, i, j: (i, j)),     # A
                      pl.BlockSpec((c3, cpad), lambda t, i, j: (0, 0)),   # w1'
                      pl.BlockSpec((1, cpad), lambda t, i, j: (0, 0))],   # b1'
            out_specs=pl.BlockSpec((n_pad, cpad), lambda t, i, j: (0, 0)),
            scratch_shapes=[
                pltpu.VMEM((2 * n_pad, 2 * c3), jnp.bfloat16),  # state (ping-pong)
                pltpu.VMEM((n_pad, 2 * c3), jnp.float32),       # running k-sums
                pltpu.VMEM((tm, 2 * c3), jnp.float32)]),        # row-tile acc
        compiler_params=pltpu.CompilerParams(
            dimension_semantics=("arbitrary", "arbitrary", "arbitrary"),
            vmem_limit_bytes=48 * 1024 * 1024),
    )(x, w9, b9, a_bf16, w1p, b1p)


# ---------------------------------------------------------------------------
# Full forward
# ---------------------------------------------------------------------------
def gra_inc_pro_forward(x, a_hat, params, inc1, inc2, *, tile=128):
    hidden = params["hidden"]
    c3 = 3 * hidden
    n = x.shape[0]
    out_dim = params["w1"].shape[1]

    # pad the node dimension so (row, reduction) tiles divide evenly;
    # zero-padded A rows/cols never leak into real rows.
    n_pad = ((n + tile - 1) // tile) * tile
    if n_pad != n:
        x = jnp.pad(x, ((0, n_pad - n), (0, 0)))
        a_hat = jnp.pad(a_hat, ((0, n_pad - n), (0, n_pad - n)))

    # A_hat in bf16: halves HBM traffic / VMEM tiles, bf16 MXU rate; f32 acc.
    a_bf16 = a_hat.astype(jnp.bfloat16)

    # Fold BatchNorm1d (eval) into lin1 and pad to a lane-dense 128-wide slab.
    eps = 1e-5
    scale = params["bn_gamma"] * lax.rsqrt(params["bn_var"] + eps)     # (1,3H)
    shift = params["bn_beta"] - params["bn_mean"] * scale              # (1,3H)
    w1f = scale.reshape(-1, 1) * params["w1"]                          # (3H,out)
    b1f = params["b1"] + shift @ params["w1"]                          # (1,out)
    cpad = max(128, ((out_dim + 127) // 128) * 128)
    w1p = jnp.zeros((c3, cpad), jnp.float32).at[:, :out_dim].set(w1f)
    b1p = jnp.zeros((1, cpad), jnp.float32).at[:, :out_dim].set(b1f)

    out_full = _fused_forward_call(x, params["w9"], params["b9"], a_bf16,
                                   w1p, b1p, k1=inc1, k2=inc2, c3=c3,
                                   tile=tile)
    return out_full[:n, :out_dim]


def build_normalized_adjacency(edge_index, num_nodes):
    src, dst = edge_index[0], edge_index[1]
    a = jnp.zeros((num_nodes, num_nodes), jnp.float32)
    a = a.at[src, dst].set(1.0)
    a = jnp.maximum(a, a.T)                                  # symmetrize
    a = a + jnp.eye(num_nodes, dtype=jnp.float32)            # self loops
    deg = jnp.sum(a, axis=1)
    d_inv_sqrt = lax.rsqrt(jnp.maximum(deg, 1e-12))
    return a * d_inv_sqrt[:, None] * d_inv_sqrt[None, :]


# Pure-JAX reference (f32 throughout) for a loose correctness check.
def _reference(x, a_hat, params, inc1, inc2):
    h = jnp.maximum(x @ params["w9"] + params["b9"], 0.0)
    c3 = 3 * params["hidden"]
    x1, x2, x3 = h[:, :c3], h[:, c3:2 * c3], h[:, 2 * c3:3 * c3]

    def prop(v, k):
        acc, cur = v, v
        for _ in range(k):
            cur = a_hat @ cur
            acc = acc + cur
        return acc / (k + 1)

    s = x1 + prop(x2, inc1) + prop(x3, inc2)
    sn = (s - params["bn_mean"]) * lax.rsqrt(params["bn_var"] + 1e-5)
    sn = sn * params["bn_gamma"] + params["bn_beta"]
    return sn @ params["w1"] + params["b1"]


if __name__ == "__main__":
    # Small deterministic shapes consistent with the module's forward pass.
    N = 256           # number of graph nodes
    IN_HIDDEN = 32    # in_hidden
    HIDDEN = 32       # args.hidden
    OUT_HIDDEN = 8    # out_hidden
    INC1, INC2 = 2, 4  # args.Inc1, args.Inc2
    NUM_EDGES = 800
    TILE = 128        # MXU-native tile for A

    key = jax.random.PRNGKey(0)
    k_x, k_e, k_w9, k_b9, k_w1, k_b1 = jax.random.split(key, 6)

    x = jax.random.normal(k_x, (N, IN_HIDDEN), jnp.float32)
    edge_index = jax.random.randint(k_e, (2, NUM_EDGES), 0, N, jnp.int32)
    a_hat = build_normalized_adjacency(edge_index, N)

    # 9 stacked Linear(in_hidden, hidden) weights/biases -> (F, 9H), (1, 9H)
    scale = 1.0 / jnp.sqrt(jnp.float32(IN_HIDDEN))
    w9 = jax.random.uniform(k_w9, (IN_HIDDEN, 9 * HIDDEN), jnp.float32,
                            -scale, scale)
    b9 = jax.random.uniform(k_b9, (1, 9 * HIDDEN), jnp.float32, -scale, scale)

    # lin1: Linear(3*hidden, out_hidden)
    scale1 = 1.0 / jnp.sqrt(jnp.float32(3 * HIDDEN))
    w1 = jax.random.uniform(k_w1, (3 * HIDDEN, OUT_HIDDEN), jnp.float32,
                            -scale1, scale1)
    b1 = jax.random.uniform(k_b1, (1, OUT_HIDDEN), jnp.float32,
                            -scale1, scale1)

    # BatchNorm1d(3*hidden) default init / running stats (eval mode)
    c3 = 3 * HIDDEN
    params = dict(
        hidden=HIDDEN,
        w9=w9, b9=b9, w1=w1, b1=b1,
        bn_gamma=jnp.ones((1, c3), jnp.float32),
        bn_beta=jnp.zeros((1, c3), jnp.float32),
        bn_mean=jnp.zeros((1, c3), jnp.float32),
        bn_var=jnp.ones((1, c3), jnp.float32),
    )

    out = gra_inc_pro_forward(x, a_hat, params, INC1, INC2, tile=TILE)
    out = jax.block_until_ready(out)
    assert out.shape == (N, OUT_HIDDEN), out.shape
    assert bool(jnp.all(jnp.isfinite(out)))

    # Loose tolerance: kernel streams A / state in bf16 (f32 accumulation).
    ref = _reference(x, a_hat, params, INC1, INC2)
    max_err = float(jnp.max(jnp.abs(out - ref)))
    assert max_err < 0.1, f"max abs err vs reference: {max_err}"

    print("KERNEL_OK")
</pallas_src>

<mosaic_0001>
module attributes {stable_mosaic.version = 11 : i64} {
  func.func @_gra_inc_pro_kernel(%arg0: i32, %arg1: i32, %arg2: i32, %arg3: memref<256x32xf32, #tpu.memory_space<vmem>>, %arg4: memref<32x288xf32, #tpu.memory_space<vmem>>, %arg5: memref<1x288xf32, #tpu.memory_space<vmem>>, %arg6: memref<128x128xbf16, #tpu.memory_space<vmem>>, %arg7: memref<96x128xf32, #tpu.memory_space<vmem>>, %arg8: memref<1x128xf32, #tpu.memory_space<vmem>>, %arg9: memref<256x128xf32, #tpu.memory_space<vmem>>, %arg10: memref<512x192xbf16, #tpu.memory_space<vmem>>, %arg11: memref<256x192xf32, #tpu.memory_space<vmem>>, %arg12: memref<128x192xf32, #tpu.memory_space<vmem>>) attributes {dimension_semantics = [#tpu.dimension_semantics<arbitrary>, #tpu.dimension_semantics<arbitrary>, #tpu.dimension_semantics<arbitrary>], iteration_bounds = array<i64: 4, 2, 2>, scalar_prefetch = 0 : i64, scratch_operands = 3 : i64, tpu.core_type = #tpu.core_type<tc>, window_params = [{pipeline_mode = #tpu.pipeline_mode<synchronous>, transform_indices = @transform_0, window_bounds = array<i64: 256, 32>}, {pipeline_mode = #tpu.pipeline_mode<synchronous>, transform_indices = @transform_1, window_bounds = array<i64: 32, 288>}, {pipeline_mode = #tpu.pipeline_mode<synchronous>, transform_indices = @transform_2, window_bounds = array<i64: 1, 288>}, {transform_indices = @transform_3, window_bounds = array<i64: 128, 128>}, {pipeline_mode = #tpu.pipeline_mode<synchronous>, transform_indices = @transform_4, window_bounds = array<i64: 96, 128>}, {pipeline_mode = #tpu.pipeline_mode<synchronous>, transform_indices = @transform_5, window_bounds = array<i64: 1, 128>}, {pipeline_mode = #tpu.pipeline_mode<synchronous>, transform_indices = @transform_6, window_bounds = array<i64: 256, 128>}]} {
    %c2_i32 = arith.constant 2 : i32
    %c0_i32 = arith.constant 0 : i32
    %0 = arith.cmpi eq, %c2_i32, %c0_i32 : i32
    %c1_i32 = arith.constant 1 : i32
    %1 = arith.select %0, %c1_i32, %c2_i32 : i32
    %2 = arith.remsi %arg0, %1 : i32
    %c0_i32_0 = arith.constant 0 : i32
    %3 = arith.cmpi ne, %2, %c0_i32_0 : i32
    %c0_i32_1 = arith.constant 0 : i32
    %4 = arith.cmpi slt, %2, %c0_i32_1 : i32
    %c0_i32_2 = arith.constant 0 : i32
    %5 = arith.cmpi slt, %1, %c0_i32_2 : i32
    %6 = arith.xori %4, %5 : i1
    %7 = arith.andi %6, %3 : i1
    %8 = arith.addi %2, %1 : i32
    %9 = arith.select %7, %8, %2 : i32
    %c1_i32_3 = arith.constant 1 : i32
    %10 = arith.subi %c1_i32_3, %9 : i32
    %c0_i32_4 = arith.constant 0 : i32
    %11 = arith.cmpi eq, %arg0, %c0_i32_4 : i32
    %c0_i32_5 = arith.constant 0 : i32
    %12 = arith.cmpi eq, %arg1, %c0_i32_5 : i32
    %13 = arith.andi %11, %12 : i1
    %c0_i32_6 = arith.constant 0 : i32
    %14 = arith.cmpi eq, %arg2, %c0_i32_6 : i32
    %15 = arith.andi %13, %14 : i1
    %16 = arith.extui %15 : i1 to i32
    %c0_i32_7 = arith.constant 0 : i32
    %17 = arith.cmpi ne, %16, %c0_i32_7 : i32
    scf.if %17 {
      %c0_18 = arith.constant 0 : index
      %c0_19 = arith.constant 0 : index
      %35 = vector.load %arg3[%c0_18, %c0_19] : memref<256x32xf32, #tpu.memory_space<vmem>>, vector<256x32xf32>
      %c0_20 = arith.constant 0 : index
      %c0_21 = arith.constant 0 : index
      %36 = vector.load %arg4[%c0_20, %c0_21] : memref<32x288xf32, #tpu.memory_space<vmem>>, vector<32x288xf32>
      %cst_22 = arith.constant dense<0.000000e+00> : vector<256x288xf32>
      %37 = tpu.matmul %35, %36, %cst_22 {dimension_numbers = #tpu.dot_dimension_numbers<[1], [0], [0], [1], [0, 0, 1, 1], [], []>} : vector<256x32xf32>, vector<32x288xf32>, vector<256x288xf32> -> vector<256x288xf32>
      %c0_23 = arith.constant 0 : index
      %c0_24 = arith.constant 0 : index
      %38 = vector.load %arg5[%c0_23, %c0_24] : memref<1x288xf32, #tpu.memory_space<vmem>>, vector<1x288xf32>
      %39 = vector.broadcast %38 : vector<1x288xf32> to vector<256x288xf32>
      %40 = arith.addf %37, %39 : vector<256x288xf32>
      %cst_25 = arith.constant 0.000000e+00 : f32
      %41 = vector.broadcast %cst_25 : f32 to vector<256x288xf32>
      %42 = arith.maximumf %40, %41 : vector<256x288xf32>
      %43 = vector.extract_strided_slice %42 {offsets = [0, 0], sizes = [256, 96], strides = [1, 1]} : vector<256x288xf32> to vector<256x96xf32>
      %44 = vector.extract_strided_slice %42 {offsets = [0, 96], sizes = [256, 192], strides = [1, 1]} : vector<256x288xf32> to vector<256x192xf32>
      %45 = arith.truncf %44 : vector<256x192xf32> to vector<256x192xbf16>
      %c0_26 = arith.constant 0 : index
      %c0_27 = arith.constant 0 : index
      %46 = vector.load %arg10[%c0_26, %c0_27] : memref<512x192xbf16, #tpu.memory_space<vmem>>, vector<256x192xbf16>
      tpu.vector_store %arg10[%c0_26, %c0_27], %45 {strides = array<i32>} : memref<512x192xbf16, #tpu.memory_space<vmem>>, vector<256x192xbf16>,
      %47 = vector.extract_strided_slice %44 {offsets = [0, 0], sizes = [256, 96], strides = [1, 1]} : vector<256x192xf32> to vector<256x96xf32>
      %cst_28 = arith.constant 3.000000e+00 : f32
      %48 = vector.broadcast %cst_28 : f32 to vector<256x96xf32>
      %49 = arith.mulf %48, %43 : vector<256x96xf32>
      %50 = arith.addf %47, %49 : vector<256x96xf32>
      %c0_29 = arith.constant 0 : index
      %c0_30 = arith.constant 0 : index
      %51 = vector.load %arg11[%c0_29, %c0_30] : memref<256x192xf32, #tpu.memory_space<vmem>>, vector<256x96xf32>
      tpu.vector_store %arg11[%c0_29, %c0_30], %50 {strides = array<i32>} : memref<256x192xf32, #tpu.memory_space<vmem>>, vector<256x96xf32>,
      %52 = vector.extract_strided_slice %44 {offsets = [0, 96], sizes = [256, 96], strides = [1, 1]} : vector<256x192xf32> to vector<256x96xf32>
      %c0_31 = arith.constant 0 : index
      %c96 = arith.constant 96 : index
      %53 = vector.load %arg11[%c0_31, %c96] : memref<256x192xf32, #tpu.memory_space<vmem>>, vector<256x96xf32>
      tpu.vector_store %arg11[%c0_31, %c96], %52 {strides = array<i32>} : memref<256x192xf32, #tpu.memory_space<vmem>>, vector<256x96xf32>,
    } else {
    }
    %c0_i32_8 = arith.constant 0 : i32
    %18 = arith.cmpi eq, %arg2, %c0_i32_8 : i32
    %19 = arith.extui %18 : i1 to i32
    %c0_i32_9 = arith.constant 0 : i32
    %20 = arith.cmpi ne, %19, %c0_i32_9 : i32
    scf.if %20 {
      %cst_18 = arith.constant 0.000000e+00 : f32
      %35 = vector.broadcast %cst_18 : f32 to vector<128x192xf32>
      %c0_19 = arith.constant 0 : index
      %c0_20 = arith.constant 0 : index
      %36 = vector.load %arg12[%c0_19, %c0_20] : memref<128x192xf32, #tpu.memory_space<vmem>>, vector<128x192xf32>
      tpu.vector_store %arg12[%c0_19, %c0_20], %35 {strides = array<i32>} : memref<128x192xf32, #tpu.memory_space<vmem>>, vector<128x192xf32>,
    } else {
    }
    %c256_i32 = arith.constant 256 : i32
    %21 = arith.muli %9, %c256_i32 : i32
    %c128_i32 = arith.constant 128 : i32
    %22 = arith.muli %arg2, %c128_i32 : i32
    %23 = arith.addi %21, %22 : i32
    %24 = tpu.assume_multiple %23, 128 : i32
    %c0 = arith.constant 0 : index
    %c0_10 = arith.constant 0 : index
    %25 = vector.load %arg12[%c0, %c0_10] : memref<128x192xf32, #tpu.memory_space<vmem>>, vector<128x192xf32>
    %c0_11 = arith.constant 0 : index
    %c0_12 = arith.constant 0 : index
    %26 = vector.load %arg6[%c0_11, %c0_12] : memref<128x128xbf16, #tpu.memory_space<vmem>>, vector<128x128xbf16>
    %27 = arith.index_cast %24 : i32 to index
    %c0_13 = arith.constant 0 : index
    %28 = vector.load %arg10[%27, %c0_13] : memref<512x192xbf16, #tpu.memory_space<vmem>>, vector<128x192xbf16>
    %cst = arith.constant dense<0.000000e+00> : vector<128x192xf32>
    %29 = tpu.matmul %26, %28, %cst {dimension_numbers = #tpu.dot_dimension_numbers<[1], [0], [0], [1], [0, 0, 1, 1], [], []>} : vector<128x128xbf16>, vector<128x192xbf16>, vector<128x192xf32> -> vector<128x192xf32>
    %30 = arith.addf %25, %29 : vector<128x192xf32>
    %c0_14 = arith.constant 0 : index
    %c0_15 = arith.constant 0 : index
    %31 = vector.load %arg12[%c0_14, %c0_15] : memref<128x192xf32, #tpu.memory_space<vmem>>, vector<128x192xf32>
    tpu.vector_store %arg12[%c0_14, %c0_15], %30 {strides = array<i32>} : memref<128x192xf32, #tpu.memory_space<vmem>>, vector<128x192xf32>,
    %c1_i32_16 = arith.constant 1 : i32
    %32 = arith.cmpi eq, %arg2, %c1_i32_16 : i32
    %33 = arith.extui %32 : i1 to i32
    %c0_i32_17 = arith.constant 0 : i32
    %34 = arith.cmpi ne, %33, %c0_i32_17 : i32
    scf.if %34 {
      %c128_i32_18 = arith.constant 128 : i32
      %35 = arith.muli %arg1, %c128_i32_18 : i32
      %36 = tpu.assume_multiple %35, 128 : i32
      %c256_i32_19 = arith.constant 256 : i32
      %37 = arith.muli %10, %c256_i32_19 : i32
      %c128_i32_20 = arith.constant 128 : i32
      %38 = arith.muli %arg1, %c128_i32_20 : i32
      %39 = arith.addi %37, %38 : i32
      %40 = tpu.assume_multiple %39, 128 : i32
      %c0_21 = arith.constant 0 : index
      %c0_22 = arith.constant 0 : index
      %41 = vector.load %arg12[%c0_21, %c0_22] : memref<128x192xf32, #tpu.memory_space<vmem>>, vector<128x192xf32>
      %42 = arith.truncf %41 : vector<128x192xf32> to vector<128x192xbf16>
      %43 = arith.index_cast %40 : i32 to index
      %c0_23 = arith.constant 0 : index
      %44 = vector.load %arg10[%43, %c0_23] : memref<512x192xbf16, #tpu.memory_space<vmem>>, vector<128x192xbf16>
      tpu.vector_store %arg10[%43, %c0_23], %42 {strides = array<i32>} : memref<512x192xbf16, #tpu.memory_space<vmem>>, vector<128x192xbf16>,
      %c2_i32_24 = arith.constant 2 : i32
      %45 = arith.cmpi slt, %arg0, %c2_i32_24 : i32
      %46 = arith.extui %45 : i1 to i32
      %c0_i32_25 = arith.constant 0 : i32
      %47 = arith.cmpi ne, %46, %c0_i32_25 : i32
      scf.if %47 {
        %54 = arith.index_cast %36 : i32 to index
        %c0_28 = arith.constant 0 : index
        %55 = vector.load %arg11[%54, %c0_28] : memref<256x192xf32, #tpu.memory_space<vmem>>, vector<128x96xf32>
        %c0_29 = arith.constant 0 : index
        %c0_30 = arith.constant 0 : index
        %56 = vector.load %arg12[%c0_29, %c0_30] : memref<128x192xf32, #tpu.memory_space<vmem>>, vector<128x96xf32>
        %57 = arith.addf %55, %56 : vector<128x96xf32>
        %58 = arith.index_cast %36 : i32 to index
        %c0_31 = arith.constant 0 : index
        %59 = vector.load %arg11[%58, %c0_31] : memref<256x192xf32, #tpu.memory_space<vmem>>, vector<128x96xf32>
        tpu.vector_store %arg11[%58, %c0_31], %57 {strides = array<i32>} : memref<256x192xf32, #tpu.memory_space<vmem>>, vector<128x96xf32>,
      } else {
      }
      %c4_i32 = arith.constant 4 : i32
      %48 = arith.cmpi slt, %arg0, %c4_i32 : i32
      %49 = arith.extui %48 : i1 to i32
      %c0_i32_26 = arith.constant 0 : i32
      %50 = arith.cmpi ne, %49, %c0_i32_26 : i32
      scf.if %50 {
        %54 = arith.index_cast %36 : i32 to index
        %c96 = arith.constant 96 : index
        %55 = vector.load %arg11[%54, %c96] : memref<256x192xf32, #tpu.memory_space<vmem>>, vector<128x96xf32>
        %c0_28 = arith.constant 0 : index
        %c96_29 = arith.constant 96 : index
        %56 = vector.load %arg12[%c0_28, %c96_29] : memref<128x192xf32, #tpu.memory_space<vmem>>, vector<128x96xf32>
        %57 = arith.addf %55, %56 : vector<128x96xf32>
        %58 = arith.index_cast %36 : i32 to index
        %c96_30 = arith.constant 96 : index
        %59 = vector.load %arg11[%58, %c96_30] : memref<256x192xf32, #tpu.memory_space<vmem>>, vector<128x96xf32>
        tpu.vector_store %arg11[%58, %c96_30], %57 {strides = array<i32>} : memref<256x192xf32, #tpu.memory_space<vmem>>, vector<128x96xf32>,
      } else {
      }
      %c3_i32 = arith.constant 3 : i32
      %51 = arith.cmpi eq, %arg0, %c3_i32 : i32
      %52 = arith.extui %51 : i1 to i32
      %c0_i32_27 = arith.constant 0 : i32
      %53 = arith.cmpi ne, %52, %c0_i32_27 : i32
      scf.if %53 {
        %54 = arith.index_cast %36 : i32 to index
        %c0_28 = arith.constant 0 : index
        %55 = vector.load %arg11[%54, %c0_28] : memref<256x192xf32, #tpu.memory_space<vmem>>, vector<128x96xf32>
        %cst_29 = arith.constant 0.333333343 : f32
        %56 = vector.broadcast %cst_29 : f32 to vector<128x96xf32>
        %57 = arith.mulf %55, %56 : vector<128x96xf32>
        %58 = arith.index_cast %36 : i32 to index
        %c96 = arith.constant 96 : index
        %59 = vector.load %arg11[%58, %c96] : memref<256x192xf32, #tpu.memory_space<vmem>>, vector<128x96xf32>
        %cst_30 = arith.constant 2.000000e-01 : f32
        %60 = vector.broadcast %cst_30 : f32 to vector<128x96xf32>
        %61 = arith.mulf %59, %60 : vector<128x96xf32>
        %62 = arith.addf %57, %61 : vector<128x96xf32>
        %c0_31 = arith.constant 0 : index
        %c0_32 = arith.constant 0 : index
        %63 = vector.load %arg7[%c0_31, %c0_32] : memref<96x128xf32, #tpu.memory_space<vmem>>, vector<96x128xf32>
        %cst_33 = arith.constant dense<0.000000e+00> : vector<128x128xf32>
        %64 = tpu.matmul %62, %63, %cst_33 {dimension_numbers = #tpu.dot_dimension_numbers<[1], [0], [0], [1], [0, 0, 1, 1], [], []>} : vector<128x96xf32>, vector<96x128xf32>, vector<128x128xf32> -> vector<128x128xf32>
        %c0_34 = arith.constant 0 : index
        %c0_35 = arith.constant 0 : index
        %65 = vector.load %arg8[%c0_34, %c0_35] : memref<1x128xf32, #tpu.memory_space<vmem>>, vector<1x128xf32>
        %66 = vector.broadcast %65 : vector<1x128xf32> to vector<128x128xf32>
        %67 = arith.addf %64, %66 : vector<128x128xf32>
        %68 = arith.index_cast %36 : i32 to index
        %c0_36 = arith.constant 0 : index
        %69 = vector.load %arg9[%68, %c0_36] : memref<256x128xf32, #tpu.memory_space<vmem>>, vector<128x128xf32>
        tpu.vector_store %arg9[%68, %c0_36], %67 {strides = array<i32>} : memref<256x128xf32, #tpu.memory_space<vmem>>, vector<128x128xf32>,
      } else {
      }
    } else {
    }
    return
  }
  func.func @transform_0(%arg0: i32, %arg1: i32, %arg2: i32) -> (i32, i32) {
    %c0_i32 = arith.constant 0 : i32
    %c0_i32_0 = arith.constant 0 : i32
    %c0_i32_1 = arith.constant 0 : i32
    return %c0_i32, %c0_i32_0 : i32, i32
  }
  func.func @transform_1(%arg0: i32, %arg1: i32, %arg2: i32) -> (i32, i32) {
    %c0_i32 = arith.constant 0 : i32
    %c0_i32_0 = arith.constant 0 : i32
    %c0_i32_1 = arith.constant 0 : i32
    return %c0_i32, %c0_i32_0 : i32, i32
  }
  func.func @transform_2(%arg0: i32, %arg1: i32, %arg2: i32) -> (i32, i32) {
    %c0_i32 = arith.constant 0 : i32
    %c0_i32_0 = arith.constant 0 : i32
    %c0_i32_1 = arith.constant 0 : i32
    return %c0_i32, %c0_i32_0 : i32, i32
  }
  func.func @transform_3(%arg0: i32, %arg1: i32, %arg2: i32) -> (i32, i32) {
    %c0_i32 = arith.constant 0 : i32
    return %arg1, %arg2 : i32, i32
  }
  func.func @transform_4(%arg0: i32, %arg1: i32, %arg2: i32) -> (i32, i32) {
    %c0_i32 = arith.constant 0 : i32
    %c0_i32_0 = arith.constant 0 : i32
    %c0_i32_1 = arith.constant 0 : i32
    return %c0_i32, %c0_i32_0 : i32, i32
  }
  func.func @transform_5(%arg0: i32, %arg1: i32, %arg2: i32) -> (i32, i32) {
    %c0_i32 = arith.constant 0 : i32
    %c0_i32_0 = arith.constant 0 : i32
    %c0_i32_1 = arith.constant 0 : i32
    return %c0_i32, %c0_i32_0 : i32, i32
  }
  func.func @transform_6(%arg0: i32, %arg1: i32, %arg2: i32) -> (i32, i32) {
    %c0_i32 = arith.constant 0 : i32
    %c0_i32_0 = arith.constant 0 : i32
    %c0_i32_1 = arith.constant 0 : i32
    return %c0_i32, %c0_i32_0 : i32, i32
  }
}

</mosaic_0001>

<llo_original>
// kernel: tpu_custom_call.1
$region0: #{tpu_custom_call.1}
  #allocation0 [shape = 'u32[]', space=smem, size = 0x4, offset = 0x4, fixed_abs, tag = 'smem constant byte address 0x4 - core index']
  #allocation1 [shape = 'u32[144,128]{1,0:T(1,128)}', space=vmem, size = 0x12000, scoped, tag = 'internal scratch']
  #allocation2 [shape = 'bf16[512,192]{1,0:T(16,128)(2,1)}', space=vmem, size = 0x40000, scoped, tag = 'scratch operand']
  #allocation3 [shape = 'f32[256,192]{1,0:T(8,128)}', space=vmem, size = 0x40000, scoped, tag = 'scratch operand']
  #allocation4 [shape = 'f32[128,192]{1,0:T(8,128)}', space=vmem, size = 0x20000, scoped, tag = 'scratch operand']
  %s0 = inlined_call_operand.vmem [shape: f32[256,32], index: 0, kind: input, shape index: {}]
  %s1 = inlined_call_operand.hbm [shape: f32[32,288], index: 1, kind: input, shape index: {}]
  %s2 = inlined_call_operand.vmem [shape: f32[1,288], index: 2, kind: input, shape index: {}]
  %s3 = inlined_call_operand.vmem [shape: bf16[256,256], index: 3, kind: input, shape index: {}]
  %s4 = inlined_call_operand.hbm [shape: f32[96,128], index: 4, kind: input, shape index: {}]
  %s5 = inlined_call_operand.vmem [shape: f32[1,128], index: 5, kind: input, shape index: {}]
  %s6 = inlined_call_operand.hbm [shape: f32[256,128], index: 6, kind: output, shape index: {}]
  %s7 = sld [smem:[#allocation0]]
  $region130: #{tpu_custom_call.1} parent=0
    _
  %s9 = ssub.s32 1, %s7
  %s10 = scalar_select 0, %s9, %s7
  $region1: #{tpu_custom_call.1} parent=0
    #allocation5 [shape = 'u8[49152]{0}', space=vmem, size = 0xc000, scoped, tag = 'input window, operand 1, single buffered']
    #allocation6 [shape = 's32[2]{0}', space=sflag, size = 0x8, scoped, tag = 'scoped memory for tpu_custom_call.1']
    #allocation7 [shape = 's32[2]{0}', space=sflag, size = 0x8, scoped, tag = 'scoped memory for tpu_custom_call.1']
    #allocation8 [shape = 'u8[65536]{0}', space=vmem, size = 0x10000, scoped, tag = 'input window, operand 3']
    #allocation9 [shape = 'u8[49152]{0}', space=vmem, size = 0xc000, scoped, tag = 'input window, operand 4, single buffered']
    #allocation10 [shape = 's32[1]{0}', space=sflag, size = 0x4, scoped, tag = 'scoped memory for tpu_custom_call.1']
    #allocation11 [shape = 'u8[131072]{0}', space=vmem, size = 0x20000, scoped, tag = 'output window, operand 0, single buffered']
    %11 = vsyncpa [#allocation6], 0
    %12 = vsyncpa [#allocation10], 0
    %13 = vsyncpa [#allocation7], 0
    loop: start=0, step=1, limit=18
    $region2: #{tpu_custom_call.1} parent=1 // loop_pre_header
      _
    $region3: #{tpu_custom_call.1} parent=1 // loop_header
      %s15 = sphi 0, %s19
      %p16 = scmp.ge.s32.totalorder %s15, 18
      %s22 = sphi 0, %s41
      %s23 = sphi 0, %s37
      %s24 = sphi 0, %s33
      %s25 = sphi 0, %s22
      %s26 = sphi 0, %s23
      %s27 = sphi 0, %s24
      %s28 = sphi 0, %s25
      %s29 = sphi 0, %s26
      %s30 = sphi 0, %s27
      %s42 = sphi 0, %s42
      %s44 = sphi 0, %s42
      %s45 = sphi 0, %s44
      %s59 = sphi 0, %s45
      %s63 = sphi 0, %s63
      %s65 = sphi 0, %s63
      %s66 = sphi 0, %s65
      %s80 = sphi 0, %s66
      %s84 = sphi 0, %s84
      %s86 = sphi 0, %s84
      %s87 = sphi 0, %s86
      %s101 = sphi 0, %s87
      %s109 = sphi 0, %s111
      %s112 = sphi 0, %s109
      %s113 = sphi 0, %s112
      %s129 = sphi 0, %s113
      %s133 = sphi 0, %s133
      %s135 = sphi 0, %s133
      %s136 = sphi 0, %s135
      %s150 = sphi 0, %s136
      %s154 = sphi 0, %s154
      %s156 = sphi 0, %s154
      %s157 = sphi 0, %s156
      %s171 = sphi 0, %s157
      %s175 = sphi 0, %s175
      %s177 = sphi 0, %s175
      %s178 = sphi 0, %s177
      %s192 = sphi 0, %s178
    $region4: #{tpu_custom_call.1} parent=1 // loop_header_branch
      %18 = sbr.rel (%p16) target = $region8
    $region5: #{tpu_custom_call.1} parent=1 // loop_body
      %s20 = ssub.s32 %s15, 1
      %s21 = ssub.s32 %s15, 2
      %s31 = sadd.s32 1, %s24
      %p32 = scmp.ge.s32.totalorder %s31, 2
      %s33 = scalar_select %p32, 0, %s31
      %s34 = sadd.s32 1, %s23
      %s35 = scalar_select %p32, %s34, %s23
      %p36 = scmp.ge.s32.totalorder %s35, 2
      %s37 = scalar_select %p36, 0, %s35
      %s38 = sadd.s32 1, %s22
      %s39 = scalar_select %p36, %s38, %s22
      %p40 = scmp.ge.s32.totalorder %s39, 4
      %s41 = scalar_select %p40, 0, %s39
      %s43 = sadd.s32 %s42, 1
      %p46 = scmp.eq.s32.totalorder %s15, 15
      %p47 = scmp.ne.s32.totalorder %s42, %s44
      %p48 = scmp.eq.s32.totalorder %s15, 0
      %p49 = por %p47, %p48
      %p50 = scmp.ne.s32.totalorder %s42, %s44
      %p51 = scmp.eq.s32.totalorder %s20, 15
      %p52 = por %p50, %p51
      %p53 = scmp.ne.s32.totalorder %s44, %s45
      %p54 = scmp.eq.s32.totalorder %s20, 0
      %p55 = por %p53, %p54
      %p56 = scmp.ne.s32.totalorder %s44, %s45
      %p57 = scmp.eq.s32.totalorder %s21, 15
      %p58 = por %p56, %p57
      %p60 = scmp.ne.s32.totalorder %s45, %s59
      %p61 = scmp.eq.s32.totalorder %s21, 0
      %p62 = por %p60, %p61
      %s64 = sadd.s32 %s63, 1
      %p67 = scmp.eq.s32.totalorder %s15, 15
      %p68 = scmp.ne.s32.totalorder %s63, %s65
      %p69 = scmp.eq.s32.totalorder %s15, 0
      %p70 = por %p68, %p69
      %p71 = scmp.ne.s32.totalorder %s63, %s65
      %p72 = scmp.eq.s32.totalorder %s20, 15
      %p73 = por %p71, %p72
      %p74 = scmp.ne.s32.totalorder %s65, %s66
      %p75 = scmp.eq.s32.totalorder %s20, 0
      %p76 = por %p74, %p75
      %p77 = scmp.ne.s32.totalorder %s65, %s66
      %p78 = scmp.eq.s32.totalorder %s21, 15
      %p79 = por %p77, %p78
      %p81 = scmp.ne.s32.totalorder %s66, %s80
      %p82 = scmp.eq.s32.totalorder %s21, 0
      %p83 = por %p81, %p82
      %s85 = sadd.s32 %s84, 1
      %p88 = scmp.eq.s32.totalorder %s15, 15
      %p89 = scmp.ne.s32.totalorder %s84, %s86
      %p90 = scmp.eq.s32.totalorder %s15, 0
      %p91 = por %p89, %p90
      %p92 = scmp.ne.s32.totalorder %s84, %s86
      %p93 = scmp.eq.s32.totalorder %s20, 15
      %p94 = por %p92, %p93
      %p95 = scmp.ne.s32.totalorder %s86, %s87
      %p96 = scmp.eq.s32.totalorder %s20, 0
      %p97 = por %p95, %p96
      %p98 = scmp.ne.s32.totalorder %s86, %s87
      %p99 = scmp.eq.s32.totalorder %s21, 15
      %p100 = por %p98, %p99
      %p102 = scmp.ne.s32.totalorder %s87, %s101
      %p103 = scmp.eq.s32.totalorder %s21, 0
      %p104 = por %p102, %p103
      %s105 = ssub.s32 %s23, %s37
      %s106 = ssub.s32 %s24, %s33
      %s107 = sor.u32 %s105, %s106
      %p108 = scmp.eq.s32.totalorder %s107, 0
      %s110 = sadd.s32 %s109, 1
      %s111 = scalar_select %p108, %s109, %s110
      %p114 = pneg %p108
      %p115 = scmp.eq.s32.totalorder %s15, 15
      %p116 = por %p114, %p115
      %p117 = scmp.ne.s32.totalorder %s109, %s112
      %p118 = scmp.eq.s32.totalorder %s15, 0
      %p119 = por %p117, %p118
      %p120 = scmp.ne.s32.totalorder %s109, %s112
      %p121 = scmp.eq.s32.totalorder %s20, 15
      %p122 = por %p120, %p121
      %p123 = scmp.ne.s32.totalorder %s112, %s113
      %p124 = scmp.eq.s32.totalorder %s20, 0
      %p125 = por %p123, %p124
      %p126 = scmp.ne.s32.totalorder %s112, %s113
      %p127 = scmp.eq.s32.totalorder %s21, 15
      %p128 = por %p126, %p127
      %p130 = scmp.ne.s32.totalorder %s113, %s129
      %p131 = scmp.eq.s32.totalorder %s21, 0
      %p132 = por %p130, %p131
      %s134 = sadd.s32 %s133, 1
      %p137 = scmp.eq.s32.totalorder %s15, 15
      %p138 = scmp.ne.s32.totalorder %s133, %s135
      %p139 = scmp.eq.s32.totalorder %s15, 0
      %p140 = por %p138, %p139
      %p141 = scmp.ne.s32.totalorder %s133, %s135
      %p142 = scmp.eq.s32.totalorder %s20, 15
      %p143 = por %p141, %p142
      %p144 = scmp.ne.s32.totalorder %s135, %s136
      %p145 = scmp.eq.s32.totalorder %s20, 0
      %p146 = por %p144, %p145
      %p147 = scmp.ne.s32.totalorder %s135, %s136
      %p148 = scmp.eq.s32.totalorder %s21, 15
      %p149 = por %p147, %p148
      %p151 = scmp.ne.s32.totalorder %s136, %s150
      %p152 = scmp.eq.s32.totalorder %s21, 0
      %p153 = por %p151, %p152
      %s155 = sadd.s32 %s154, 1
      %p158 = scmp.eq.s32.totalorder %s15, 15
      %p159 = scmp.ne.s32.totalorder %s154, %s156
      %p160 = scmp.eq.s32.totalorder %s15, 0
      %p161 = por %p159, %p160
      %p162 = scmp.ne.s32.totalorder %s154, %s156
      %p163 = scmp.eq.s32.totalorder %s20, 15
      %p164 = por %p162, %p163
      %p165 = scmp.ne.s32.totalorder %s156, %s157
      %p166 = scmp.eq.s32.totalorder %s20, 0
      %p167 = por %p165, %p166
      %p168 = scmp.ne.s32.totalorder %s156, %s157
      %p169 = scmp.eq.s32.totalorder %s21, 15
      %p170 = por %p168, %p169
      %p172 = scmp.ne.s32.totalorder %s157, %s171
      %p173 = scmp.eq.s32.totalorder %s21, 0
      %p174 = por %p172, %p173
      %s176 = sadd.s32 %s175, 1
      %p179 = scmp.eq.s32.totalorder %s15, 15
      %p180 = scmp.ne.s32.totalorder %s175, %s177
      %p181 = scmp.eq.s32.totalorder %s15, 0
      %p182 = por %p180, %p181
      %p183 = scmp.ne.s32.totalorder %s175, %s177
      %p184 = scmp.eq.s32.totalorder %s20, 15
      %p185 = por %p183, %p184
      %p186 = scmp.ne.s32.totalorder %s177, %s178
      %p187 = scmp.eq.s32.totalorder %s20, 0
      %p188 = por %p186, %p187
      %p189 = scmp.ne.s32.totalorder %s177, %s178
      %p190 = scmp.eq.s32.totalorder %s21, 15
      %p191 = por %p189, %p190
      %p193 = scmp.ne.s32.totalorder %s178, %s192
      %p194 = scmp.eq.s32.totalorder %s21, 0
      %p195 = por %p193, %p194
      %p196 = scmp.le.s32.totalorder 1, %s15
      %p197 = scmp.lt.s32.totalorder %s15, 17
      %p198 = pnand %p196, %p197
      %p199 = pneg %p198
      // Predicated region
      $region9: #{tpu_custom_call.1} parent=5 // pred_check
        _
      $region10: #{tpu_custom_call.1} parent=5 // pred_check_branch
        %201 = sbr.rel (%p198) target = $region12
      $region11: #{tpu_custom_call.1} parent=5 // pred_region
        %s202 = ssub.s32 %s15, 1
        // Predicated region
        $region13: #{tpu_custom_call.1} parent=11 // pred_check
          %p203 = pneg %p55
        $region14: #{tpu_custom_call.1} parent=11 // pred_check_branch
          %205 = sbr.rel (%p203) target = $region16
        $region15: #{tpu_custom_call.1} parent=11 // pred_region
          _
        $region16: #{tpu_custom_call.1} parent=11 // pred_fallthru
          _
        // Predicated region
        $region17: #{tpu_custom_call.1} parent=11 // pred_check
          %p206 = pneg %p76
        $region18: #{tpu_custom_call.1} parent=11 // pred_check_branch
          %208 = sbr.rel (%p206) target = $region20
        $region19: #{tpu_custom_call.1} parent=11 // pred_region
          %s210 = ssub.s32 1536, 1536
          %211 = vsyncadd [#allocation6], %s210
          %s212 = sshll.u32 [#allocation5], 4
          %s213 = int_to_ptr.vmem [resolvable:$true] %s212
          %218 = dma.hbm_to_vmem [thread:$0]  %s1, 1536, %s213, [#allocation6], 384, 384, 24
        $region20: #{tpu_custom_call.1} parent=11 // pred_fallthru
          _
        // Predicated region
        $region21: #{tpu_custom_call.1} parent=11 // pred_check
          %p219 = pneg %p97
        $region22: #{tpu_custom_call.1} parent=11 // pred_check_branch
          %221 = sbr.rel (%p219) target = $region24
        $region23: #{tpu_custom_call.1} parent=11 // pred_region
          _
        $region24: #{tpu_custom_call.1} parent=11 // pred_fallthru
          _
        // Predicated region
        $region25: #{tpu_custom_call.1} parent=11 // pred_check
          %p222 = pneg %p146
        $region26: #{tpu_custom_call.1} parent=11 // pred_check_branch
          %224 = sbr.rel (%p222) target = $region28
        $region27: #{tpu_custom_call.1} parent=11 // pred_region
          %s226 = ssub.s32 1536, 1536
          %227 = vsyncadd [#allocation10], %s226
          %s228 = sshll.u32 [#allocation9], 4
          %s229 = int_to_ptr.vmem [resolvable:$true] %s228
          %234 = dma.hbm_to_vmem [thread:$0]  %s4, 1536, %s229, [#allocation10], 128, 128, 8
        $region28: #{tpu_custom_call.1} parent=11 // pred_fallthru
          _
        // Predicated region
        $region29: #{tpu_custom_call.1} parent=11 // pred_check
          %p235 = pneg %p167
        $region30: #{tpu_custom_call.1} parent=11 // pred_check_branch
          %237 = sbr.rel (%p235) target = $region32
        $region31: #{tpu_custom_call.1} parent=11 // pred_region
          _
        $region32: #{tpu_custom_call.1} parent=11 // pred_fallthru
          _
      $region12: #{tpu_custom_call.1} parent=5 // pred_fallthru
        _
      %p238 = scmp.lt.s32.totalorder %s15, 16
      // Predicated region
      $region33: #{tpu_custom_call.1} parent=5 // pred_check
        %p239 = pneg %p238
      $region34: #{tpu_custom_call.1} parent=5 // pred_check_branch
        %241 = sbr.rel (%p239) target = $region36
      $region35: #{tpu_custom_call.1} parent=5 // pred_region
        // Predicated region
        $region37: #{tpu_custom_call.1} parent=35 // pred_check
          %p242 = pneg %p119
        $region38: #{tpu_custom_call.1} parent=35 // pred_check_branch
          %244 = sbr.rel (%p242) target = $region40
        $region39: #{tpu_custom_call.1} parent=35 // pred_region
          %s245 = sand.u32 %s109, 1
          %s246 = sand.u32 %s109, 1
          %s247 = smul.addr %s246, 64
          %s248 = scalar_lea.vmem [#allocation8], %s247
          %s249 = smul.u32 16, %s23
          %s250 = smul.addr %s249, 2
          %s251 = sadd.s32 %s24, %s250
          %s252 = smul.addr %s251, 4
          %s253 = scalar_lea.vmem %s3, %s252
          // Predicated region
          $region41: #{tpu_custom_call.1} parent=39 // pred_check
            _
          $region42: #{tpu_custom_call.1} parent=39 // pred_check_branch
            %255 = sbr.rel (0) target = $region44
          $region43: #{tpu_custom_call.1} parent=39 // pred_region
            // Predicated region
            $region45: #{tpu_custom_call.1} parent=43 // pred_check
              _
            $region46: #{tpu_custom_call.1} parent=43 // pred_check_branch
              %257 = sbr.rel target = $region48
            $region47: #{tpu_custom_call.1} parent=43 // pred_region
              // Predicated region
              $region60: #{tpu_custom_call.1} parent=47 // pred_check
                _
              $region61: #{tpu_custom_call.1} parent=47 // pred_check_branch
                %302 = sbr.rel (0) target = $region63
              $region62: #{tpu_custom_call.1} parent=47 // pred_region
                loop: start=0, step=1, limit=1
                $region64: #{tpu_custom_call.1} parent=62 // loop_pre_header
                  _
                $region65: #{tpu_custom_call.1} parent=62 // loop_header
                  %s304 = sphi 0, %s308
                  %p305 = scmp.ge.s32.totalorder %s304, 1
                  %s309 = sphi %s253, %s253
                  %s310 = sphi %s248, %s248
                $region66: #{tpu_custom_call.1} parent=62 // loop_header_branch
                  %307 = sbr.rel (%p305) target = $region70
                $region67: #{tpu_custom_call.1} parent=62 // loop_body
                  _
                $region68: #{tpu_custom_call.1} parent=62 // loop_footer
                  %s308 = sadd.s32 1, %s304
                $region69: #{tpu_custom_call.1} parent=62 // loop_footer_branch
                  %303 = sbr.rel target = $region65
                $region70: #{tpu_custom_call.1} parent=62 // loop_exit
                  _
                loop: start=0, step=1, limit=1
                $region71: #{tpu_custom_call.1} parent=62 // loop_pre_header
                  _
                $region72: #{tpu_custom_call.1} parent=62 // loop_header
                  %s313 = sphi 0, %s317
                  %p314 = scmp.ge.s32.totalorder %s313, 1
                  %s318 = sphi %s253, %s253
                  %s319 = sphi %s248, %s248
                $region73: #{tpu_custom_call.1} parent=62 // loop_header_branch
                  %316 = sbr.rel (%p314) target = $region77
                $region74: #{tpu_custom_call.1} parent=62 // loop_body
                  %v320 = vld [vmem:[%s318] sm:$0xf]
                  %321 = vst [vmem:[%s319] sm:$0xf] %v320
                  %v322 = vld [vmem:[%s318 + $0x8] sm:$0xf]
                  %323 = vst [vmem:[%s319 + $0x4] sm:$0xf] %v322
                  %v324 = vld [vmem:[%s318 + $0x10] sm:$0xf]
                  %325 = vst [vmem:[%s319 + $0x8] sm:$0xf] %v324
                  %v326 = vld [vmem:[%s318 + $0x18] sm:$0xf]
                  %327 = vst [vmem:[%s319 + $0xc] sm:$0xf] %v326
                  %v328 = vld [vmem:[%s318 + $0x20] sm:$0xf]
                  %329 = vst [vmem:[%s319 + $0x10] sm:$0xf] %v328
                  %v330 = vld [vmem:[%s318 + $0x28] sm:$0xf]
                  %331 = vst [vmem:[%s319 + $0x14] sm:$0xf] %v330
                  %v332 = vld [vmem:[%s318 + $0x30] sm:$0xf]
                  %333 = vst [vmem:[%s319 + $0x18] sm:$0xf] %v332
                  %v334 = vld [vmem:[%s318 + $0x38] sm:$0xf]
                  %335 = vst [vmem:[%s319 + $0x1c] sm:$0xf] %v334
                  %v336 = vld [vmem:[%s318 + $0x40] sm:$0xf]
                  %337 = vst [vmem:[%s319 + $0x20] sm:$0xf] %v336
                  %v338 = vld [vmem:[%s318 + $0x48] sm:$0xf]
                  %339 = vst [vmem:[%s319 + $0x24] sm:$0xf] %v338
                  %v340 = vld [vmem:[%s318 + $0x50] sm:$0xf]
                  %341 = vst [vmem:[%s319 + $0x28] sm:$0xf] %v340
                  %v342 = vld [vmem:[%s318 + $0x58] sm:$0xf]
                  %343 = vst [vmem:[%s319 + $0x2c] sm:$0xf] %v342
                  %v344 = vld [vmem:[%s318 + $0x60] sm:$0xf]
                  %345 = vst [vmem:[%s319 + $0x30] sm:$0xf] %v344
                  %v346 = vld [vmem:[%s318 + $0x68] sm:$0xf]
                  %347 = vst [vmem:[%s319 + $0x34] sm:$0xf] %v346
                  %v348 = vld [vmem:[%s318 + $0x70] sm:$0xf]
                  %349 = vst [vmem:[%s319 + $0x38] sm:$0xf] %v348
                  %v350 = vld [vmem:[%s318 + $0x78] sm:$0xf]
                  %351 = vst [vmem:[%s319 + $0x3c] sm:$0xf] %v350
                $region75: #{tpu_custom_call.1} parent=62 // loop_footer
                  %s317 = sadd.s32 1, %s313
                $region76: #{tpu_custom_call.1} parent=62 // loop_footer_branch
                  %312 = sbr.rel target = $region72
                $region77: #{tpu_custom_call.1} parent=62 // loop_exit
                  _
              $region63: #{tpu_custom_call.1} parent=47 // pred_fallthru
                _
            $region48: #{tpu_custom_call.1} parent=43 // pred_fallthru
              _
            // Predicated region
            $region49: #{tpu_custom_call.1} parent=43 // pred_check
              _
            $region50: #{tpu_custom_call.1} parent=43 // pred_check_branch
              %259 = sbr.rel (0) target = $region52
            $region51: #{tpu_custom_call.1} parent=43 // pred_region
              loop: start=0, step=1, limit=1
              $region53: #{tpu_custom_call.1} parent=51 // loop_pre_header
                _
              $region54: #{tpu_custom_call.1} parent=51 // loop_header
                %s262 = sphi 0, %s266
                %p263 = scmp.ge.s32.totalorder %s262, 1
                %s267 = sphi %s253, %s253
                %s268 = sphi %s248, %s248
              $region55: #{tpu_custom_call.1} parent=51 // loop_header_branch
                %265 = sbr.rel (%p263) target = $region59
              $region56: #{tpu_custom_call.1} parent=51 // loop_body
                %v269 = vld [vmem:[%s267] sm:$0xf]
                %270 = vst [vmem:[%s268] sm:$0xf] %v269
                %v271 = vld [vmem:[%s267 + $0x8] sm:$0xf]
                %272 = vst [vmem:[%s268 + $0x4] sm:$0xf] %v271
                %v273 = vld [vmem:[%s267 + $0x10] sm:$0xf]
                %274 = vst [vmem:[%s268 + $0x8] sm:$0xf] %v273
                %v275 = vld [vmem:[%s267 + $0x18] sm:$0xf]
                %276 = vst [vmem:[%s268 + $0xc] sm:$0xf] %v275
                %v277 = vld [vmem:[%s267 + $0x20] sm:$0xf]
                %278 = vst [vmem:[%s268 + $0x10] sm:$0xf] %v277
                %v279 = vld [vmem:[%s267 + $0x28] sm:$0xf]
                %280 = vst [vmem:[%s268 + $0x14] sm:$0xf] %v279
                %v281 = vld [vmem:[%s267 + $0x30] sm:$0xf]
                %282 = vst [vmem:[%s268 + $0x18] sm:$0xf] %v281
                %v283 = vld [vmem:[%s267 + $0x38] sm:$0xf]
                %284 = vst [vmem:[%s268 + $0x1c] sm:$0xf] %v283
                %v285 = vld [vmem:[%s267 + $0x40] sm:$0xf]
                %286 = vst [vmem:[%s268 + $0x20] sm:$0xf] %v285
                %v287 = vld [vmem:[%s267 + $0x48] sm:$0xf]
                %288 = vst [vmem:[%s268 + $0x24] sm:$0xf] %v287
                %v289 = vld [vmem:[%s267 + $0x50] sm:$0xf]
                %290 = vst [vmem:[%s268 + $0x28] sm:$0xf] %v289
                %v291 = vld [vmem:[%s267 + $0x58] sm:$0xf]
                %292 = vst [vmem:[%s268 + $0x2c] sm:$0xf] %v291
                %v293 = vld [vmem:[%s267 + $0x60] sm:$0xf]
                %294 = vst [vmem:[%s268 + $0x30] sm:$0xf] %v293
                %v295 = vld [vmem:[%s267 + $0x68] sm:$0xf]
                %296 = vst [vmem:[%s268 + $0x34] sm:$0xf] %v295
                %v297 = vld [vmem:[%s267 + $0x70] sm:$0xf]
                %298 = vst [vmem:[%s268 + $0x38] sm:$0xf] %v297
                %v299 = vld [vmem:[%s267 + $0x78] sm:$0xf]
                %300 = vst [vmem:[%s268 + $0x3c] sm:$0xf] %v299
              $region57: #{tpu_custom_call.1} parent=51 // loop_footer
                %s266 = sadd.s32 1, %s262
              $region58: #{tpu_custom_call.1} parent=51 // loop_footer_branch
                %261 = sbr.rel target = $region54
              $region59: #{tpu_custom_call.1} parent=51 // loop_exit
                _
            $region52: #{tpu_custom_call.1} parent=43 // pred_fallthru
              _
          $region44: #{tpu_custom_call.1} parent=39 // pred_fallthru
            _
          %352 = vnop
        $region40: #{tpu_custom_call.1} parent=35 // pred_fallthru
          _
      $region36: #{tpu_custom_call.1} parent=5 // pred_fallthru
        _
      %p353 = scmp.le.s32.totalorder 1, %s15
      %p354 = scmp.lt.s32.totalorder %s15, 17
      %p355 = pnand %p353, %p354
      %p356 = pneg %p355
      // Predicated region
      $region78: #{tpu_custom_call.1} parent=5 // pred_check
        _
      $region79: #{tpu_custom_call.1} parent=5 // pred_check_branch
        %358 = sbr.rel (%p355) target = $region81
      $region80: #{tpu_custom_call.1} parent=5 // pred_region
        %s359 = ssub.s32 %s15, 1
        // Predicated region
        $region82: #{tpu_custom_call.1} parent=80 // pred_check
          %p360 = pneg %p76
        $region83: #{tpu_custom_call.1} parent=80 // pred_check_branch
          %362 = sbr.rel (%p360) target = $region85
        $region84: #{tpu_custom_call.1} parent=80 // pred_region
          %363 = dma.done [#allocation6], 1536
        $region85: #{tpu_custom_call.1} parent=80 // pred_fallthru
          _
        %s364 = sand.u32 %s112, 1
        %s365 = sand.u32 %s112, 1
        %s366 = smul.addr %s365, 64
        %s367 = scalar_lea.vmem [#allocation8], %s366
        // Predicated region
        $region86: #{tpu_custom_call.1} parent=80 // pred_check
          %p368 = pneg %p125
        $region87: #{tpu_custom_call.1} parent=80 // pred_check_branch
          %370 = sbr.rel (%p368) target = $region89
        $region88: #{tpu_custom_call.1} parent=80 // pred_region
          _
        $region89: #{tpu_custom_call.1} parent=80 // pred_fallthru
          _
        // Predicated region
        $region90: #{tpu_custom_call.1} parent=80 // pred_check
          %p371 = pneg %p146
        $region91: #{tpu_custom_call.1} parent=80 // pred_check_branch
          %373 = sbr.rel (%p371) target = $region93
        $region92: #{tpu_custom_call.1} parent=80 // pred_region
          %374 = dma.done [#allocation10], 1536
        $region93: #{tpu_custom_call.1} parent=80 // pred_fallthru
          _
        %p375 = pneg %p55
        %p376 = pneg %p52
        %p377 = pneg %p76
        %p378 = pneg %p73
        %p379 = pneg %p97
        %p380 = pneg %p94
        %s381 = sand.u32 %s112, 1
        %s382 = sand.u32 %s112, 1
        %s383 = smul.addr %s382, 64
        %s384 = scalar_lea.vmem [#allocation8], %s383
        %p385 = pneg %p125
        %p386 = pneg %p122
        %p387 = pneg %p146
        %p388 = pneg %p143
        %p389 = pneg %p167
        %p390 = pneg %p164
        %p391 = pneg %p188
        %p392 = pneg %p185
        %s393 = smul.u32 16, %s26
        %p395 = scmp.lt.s32.totalorder %s25, 0
        %s396 = ssub.s32 0, %s25
        %s397 = scalar_select %p395, %s396, %s25
        %s398 = sand.u32 %s397, 1
        %s399 = ssub.s32 0, %s398
        %s400 = scalar_select %p395, %s399, %s398
        %p401 = scmp.ne.s32.totalorder %s400, 0
        %p402 = scmp.lt.s32.totalorder %s400, 0
        %p403 = pnand %p402, %p401
        %p404 = pneg %p403
        %s405 = sadd.s32 %s400, 2
        %s406 = scalar_select %p404, %s405, %s400
        %s407 = ssub.s32 1, %s406
        %p408 = scmp.eq.s32.totalorder %s25, 0
        %p409 = scmp.eq.s32.totalorder %s26, 0
        %p410 = pnand %p408, %p409
        %p411 = pneg %p410
        %p412 = scmp.eq.s32.totalorder %s27, 0
        %p413 = pnand %p411, %p412
        %p414 = pneg %p413
        // Predicated region
        $region94: #{tpu_custom_call.1} parent=80 // pred_check
          _
        $region95: #{tpu_custom_call.1} parent=80 // pred_check_branch
          %416 = sbr.rel (%p413) target = $region97
        $region96: #{tpu_custom_call.1} parent=80 // pred_region
          %v417 = vld [vmem:[%s0] sm:$0xff]
          %v418 = vld [vmem:[%s0 + $0x8] sm:$0xff]
          %v419 = vld [vmem:[%s0 + $0x10] sm:$0xff]
          %v420 = vld [vmem:[%s0 + $0x18] sm:$0xff]
          %v421 = vld [vmem:[%s0 + $0x20] sm:$0xff]
          %v422 = vld [vmem:[%s0 + $0x28] sm:$0xff]
          %v423 = vld [vmem:[%s0 + $0x30] sm:$0xff]
          %v424 = vld [vmem:[%s0 + $0x38] sm:$0xff]
          %v425 = vld [vmem:[%s0 + $0x40] sm:$0xff]
          %v426 = vld [vmem:[%s0 + $0x48] sm:$0xff]
          %v427 = vld [vmem:[%s0 + $0x50] sm:$0xff]
          %v428 = vld [vmem:[%s0 + $0x58] sm:$0xff]
          %v429 = vld [vmem:[%s0 + $0x60] sm:$0xff]
          %v430 = vld [vmem:[%s0 + $0x68] sm:$0xff]
          %v431 = vld [vmem:[%s0 + $0x70] sm:$0xff]
          %v432 = vld [vmem:[%s0 + $0x78] sm:$0xff]
          %v433 = vld [vmem:[%s0 + $0x80] sm:$0xff]
          %v434 = vld [vmem:[%s0 + $0x88] sm:$0xff]
          %v435 = vld [vmem:[%s0 + $0x90] sm:$0xff]
          %v436 = vld [vmem:[%s0 + $0x98] sm:$0xff]
          %v437 = vld [vmem:[%s0 + $0xa0] sm:$0xff]
          %v438 = vld [vmem:[%s0 + $0xa8] sm:$0xff]
          %v439 = vld [vmem:[%s0 + $0xb0] sm:$0xff]
          %v440 = vld [vmem:[%s0 + $0xb8] sm:$0xff]
          %v441 = vld [vmem:[%s0 + $0xc0] sm:$0xff]
          %v442 = vld [vmem:[%s0 + $0xc8] sm:$0xff]
          %v443 = vld [vmem:[%s0 + $0xd0] sm:$0xff]
          %v444 = vld [vmem:[%s0 + $0xd8] sm:$0xff]
          %v445 = vld [vmem:[%s0 + $0xe0] sm:$0xff]
          %v446 = vld [vmem:[%s0 + $0xe8] sm:$0xff]
          %v447 = vld [vmem:[%s0 + $0xf0] sm:$0xff]
          %v448 = vld [vmem:[%s0 + $0xf8] sm:$0xff]
          %v449 = vld [vmem:[#allocation5] sm:$0xff]
          %v450 = vld [vmem:[#allocation5 + $0x8] sm:$0xff]
          %v451 = vld [vmem:[#allocation5 + $0x10] sm:$0xff]
          %v452 = vld [vmem:[#allocation5 + $0x18] sm:$0xff]
          %v453 = vld [vmem:[#allocation5 + $0x20] sm:$0xff]
          %v454 = vld [vmem:[#allocation5 + $0x28] sm:$0xff]
          %v455 = vld [vmem:[#allocation5 + $0x30] sm:$0xff]
          %v456 = vld [vmem:[#allocation5 + $0x38] sm:$0xff]
          %v457 = vld [vmem:[#allocation5 + $0x40] sm:$0xff]
          %v458 = vld [vmem:[#allocation5 + $0x48] sm:$0xff]
          %v459 = vld [vmem:[#allocation5 + $0x50] sm:$0xff]
          %v460 = vld [vmem:[#allocation5 + $0x58] sm:$0xff]
          %v461 = vld [vmem:[%s2] sm:$0x7]
          %v463 = vlaneseq
          %v464 = vshrl.u32 %v463, 7
          %v465 = vsub.s32 0, %v464
          %v466 = vrot.slane %v461, %v465
          %v467 = vlaneseq
          %v468 = vshrl.u32 %v467, 7
          %v469 = vsub.s32 1, %v468
          %v470 = vrot.slane %v461, %v469
          %v471 = vlaneseq
          %v472 = vshrl.u32 %v471, 7
          %v473 = vsub.s32 2, %v472
          %v474 = vrot.slane %v461, %v473
          %vm478 = vcmask 261120
          %v480 = vsel %vm478, %v417, 0
          %v483 = vsel %vm478, %v418, 0
          %v486 = vsel %vm478, %v419, 0
          %v489 = vsel %vm478, %v420, 0
          %v492 = vsel %vm478, %v421, 0
          %v495 = vsel %vm478, %v422, 0
          %v498 = vsel %vm478, %v423, 0
          %v501 = vsel %vm478, %v424, 0
          %v504 = vsel %vm478, %v425, 0
          %v507 = vsel %vm478, %v426, 0
          %v510 = vsel %vm478, %v427, 0
          %v513 = vsel %vm478, %v428, 0
          %v516 = vsel %vm478, %v429, 0
          %v519 = vsel %vm478, %v430, 0
          %v522 = vsel %vm478, %v431, 0
          %v525 = vsel %vm478, %v432, 0
          %v528 = vsel %vm478, %v433, 0
          %v531 = vsel %vm478, %v434, 0
          %v534 = vsel %vm478, %v435, 0
          %v537 = vsel %vm478, %v436, 0
          %v540 = vsel %vm478, %v437, 0
          %v543 = vsel %vm478, %v438, 0
          %v546 = vsel %vm478, %v439, 0
          %v549 = vsel %vm478, %v440, 0
          %v552 = vsel %vm478, %v441, 0
          %v555 = vsel %vm478, %v442, 0
          %v558 = vsel %vm478, %v443, 0
          %v561 = vsel %vm478, %v444, 0
          %v564 = vsel %vm478, %v445, 0
          %v567 = vsel %vm478, %v446, 0
          %v570 = vsel %vm478, %v447, 0
          %v573 = vsel %vm478, %v448, 0
          %575 = vmatprep.subr.mxu0 %v450
          %576 = vmatpush1.msra.mxu0 %v449
          %577 = vmatprep.subr.mxu0 %v453
          %578 = vmatpush1.msra.mxu0 %v452
          %579 = vmatprep.subr.mxu0 %v456
          %580 = vmatpush1.msra.mxu0 %v455
          %581 = vmatprep.subr.mxu0 %v459
          %582 = vmatpush1.msra.mxu0 %v458
          %583 = vmatprep.subr.mxu0 0.0
          %584 = vmatpush1.msra.mxu0 0.0
          %585 = vmatprep.subr.mxu0 0.0
          %586 = vmatpush1.msra.mxu0 0.0
          %587 = vmatprep.subr.mxu0 0.0
          %588 = vmatpush1.msra.mxu0 0.0
          %589 = vmatprep.subr.mxu0 0.0
          %590 = vmatpush1.msra.mxu0 0.0
          %591 = vmatprep.subr.mxu0 0.0
          %592 = vmatpush1.msra.mxu0 0.0
          %593 = vmatprep.subr.mxu0 0.0
          %594 = vmatpush1.msra.mxu0 0.0
          %595 = vmatprep.subr.mxu0 0.0
          %596 = vmatpush1.msra.mxu0 0.0
          %597 = vmatprep.subr.mxu0 0.0
          %598 = vmatpush1.msra.mxu0 0.0
          %599 = vmatprep.subr.mxu0 0.0
          %600 = vmatpush1.msra.mxu0 0.0
          %601 = vmatprep.subr.mxu0 0.0
          %602 = vmatpush1.msra.mxu0 0.0
          %603 = vmatprep.subr.mxu0 0.0
          %604 = vmatpush1.msra.mxu0 0.0
          %605 = vmatprep.subr.mxu0 0.0
          %606 = vmatpush1.msra.mxu0 0.0
          %607 = vmatprep.subr.mxu0 0.0
          %608 = vmatpush1.msra.mxu0 0.0
          %609 = vmatprep.subr.mxu0 0.0
          %610 = vmatpush1.msra.mxu0 0.0
          %611 = vmatprep.subr.mxu0 0.0
          %612 = vmatpush1.msra.mxu0 0.0
          %613 = vmatprep.subr.mxu0 0.0
          %614 = vmatpush1.msra.mxu0 0.0
          %615 = vmatprep.subr.mxu0 0.0
          %616 = vmatpush1.msra.mxu0 0.0
          %617 = vmatprep.subr.mxu0 0.0
          %618 = vmatpush1.msra.mxu0 0.0
          %619 = vmatprep.subr.mxu0 0.0
          %620 = vmatpush1.msra.mxu0 0.0
          %621 = vmatprep.subr.mxu0 0.0
          %622 = vmatpush1.msra.mxu0 0.0
          %623 = vmatprep.subr.mxu0 0.0
          %624 = vmatpush1.msra.mxu0 0.0
          %625 = vmatprep.subr.mxu0 0.0
          %626 = vmatpush1.msra.mxu0 0.0
          %627 = vmatprep.subr.mxu0 0.0
          %628 = vmatpush1.msra.mxu0 0.0
          %629 = vmatprep.subr.mxu0 0.0
          %630 = vmatpush1.msra.mxu0 0.0
          %631 = vmatprep.subr.mxu0 0.0
          %632 = vmatpush1.msra.mxu0 0.0
          %633 = vmatprep.subr.mxu0 0.0
          %634 = vmatpush1.msra.mxu0 0.0
          %635 = vmatprep.subr.mxu0 0.0
          %636 = vmatpush1.msra.mxu0 0.0
          %637 = vmatprep.subr.mxu0 0.0
          %638 = vmatpush1.msra.mxu0 0.0
          %639 = vmatprep.mubr.f32.mxu0 0.0
          %640 = vmatmul.mubr.f32.gmra.mrb[0].mxu0 %v480
          %v641 = vpop.f32.mrb[0].mxu0
          %v642 = vadd.f32 %v466, %v641
          %v643 = vpop.f32.mrb[0].mxu0
          %v644 = vadd.f32 %v470, %v643
          %645 = vmatprep.mubr.f32.mxu0 0.0
          %646 = vmatmul.mubr.f32.gmra.mrb[0].mxu0 %v483
          %v647 = vpop.f32.mrb[0].mxu0
          %v648 = vadd.f32 %v466, %v647
          %v649 = vpop.f32.mrb[0].mxu0
          %v650 = vadd.f32 %v470, %v649
          %651 = vmatprep.mubr.f32.mxu0 0.0
          %652 = vmatmul.mubr.f32.gmra.mrb[0].mxu0 %v486
          %v653 = vpop.f32.mrb[0].mxu0
          %v654 = vadd.f32 %v466, %v653
          %v655 = vpop.f32.mrb[0].mxu0
          %v656 = vadd.f32 %v470, %v655
          %657 = vmatprep.mubr.f32.mxu0 0.0
          %658 = vmatmul.mubr.f32.gmra.mrb[0].mxu0 %v489
          %v659 = vpop.f32.mrb[0].mxu0
          %v660 = vadd.f32 %v466, %v659
          %v661 = vpop.f32.mrb[0].mxu0
          %v662 = vadd.f32 %v470, %v661
          %663 = vmatprep.mubr.f32.mxu0 0.0
          %664 = vmatmul.mubr.f32.gmra.mrb[0].mxu0 %v492
          %v665 = vpop.f32.mrb[0].mxu0
          %v666 = vadd.f32 %v466, %v665
          %v667 = vpop.f32.mrb[0].mxu0
          %v668 = vadd.f32 %v470, %v667
          %669 = vmatprep.mubr.f32.mxu0 0.0
          %670 = vmatmul.mubr.f32.gmra.mrb[0].mxu0 %v495
          %v671 = vpop.f32.mrb[0].mxu0
          %v672 = vadd.f32 %v466, %v671
          %v673 = vpop.f32.mrb[0].mxu0
          %v674 = vadd.f32 %v470, %v673
          %675 = vmatprep.mubr.f32.mxu0 0.0
          %676 = vmatmul.mubr.f32.gmra.mrb[0].mxu0 %v498
          %v677 = vpop.f32.mrb[0].mxu0
          %v678 = vadd.f32 %v466, %v677
          %v679 = vpop.f32.mrb[0].mxu0
          %v680 = vadd.f32 %v470, %v679
          %681 = vmatprep.mubr.f32.mxu0 0.0
          %682 = vmatmul.mubr.f32.gmra.mrb[0].mxu0 %v501
          %v683 = vpop.f32.mrb[0].mxu0
          %v684 = vadd.f32 %v466, %v683
          %v685 = vpop.f32.mrb[0].mxu0
          %v686 = vadd.f32 %v470, %v685
          %687 = vmatprep.mubr.f32.mxu0 0.0
          %688 = vmatmul.mubr.f32.gmra.mrb[0].mxu0 %v504
          %v689 = vpop.f32.mrb[0].mxu0
          %v690 = vadd.f32 %v466, %v689
          %v691 = vpop.f32.mrb[0].mxu0
          %v692 = vadd.f32 %v470, %v691
          %693 = vmatprep.mubr.f32.mxu0 0.0
          %694 = vmatmul.mubr.f32.gmra.mrb[0].mxu0 %v507
          %v695 = vpop.f32.mrb[0].mxu0
          %v696 = vadd.f32 %v466, %v695
          %v697 = vpop.f32.mrb[0].mxu0
          %v698 = vadd.f32 %v470, %v697
          %699 = vmatprep.mubr.f32.mxu0 0.0
          %700 = vmatmul.mubr.f32.gmra.mrb[0].mxu0 %v510
          %v701 = vpop.f32.mrb[0].mxu0
          %v702 = vadd.f32 %v466, %v701
          %v703 = vpop.f32.mrb[0].mxu0
          %v704 = vadd.f32 %v470, %v703
          %705 = vmatprep.mubr.f32.mxu0 0.0
          %706 = vmatmul.mubr.f32.gmra.mrb[0].mxu0 %v513
          %v707 = vpop.f32.mrb[0].mxu0
          %v708 = vadd.f32 %v466, %v707
          %v709 = vpop.f32.mrb[0].mxu0
          %v710 = vadd.f32 %v470, %v709
          %711 = vmatprep.mubr.f32.mxu0 0.0
          %712 = vmatmul.mubr.f32.gmra.mrb[0].mxu0 %v516
          %v713 = vpop.f32.mrb[0].mxu0
          %v714 = vadd.f32 %v466, %v713
          %v715 = vpop.f32.mrb[0].mxu0
          %v716 = vadd.f32 %v470, %v715
          %717 = vmatprep.mubr.f32.mxu0 0.0
          %718 = vmatmul.mubr.f32.gmra.mrb[0].mxu0 %v519
          %v719 = vpop.f32.mrb[0].mxu0
          %v720 = vadd.f32 %v466, %v719
          %v721 = vpop.f32.mrb[0].mxu0
          %v722 = vadd.f32 %v470, %v721
          %723 = vmatprep.mubr.f32.mxu0 0.0
          %724 = vmatmul.mubr.f32.gmra.mrb[0].mxu0 %v522
          %v725 = vpop.f32.mrb[0].mxu0
          %v726 = vadd.f32 %v466, %v725
          %v727 = vpop.f32.mrb[0].mxu0
          %v728 = vadd.f32 %v470, %v727
          %729 = vmatprep.mubr.f32.mxu0 0.0
          %730 = vmatmul.mubr.f32.gmra.mrb[0].mxu0 %v525
          %v731 = vpop.f32.mrb[0].mxu0
          %v732 = vadd.f32 %v466, %v731
          %v733 = vpop.f32.mrb[0].mxu0
          %v734 = vadd.f32 %v470, %v733
          %735 = vmatprep.mubr.f32.mxu0 0.0
          %736 = vmatmul.mubr.f32.gmra.mrb[0].mxu0 %v528
          %v737 = vpop.f32.mrb[0].mxu0
          %v738 = vadd.f32 %v466, %v737
          %v739 = vpop.f32.mrb[0].mxu0
          %v740 = vadd.f32 %v470, %v739
          %741 = vmatprep.mubr.f32.mxu0 0.0
          %742 = vmatmul.mubr.f32.gmra.mrb[0].mxu0 %v531
          %v743 = vpop.f32.mrb[0].mxu0
          %v744 = vadd.f32 %v466, %v743
          %v745 = vpop.f32.mrb[0].mxu0
          %v746 = vadd.f32 %v470, %v745
          %747 = vmatprep.mubr.f32.mxu0 0.0
          %748 = vmatmul.mubr.f32.gmra.mrb[0].mxu0 %v534
          %v749 = vpop.f32.mrb[0].mxu0
          %v750 = vadd.f32 %v466, %v749
          %v751 = vpop.f32.mrb[0].mxu0
          %v752 = vadd.f32 %v470, %v751
          %753 = vmatprep.mubr.f32.mxu0 0.0
          %754 = vmatmul.mubr.f32.gmra.mrb[0].mxu0 %v537
          %v755 = vpop.f32.mrb[0].mxu0
          %v756 = vadd.f32 %v466, %v755
          %v757 = vpop.f32.mrb[0].mxu0
          %v758 = vadd.f32 %v470, %v757
          %759 = vmatprep.mubr.f32.mxu0 0.0
          %760 = vmatmul.mubr.f32.gmra.mrb[0].mxu0 %v540
          %v761 = vpop.f32.mrb[0].mxu0
          %v762 = vadd.f32 %v466, %v761
          %v763 = vpop.f32.mrb[0].mxu0
          %v764 = vadd.f32 %v470, %v763
          %765 = vmatprep.mubr.f32.mxu0 0.0
          %766 = vmatmul.mubr.f32.gmra.mrb[0].mxu0 %v543
          %v767 = vpop.f32.mrb[0].mxu0
          %v768 = vadd.f32 %v466, %v767
          %v769 = vpop.f32.mrb[0].mxu0
          %v770 = vadd.f32 %v470, %v769
          %771 = vmatprep.mubr.f32.mxu0 0.0
          %772 = vmatmul.mubr.f32.gmra.mrb[0].mxu0 %v546
          %v773 = vpop.f32.mrb[0].mxu0
          %v774 = vadd.f32 %v466, %v773
          %v775 = vpop.f32.mrb[0].mxu0
          %v776 = vadd.f32 %v470, %v775
          %777 = vmatprep.mubr.f32.mxu0 0.0
          %778 = vmatmul.mubr.f32.gmra.mrb[0].mxu0 %v549
          %v779 = vpop.f32.mrb[0].mxu0
          %v780 = vadd.f32 %v466, %v779
          %v781 = vpop.f32.mrb[0].mxu0
          %v782 = vadd.f32 %v470, %v781
          %783 = vmatprep.mubr.f32.mxu0 0.0
          %784 = vmatmul.mubr.f32.gmra.mrb[0].mxu0 %v552
          %v785 = vpop.f32.mrb[0].mxu0
          %v786 = vadd.f32 %v466, %v785
          %v787 = vpop.f32.mrb[0].mxu0
          %v788 = vadd.f32 %v470, %v787
          %789 = vmatprep.mubr.f32.mxu0 0.0
          %790 = vmatmul.mubr.f32.gmra.mrb[0].mxu0 %v555
          %v791 = vpop.f32.mrb[0].mxu0
          %v792 = vadd.f32 %v466, %v791
          %v793 = vpop.f32.mrb[0].mxu0
          %v794 = vadd.f32 %v470, %v793
          %795 = vmatprep.mubr.f32.mxu0 0.0
          %796 = vmatmul.mubr.f32.gmra.mrb[0].mxu0 %v558
          %v797 = vpop.f32.mrb[0].mxu0
          %v798 = vadd.f32 %v466, %v797
          %v799 = vpop.f32.mrb[0].mxu0
          %v800 = vadd.f32 %v470, %v799
          %801 = vmatprep.mubr.f32.mxu0 0.0
          %802 = vmatmul.mubr.f32.gmra.mrb[0].mxu0 %v561
          %v803 = vpop.f32.mrb[0].mxu0
          %v804 = vadd.f32 %v466, %v803
          %v805 = vpop.f32.mrb[0].mxu0
          %v806 = vadd.f32 %v470, %v805
          %807 = vmatprep.mubr.f32.mxu0 0.0
          %808 = vmatmul.mubr.f32.gmra.mrb[0].mxu0 %v564
          %v809 = vpop.f32.mrb[0].mxu0
          %v810 = vadd.f32 %v466, %v809
          %v811 = vpop.f32.mrb[0].mxu0
          %v812 = vadd.f32 %v470, %v811
          %813 = vmatprep.mubr.f32.mxu0 0.0
          %814 = vmatmul.mubr.f32.gmra.mrb[0].mxu0 %v567
          %v815 = vpop.f32.mrb[0].mxu0
          %v816 = vadd.f32 %v466, %v815
          %v817 = vpop.f32.mrb[0].mxu0
          %v818 = vadd.f32 %v470, %v817
          %819 = vmatprep.mubr.f32.mxu0 0.0
          %820 = vmatmul.mubr.f32.gmra.mrb[0].mxu0 %v570
          %v821 = vpop.f32.mrb[0].mxu0
          %v822 = vadd.f32 %v466, %v821
          %v823 = vpop.f32.mrb[0].mxu0
          %v824 = vadd.f32 %v470, %v823
          %825 = vmatprep.mubr.f32.mxu0 0.0
          %826 = vmatmul.mubr.f32.gmra.mrb[0].mxu0 %v573
          %v827 = vpop.f32.mrb[0].mxu0
          %v828 = vadd.f32 %v466, %v827
          %v829 = vpop.f32.mrb[0].mxu0
          %v830 = vadd.f32 %v470, %v829
          %831 = vdwg.mxu0
          %832 = vmatprep.subr.mxu0 0.0
          %833 = vmatpush1.msra.mxu0 %v451
          %834 = vmatprep.subr.mxu0 0.0
          %835 = vmatpush1.msra.mxu0 %v454
          %836 = vmatprep.subr.mxu0 0.0
          %837 = vmatpush1.msra.mxu0 %v457
          %838 = vmatprep.subr.mxu0 0.0
          %839 = vmatpush1.msra.mxu0 %v460
          %840 = vmatprep.subr.mxu0 0.0
          %841 = vmatpush1.msra.mxu0 0.0
          %842 = vmatprep.subr.mxu0 0.0
          %843 = vmatpush1.msra.mxu0 0.0
          %844 = vmatprep.subr.mxu0 0.0
          %845 = vmatpush1.msra.mxu0 0.0
          %846 = vmatprep.subr.mxu0 0.0
          %847 = vmatpush1.msra.mxu0 0.0
          %848 = vmatprep.subr.mxu0 0.0
          %849 = vmatpush1.msra.mxu0 0.0
          %850 = vmatprep.subr.mxu0 0.0
          %851 = vmatpush1.msra.mxu0 0.0
          %852 = vmatprep.subr.mxu0 0.0
          %853 = vmatpush1.msra.mxu0 0.0
          %854 = vmatprep.subr.mxu0 0.0
          %855 = vmatpush1.msra.mxu0 0.0
          %856 = vmatprep.subr.mxu0 0.0
          %857 = vmatpush1.msra.mxu0 0.0
          %858 = vmatprep.subr.mxu0 0.0
          %859 = vmatpush1.msra.mxu0 0.0
          %860 = vmatprep.subr.mxu0 0.0
          %861 = vmatpush1.msra.mxu0 0.0
          %862 = vmatprep.subr.mxu0 0.0
          %863 = vmatpush1.msra.mxu0 0.0
          %864 = vmatprep.subr.mxu0 0.0
          %865 = vmatpush1.msra.mxu0 0.0
          %866 = vmatprep.subr.mxu0 0.0
          %867 = vmatpush1.msra.mxu0 0.0
          %868 = vmatprep.subr.mxu0 0.0
          %869 = vmatpush1.msra.mxu0 0.0
          %870 = vmatprep.subr.mxu0 0.0
          %871 = vmatpush1.msra.mxu0 0.0
          %872 = vmatprep.subr.mxu0 0.0
          %873 = vmatpush1.msra.mxu0 0.0
          %874 = vmatprep.subr.mxu0 0.0
          %875 = vmatpush1.msra.mxu0 0.0
          %876 = vmatprep.subr.mxu0 0.0
          %877 = vmatpush1.msra.mxu0 0.0
          %878 = vmatprep.subr.mxu0 0.0
          %879 = vmatpush1.msra.mxu0 0.0
          %880 = vmatprep.subr.mxu0 0.0
          %881 = vmatpush1.msra.mxu0 0.0
          %882 = vmatprep.subr.mxu0 0.0
          %883 = vmatpush1.msra.mxu0 0.0
          %884 = vmatprep.subr.mxu0 0.0
          %885 = vmatpush1.msra.mxu0 0.0
          %886 = vmatprep.subr.mxu0 0.0
          %887 = vmatpush1.msra.mxu0 0.0
          %888 = vmatprep.subr.mxu0 0.0
          %889 = vmatpush1.msra.mxu0 0.0
          %890 = vmatprep.subr.mxu0 0.0
          %891 = vmatpush1.msra.mxu0 0.0
          %892 = vmatprep.subr.mxu0 0.0
          %893 = vmatpush1.msra.mxu0 0.0
          %894 = vmatprep.subr.mxu0 0.0
          %895 = vmatpush1.msra.mxu0 0.0
          %896 = vmatprep.mubr.f32.mxu0 0.0
          %897 = vmatmul.mubr.f32.gmra.mrb[0].mxu0 %v480
          %v898 = vpop.f32.mrb[0].mxu0
          %v899 = vadd.f32 %v474, %v898
          %v900 = vpop.f32.mrb[0].mxu0
          %901 = vmatprep.mubr.f32.mxu0 0.0
          %902 = vmatmul.mubr.f32.gmra.mrb[0].mxu0 %v483
          %v903 = vpop.f32.mrb[0].mxu0
          %v904 = vadd.f32 %v474, %v903
          %v905 = vpop.f32.mrb[0].mxu0
          %906 = vmatprep.mubr.f32.mxu0 0.0
          %907 = vmatmul.mubr.f32.gmra.mrb[0].mxu0 %v486
          %v908 = vpop.f32.mrb[0].mxu0
          %v909 = vadd.f32 %v474, %v908
          %v910 = vpop.f32.mrb[0].mxu0
          %911 = vmatprep.mubr.f32.mxu0 0.0
          %912 = vmatmul.mubr.f32.gmra.mrb[0].mxu0 %v489
          %v913 = vpop.f32.mrb[0].mxu0
          %v914 = vadd.f32 %v474, %v913
          %v915 = vpop.f32.mrb[0].mxu0
          %916 = vmatprep.mubr.f32.mxu0 0.0
          %917 = vmatmul.mubr.f32.gmra.mrb[0].mxu0 %v492
          %v918 = vpop.f32.mrb[0].mxu0
          %v919 = vadd.f32 %v474, %v918
          %v920 = vpop.f32.mrb[0].mxu0
          %921 = vmatprep.mubr.f32.mxu0 0.0
          %922 = vmatmul.mubr.f32.gmra.mrb[0].mxu0 %v495
          %v923 = vpop.f32.mrb[0].mxu0
          %v924 = vadd.f32 %v474, %v923
          %v925 = vpop.f32.mrb[0].mxu0
          %926 = vmatprep.mubr.f32.mxu0 0.0
          %927 = vmatmul.mubr.f32.gmra.mrb[0].mxu0 %v498
          %v928 = vpop.f32.mrb[0].mxu0
          %v929 = vadd.f32 %v474, %v928
          %v930 = vpop.f32.mrb[0].mxu0
          %931 = vmatprep.mubr.f32.mxu0 0.0
          %932 = vmatmul.mubr.f32.gmra.mrb[0].mxu0 %v501
          %v933 = vpop.f32.mrb[0].mxu0
          %v934 = vadd.f32 %v474, %v933
          %v935 = vpop.f32.mrb[0].mxu0
          %936 = vmatprep.mubr.f32.mxu0 0.0
          %937 = vmatmul.mubr.f32.gmra.mrb[0].mxu0 %v504
          %v938 = vpop.f32.mrb[0].mxu0
          %v939 = vadd.f32 %v474, %v938
          %v940 = vpop.f32.mrb[0].mxu0
          %941 = vmatprep.mubr.f32.mxu0 0.0
          %942 = vmatmul.mubr.f32.gmra.mrb[0].mxu0 %v507
          %v943 = vpop.f32.mrb[0].mxu0
          %v944 = vadd.f32 %v474, %v943
          %v945 = vpop.f32.mrb[0].mxu0
          %946 = vmatprep.mubr.f32.mxu0 0.0
          %947 = vmatmul.mubr.f32.gmra.mrb[0].mxu0 %v510
          %v948 = vpop.f32.mrb[0].mxu0
          %v949 = vadd.f32 %v474, %v948
          %v950 = vpop.f32.mrb[0].mxu0
          %951 = vmatprep.mubr.f32.mxu0 0.0
          %952 = vmatmul.mubr.f32.gmra.mrb[0].mxu0 %v513
          %v953 = vpop.f32.mrb[0].mxu0
          %v954 = vadd.f32 %v474, %v953
          %v955 = vpop.f32.mrb[0].mxu0
          %956 = vmatprep.mubr.f32.mxu0 0.0
          %957 = vmatmul.mubr.f32.gmra.mrb[0].mxu0 %v516
          %v958 = vpop.f32.mrb[0].mxu0
          %v959 = vadd.f32 %v474, %v958
          %v960 = vpop.f32.mrb[0].mxu0
          %961 = vmatprep.mubr.f32.mxu0 0.0
          %962 = vmatmul.mubr.f32.gmra.mrb[0].mxu0 %v519
          %v963 = vpop.f32.mrb[0].mxu0
          %v964 = vadd.f32 %v474, %v963
          %v965 = vpop.f32.mrb[0].mxu0
          %966 = vmatprep.mubr.f32.mxu0 0.0
          %967 = vmatmul.mubr.f32.gmra.mrb[0].mxu0 %v522
          %v968 = vpop.f32.mrb[0].mxu0
          %v969 = vadd.f32 %v474, %v968
          %v970 = vpop.f32.mrb[0].mxu0
          %971 = vmatprep.mubr.f32.mxu0 0.0
          %972 = vmatmul.mubr.f32.gmra.mrb[0].mxu0 %v525
          %v973 = vpop.f32.mrb[0].mxu0
          %v974 = vadd.f32 %v474, %v973
          %v975 = vpop.f32.mrb[0].mxu0
          %976 = vmatprep.mubr.f32.mxu0 0.0
          %977 = vmatmul.mubr.f32.gmra.mrb[0].mxu0 %v528
          %v978 = vpop.f32.mrb[0].mxu0
          %v979 = vadd.f32 %v474, %v978
          %v980 = vpop.f32.mrb[0].mxu0
          %981 = vmatprep.mubr.f32.mxu0 0.0
          %982 = vmatmul.mubr.f32.gmra.mrb[0].mxu0 %v531
          %v983 = vpop.f32.mrb[0].mxu0
          %v984 = vadd.f32 %v474, %v983
          %v985 = vpop.f32.mrb[0].mxu0
          %986 = vmatprep.mubr.f32.mxu0 0.0
          %987 = vmatmul.mubr.f32.gmra.mrb[0].mxu0 %v534
          %v988 = vpop.f32.mrb[0].mxu0
          %v989 = vadd.f32 %v474, %v988
          %v990 = vpop.f32.mrb[0].mxu0
          %991 = vmatprep.mubr.f32.mxu0 0.0
          %992 = vmatmul.mubr.f32.gmra.mrb[0].mxu0 %v537
          %v993 = vpop.f32.mrb[0].mxu0
          %v994 = vadd.f32 %v474, %v993
          %v995 = vpop.f32.mrb[0].mxu0
          %996 = vmatprep.mubr.f32.mxu0 0.0
          %997 = vmatmul.mubr.f32.gmra.mrb[0].mxu0 %v540
          %v998 = vpop.f32.mrb[0].mxu0
          %v999 = vadd.f32 %v474, %v998
          %v1000 = vpop.f32.mrb[0].mxu0
          %1001 = vmatprep.mubr.f32.mxu0 0.0
          %1002 = vmatmul.mubr.f32.gmra.mrb[0].mxu0 %v543
          %v1003 = vpop.f32.mrb[0].mxu0
          %v1004 = vadd.f32 %v474, %v1003
          %v1005 = vpop.f32.mrb[0].mxu0
          %1006 = vmatprep.mubr.f32.mxu0 0.0
          %1007 = vmatmul.mubr.f32.gmra.mrb[0].mxu0 %v546
          %v1008 = vpop.f32.mrb[0].mxu0
          %v1009 = vadd.f32 %v474, %v1008
          %v1010 = vpop.f32.mrb[0].mxu0
          %1011 = vmatprep.mubr.f32.mxu0 0.0
          %1012 = vmatmul.mubr.f32.gmra.mrb[0].mxu0 %v549
          %v1013 = vpop.f32.mrb[0].mxu0
          %v1014 = vadd.f32 %v474, %v1013
          %v1015 = vpop.f32.mrb[0].mxu0
          %1016 = vmatprep.mubr.f32.mxu0 0.0
          %1017 = vmatmul.mubr.f32.gmra.mrb[0].mxu0 %v552
          %v1018 = vpop.f32.mrb[0].mxu0
          %v1019 = vadd.f32 %v474, %v1018
          %v1020 = vpop.f32.mrb[0].mxu0
          %1021 = vmatprep.mubr.f32.mxu0 0.0
          %1022 = vmatmul.mubr.f32.gmra.mrb[0].mxu0 %v555
          %v1023 = vpop.f32.mrb[0].mxu0
          %v1024 = vadd.f32 %v474, %v1023
          %v1025 = vpop.f32.mrb[0].mxu0
          %1026 = vmatprep.mubr.f32.mxu0 0.0
          %1027 = vmatmul.mubr.f32.gmra.mrb[0].mxu0 %v558
          %v1028 = vpop.f32.mrb[0].mxu0
          %v1029 = vadd.f32 %v474, %v1028
          %v1030 = vpop.f32.mrb[0].mxu0
          %1031 = vmatprep.mubr.f32.mxu0 0.0
          %1032 = vmatmul.mubr.f32.gmra.mrb[0].mxu0 %v561
          %v1033 = vpop.f32.mrb[0].mxu0
          %v1034 = vadd.f32 %v474, %v1033
          %v1035 = vpop.f32.mrb[0].mxu0
          %1036 = vmatprep.mubr.f32.mxu0 0.0
          %1037 = vmatmul.mubr.f32.gmra.mrb[0].mxu0 %v564
          %v1038 = vpop.f32.mrb[0].mxu0
          %v1039 = vadd.f32 %v474, %v1038
          %v1040 = vpop.f32.mrb[0].mxu0
          %1041 = vmatprep.mubr.f32.mxu0 0.0
          %1042 = vmatmul.mubr.f32.gmra.mrb[0].mxu0 %v567
          %v1043 = vpop.f32.mrb[0].mxu0
          %v1044 = vadd.f32 %v474, %v1043
          %v1045 = vpop.f32.mrb[0].mxu0
          %1046 = vmatprep.mubr.f32.mxu0 0.0
          %1047 = vmatmul.mubr.f32.gmra.mrb[0].mxu0 %v570
          %v1048 = vpop.f32.mrb[0].mxu0
          %v1049 = vadd.f32 %v474, %v1048
          %v1050 = vpop.f32.mrb[0].mxu0
          %1051 = vmatprep.mubr.f32.mxu0 0.0
          %1052 = vmatmul.mubr.f32.gmra.mrb[0].mxu0 %v573
          %v1053 = vpop.f32.mrb[0].mxu0
          %v1054 = vadd.f32 %v474, %v1053
          %v1055 = vpop.f32.mrb[0].mxu0
          %1056 = vdwg.mxu0
          %v1057 = vmax.f32 %v642, 0.0
          %v1058 = vmax.f32 %v644, 0.0
          %v1059 = vmax.f32 %v899, 0.0
          %v1060 = vmax.f32 %v648, 0.0
          %v1061 = vmax.f32 %v650, 0.0
          %v1062 = vmax.f32 %v904, 0.0
          %v1063 = vmax.f32 %v654, 0.0
          %v1064 = vmax.f32 %v656, 0.0
          %v1065 = vmax.f32 %v909, 0.0
          %v1066 = vmax.f32 %v660, 0.0
          %v1067 = vmax.f32 %v662, 0.0
          %v1068 = vmax.f32 %v914, 0.0
          %v1069 = vmax.f32 %v666, 0.0
          %v1070 = vmax.f32 %v668, 0.0
          %v1071 = vmax.f32 %v919, 0.0
          %v1072 = vmax.f32 %v672, 0.0
          %v1073 = vmax.f32 %v674, 0.0
          %v1074 = vmax.f32 %v924, 0.0
          %v1075 = vmax.f32 %v678, 0.0
          %v1076 = vmax.f32 %v680, 0.0
          %v1077 = vmax.f32 %v929, 0.0
          %v1078 = vmax.f32 %v684, 0.0
          %v1079 = vmax.f32 %v686, 0.0
          %v1080 = vmax.f32 %v934, 0.0
          %v1081 = vmax.f32 %v690, 0.0
          %v1082 = vmax.f32 %v692, 0.0
          %v1083 = vmax.f32 %v939, 0.0
          %v1084 = vmax.f32 %v696, 0.0
          %v1085 = vmax.f32 %v698, 0.0
          %v1086 = vmax.f32 %v944, 0.0
          %v1087 = vmax.f32 %v702, 0.0
          %v1088 = vmax.f32 %v704, 0.0
          %v1089 = vmax.f32 %v949, 0.0
          %v1090 = vmax.f32 %v708, 0.0
          %v1091 = vmax.f32 %v710, 0.0
          %v1092 = vmax.f32 %v954, 0.0
          %v1093 = vmax.f32 %v714, 0.0
          %v1094 = vmax.f32 %v716, 0.0
          %v1095 = vmax.f32 %v959, 0.0
          %v1096 = vmax.f32 %v720, 0.0
          %v1097 = vmax.f32 %v722, 0.0
          %v1098 = vmax.f32 %v964, 0.0
          %v1099 = vmax.f32 %v726, 0.0
          %v1100 = vmax.f32 %v728, 0.0
          %v1101 = vmax.f32 %v969, 0.0
          %v1102 = vmax.f32 %v732, 0.0
          %v1103 = vmax.f32 %v734, 0.0
          %v1104 = vmax.f32 %v974, 0.0
          %v1105 = vmax.f32 %v738, 0.0
          %v1106 = vmax.f32 %v740, 0.0
          %v1107 = vmax.f32 %v979, 0.0
          %v1108 = vmax.f32 %v744, 0.0
          %v1109 = vmax.f32 %v746, 0.0
          %v1110 = vmax.f32 %v984, 0.0
          %v1111 = vmax.f32 %v750, 0.0
          %v1112 = vmax.f32 %v752, 0.0
          %v1113 = vmax.f32 %v989, 0.0
          %v1114 = vmax.f32 %v756, 0.0
          %v1115 = vmax.f32 %v758, 0.0
          %v1116 = vmax.f32 %v994, 0.0
          %v1117 = vmax.f32 %v762, 0.0
          %v1118 = vmax.f32 %v764, 0.0
          %v1119 = vmax.f32 %v999, 0.0
          %v1120 = vmax.f32 %v768, 0.0
          %v1121 = vmax.f32 %v770, 0.0
          %v1122 = vmax.f32 %v1004, 0.0
          %v1123 = vmax.f32 %v774, 0.0
          %v1124 = vmax.f32 %v776, 0.0
          %v1125 = vmax.f32 %v1009, 0.0
          %v1126 = vmax.f32 %v780, 0.0
          %v1127 = vmax.f32 %v782, 0.0
          %v1128 = vmax.f32 %v1014, 0.0
          %v1129 = vmax.f32 %v786, 0.0
          %v1130 = vmax.f32 %v788, 0.0
          %v1131 = vmax.f32 %v1019, 0.0
          %v1132 = vmax.f32 %v792, 0.0
          %v1133 = vmax.f32 %v794, 0.0
          %v1134 = vmax.f32 %v1024, 0.0
          %v1135 = vmax.f32 %v798, 0.0
          %v1136 = vmax.f32 %v800, 0.0
          %v1137 = vmax.f32 %v1029, 0.0
          %v1138 = vmax.f32 %v804, 0.0
          %v1139 = vmax.f32 %v806, 0.0
          %v1140 = vmax.f32 %v1034, 0.0
          %v1141 = vmax.f32 %v810, 0.0
          %v1142 = vmax.f32 %v812, 0.0
          %v1143 = vmax.f32 %v1039, 0.0
          %v1144 = vmax.f32 %v816, 0.0
          %v1145 = vmax.f32 %v818, 0.0
          %v1146 = vmax.f32 %v1044, 0.0
          %v1147 = vmax.f32 %v822, 0.0
          %v1148 = vmax.f32 %v824, 0.0
          %v1149 = vmax.f32 %v1049, 0.0
          %v1150 = vmax.f32 %v828, 0.0
          %v1151 = vmax.f32 %v830, 0.0
          %v1152 = vmax.f32 %v1054, 0.0
          %v1153 = vpack.c.bf16 %v1060, %v1057
          %v1154 = vpack.c.bf16 %v1061, %v1058
          %v1155 = vpack.c.bf16 %v1062, %v1059
          %v1156 = vpack.c.bf16 %v1066, %v1063
          %v1157 = vpack.c.bf16 %v1067, %v1064
          %v1158 = vpack.c.bf16 %v1068, %v1065
          %v1159 = vpack.c.bf16 %v1072, %v1069
          %v1160 = vpack.c.bf16 %v1073, %v1070
          %v1161 = vpack.c.bf16 %v1074, %v1071
          %v1162 = vpack.c.bf16 %v1078, %v1075
          %v1163 = vpack.c.bf16 %v1079, %v1076
          %v1164 = vpack.c.bf16 %v1080, %v1077
          %v1165 = vpack.c.bf16 %v1084, %v1081
          %v1166 = vpack.c.bf16 %v1085, %v1082
          %v1167 = vpack.c.bf16 %v1086, %v1083
          %v1168 = vpack.c.bf16 %v1090, %v1087
          %v1169 = vpack.c.bf16 %v1091, %v1088
          %v1170 = vpack.c.bf16 %v1092, %v1089
          %v1171 = vpack.c.bf16 %v1096, %v1093
          %v1172 = vpack.c.bf16 %v1097, %v1094
          %v1173 = vpack.c.bf16 %v1098, %v1095
          %v1174 = vpack.c.bf16 %v1102, %v1099
          %v1175 = vpack.c.bf16 %v1103, %v1100
          %v1176 = vpack.c.bf16 %v1104, %v1101
          %v1177 = vpack.c.bf16 %v1108, %v1105
          %v1178 = vpack.c.bf16 %v1109, %v1106
          %v1179 = vpack.c.bf16 %v1110, %v1107
          %v1180 = vpack.c.bf16 %v1114, %v1111
          %v1181 = vpack.c.bf16 %v1115, %v1112
          %v1182 = vpack.c.bf16 %v1116, %v1113
          %v1183 = vpack.c.bf16 %v1120, %v1117
          %v1184 = vpack.c.bf16 %v1121, %v1118
          %v1185 = vpack.c.bf16 %v1122, %v1119
          %v1186 = vpack.c.bf16 %v1126, %v1123
          %v1187 = vpack.c.bf16 %v1127, %v1124
          %v1188 = vpack.c.bf16 %v1128, %v1125
          %v1189 = vpack.c.bf16 %v1132, %v1129
          %v1190 = vpack.c.bf16 %v1133, %v1130
          %v1191 = vpack.c.bf16 %v1134, %v1131
          %v1192 = vpack.c.bf16 %v1138, %v1135
          %v1193 = vpack.c.bf16 %v1139, %v1136
          %v1194 = vpack.c.bf16 %v1140, %v1137
          %v1195 = vpack.c.bf16 %v1144, %v1141
          %v1196 = vpack.c.bf16 %v1145, %v1142
          %v1197 = vpack.c.bf16 %v1146, %v1143
          %v1198 = vpack.c.bf16 %v1150, %v1147
          %v1199 = vpack.c.bf16 %v1151, %v1148
          %v1200 = vpack.c.bf16 %v1152, %v1149
          %1249 = vrot.lane.b32.xlu0 %v1153, 32
          %v1250 = vpop.permute.xlu0 %1249
          %1251 = vrot.lane.b32.xlu0 %v1154, 32
          %v1252 = vpop.permute.xlu0 %1251
          %1253 = vrot.lane.b32.xlu0 %v1155, 32
          %v1254 = vpop.permute.xlu0 %1253
          %1255 = vrot.lane.b32.xlu0 %v1156, 32
          %v1256 = vpop.permute.xlu0 %1255
          %1257 = vrot.lane.b32.xlu0 %v1157, 32
          %v1258 = vpop.permute.xlu0 %1257
          %1259 = vrot.lane.b32.xlu0 %v1158, 32
          %v1260 = vpop.permute.xlu0 %1259
          %1261 = vrot.lane.b32.xlu0 %v1159, 32
          %v1262 = vpop.permute.xlu0 %1261
          %1263 = vrot.lane.b32.xlu0 %v1160, 32
          %v1264 = vpop.permute.xlu0 %1263
          %1265 = vrot.lane.b32.xlu0 %v1161, 32
          %v1266 = vpop.permute.xlu0 %1265
          %1267 = vrot.lane.b32.xlu0 %v1162, 32
          %v1268 = vpop.permute.xlu0 %1267
          %1269 = vrot.lane.b32.xlu0 %v1163, 32
          %v1270 = vpop.permute.xlu0 %1269
          %1271 = vrot.lane.b32.xlu0 %v1164, 32
          %v1272 = vpop.permute.xlu0 %1271
          %1273 = vrot.lane.b32.xlu0 %v1165, 32
          %v1274 = vpop.permute.xlu0 %1273
          %1275 = vrot.lane.b32.xlu0 %v1166, 32
          %v1276 = vpop.permute.xlu0 %1275
          %1277 = vrot.lane.b32.xlu0 %v1167, 32
          %v1278 = vpop.permute.xlu0 %1277
          %1279 = vrot.lane.b32.xlu0 %v1168, 32
          %v1280 = vpop.permute.xlu0 %1279
          %1281 = vrot.lane.b32.xlu0 %v1169, 32
          %v1282 = vpop.permute.xlu0 %1281
          %1283 = vrot.lane.b32.xlu0 %v1170, 32
          %v1284 = vpop.permute.xlu0 %1283
          %1285 = vrot.lane.b32.xlu0 %v1171, 32
          %v1286 = vpop.permute.xlu0 %1285
          %1287 = vrot.lane.b32.xlu0 %v1172, 32
          %v1288 = vpop.permute.xlu0 %1287
          %1289 = vrot.lane.b32.xlu0 %v1173, 32
          %v1290 = vpop.permute.xlu0 %1289
          %1291 = vrot.lane.b32.xlu0 %v1174, 32
          %v1292 = vpop.permute.xlu0 %1291
          %1293 = vrot.lane.b32.xlu0 %v1175, 32
          %v1294 = vpop.permute.xlu0 %1293
          %1295 = vrot.lane.b32.xlu0 %v1176, 32
          %v1296 = vpop.permute.xlu0 %1295
          %1297 = vrot.lane.b32.xlu0 %v1177, 32
          %v1298 = vpop.permute.xlu0 %1297
          %1299 = vrot.lane.b32.xlu0 %v1178, 32
          %v1300 = vpop.permute.xlu0 %1299
          %1301 = vrot.lane.b32.xlu0 %v1179, 32
          %v1302 = vpop.permute.xlu0 %1301
          %1303 = vrot.lane.b32.xlu0 %v1180, 32
          %v1304 = vpop.permute.xlu0 %1303
          %1305 = vrot.lane.b32.xlu0 %v1181, 32
          %v1306 = vpop.permute.xlu0 %1305
          %1307 = vrot.lane.b32.xlu0 %v1182, 32
          %v1308 = vpop.permute.xlu0 %1307
          %1309 = vrot.lane.b32.xlu0 %v1183, 32
          %v1310 = vpop.permute.xlu0 %1309
          %1311 = vrot.lane.b32.xlu0 %v1184, 32
          %v1312 = vpop.permute.xlu0 %1311
          %1313 = vrot.lane.b32.xlu0 %v1185, 32
          %v1314 = vpop.permute.xlu0 %1313
          %1315 = vrot.lane.b32.xlu0 %v1186, 32
          %v1316 = vpop.permute.xlu0 %1315
          %1317 = vrot.lane.b32.xlu0 %v1187, 32
          %v1318 = vpop.permute.xlu0 %1317
          %1319 = vrot.lane.b32.xlu0 %v1188, 32
          %v1320 = vpop.permute.xlu0 %1319
          %1321 = vrot.lane.b32.xlu0 %v1189, 32
          %v1322 = vpop.permute.xlu0 %1321
          %1323 = vrot.lane.b32.xlu0 %v1190, 32
          %v1324 = vpop.permute.xlu0 %1323
          %1325 = vrot.lane.b32.xlu0 %v1191, 32
          %v1326 = vpop.permute.xlu0 %1325
          %1327 = vrot.lane.b32.xlu0 %v1192, 32
          %v1328 = vpop.permute.xlu0 %1327
          %1329 = vrot.lane.b32.xlu0 %v1193, 32
          %v1330 = vpop.permute.xlu0 %1329
          %1331 = vrot.lane.b32.xlu0 %v1194, 32
          %v1332 = vpop.permute.xlu0 %1331
          %1333 = vrot.lane.b32.xlu0 %v1195, 32
          %v1334 = vpop.permute.xlu0 %1333
          %1335 = vrot.lane.b32.xlu0 %v1196, 32
          %v1336 = vpop.permute.xlu0 %1335
          %1337 = vrot.lane.b32.xlu0 %v1197, 32
          %v1338 = vpop.permute.xlu0 %1337
          %1339 = vrot.lane.b32.xlu0 %v1198, 32
          %v1340 = vpop.permute.xlu0 %1339
          %1341 = vrot.lane.b32.xlu0 %v1199, 32
          %v1342 = vpop.permute.xlu0 %1341
          %1343 = vrot.lane.b32.xlu0 %v1200, 32
          %v1344 = vpop.permute.xlu0 %1343
          %vm1345 = vcmask 261120
          %v1346 = vsel %vm1345, %v1250, %v1252
          %v1347 = vsel %vm1345, %v1252, %v1254
          %v1348 = vsel %vm1345, %v1256, %v1258
          %v1349 = vsel %vm1345, %v1258, %v1260
          %v1350 = vsel %vm1345, %v1262, %v1264
          %v1351 = vsel %vm1345, %v1264, %v1266
          %v1352 = vsel %vm1345, %v1268, %v1270
          %v1353 = vsel %vm1345, %v1270, %v1272
          %v1354 = vsel %vm1345, %v1274, %v1276
          %v1355 = vsel %vm1345, %v1276, %v1278
          %v1356 = vsel %vm1345, %v1280, %v1282
          %v1357 = vsel %vm1345, %v1282, %v1284
          %v1358 = vsel %vm1345, %v1286, %v1288
          %v1359 = vsel %vm1345, %v1288, %v1290
          %v1360 = vsel %vm1345, %v1292, %v1294
          %v1361 = vsel %vm1345, %v1294, %v1296
          %v1362 = vsel %vm1345, %v1298, %v1300
          %v1363 = vsel %vm1345, %v1300, %v1302
          %v1364 = vsel %vm1345, %v1304, %v1306
          %v1365 = vsel %vm1345, %v1306, %v1308
          %v1366 = vsel %vm1345, %v1310, %v1312
          %v1367 = vsel %vm1345, %v1312, %v1314
          %v1368 = vsel %vm1345, %v1316, %v1318
          %v1369 = vsel %vm1345, %v1318, %v1320
          %v1370 = vsel %vm1345, %v1322, %v1324
          %v1371 = vsel %vm1345, %v1324, %v1326
          %v1372 = vsel %vm1345, %v1328, %v1330
          %v1373 = vsel %vm1345, %v1330, %v1332
          %v1374 = vsel %vm1345, %v1334, %v1336
          %v1375 = vsel %vm1345, %v1336, %v1338
          %v1376 = vsel %vm1345, %v1340, %v1342
          %v1377 = vsel %vm1345, %v1342, %v1344
          %1410 = vst [vmem:[#allocation2] sm:$0xff] %v1346
          %vm1411 = vcmask 523264
          %1412 = vst.msk [vmem:[#allocation2 + $0x8] sm:$0xff] %vm1411, %v1347
          %1413 = vst [vmem:[#allocation2 + $0x10] sm:$0xff] %v1348
          %1414 = vst.msk [vmem:[#allocation2 + $0x18] sm:$0xff] %vm1411, %v1349
          %1415 = vst [vmem:[#allocation2 + $0x20] sm:$0xff] %v1350
          %1416 = vst.msk [vmem:[#allocation2 + $0x28] sm:$0xff] %vm1411, %v1351
          %1417 = vst [vmem:[#allocation2 + $0x30] sm:$0xff] %v1352
          %1418 = vst.msk [vmem:[#allocation2 + $0x38] sm:$0xff] %vm1411, %v1353
          %1419 = vst [vmem:[#allocation2 + $0x40] sm:$0xff] %v1354
          %1420 = vst.msk [vmem:[#allocation2 + $0x48] sm:$0xff] %vm1411, %v1355
          %1421 = vst [vmem:[#allocation2 + $0x50] sm:$0xff] %v1356
          %1422 = vst.msk [vmem:[#allocation2 + $0x58] sm:$0xff] %vm1411, %v1357
          %1423 = vst [vmem:[#allocation2 + $0x60] sm:$0xff] %v1358
          %1424 = vst.msk [vmem:[#allocation2 + $0x68] sm:$0xff] %vm1411, %v1359
          %1425 = vst [vmem:[#allocation2 + $0x70] sm:$0xff] %v1360
          %1426 = vst.msk [vmem:[#allocation2 + $0x78] sm:$0xff] %vm1411, %v1361
          %1427 = vst [vmem:[#allocation2 + $0x80] sm:$0xff] %v1362
          %1428 = vst.msk [vmem:[#allocation2 + $0x88] sm:$0xff] %vm1411, %v1363
          %1429 = vst [vmem:[#allocation2 + $0x90] sm:$0xff] %v1364
          %1430 = vst.msk [vmem:[#allocation2 + $0x98] sm:$0xff] %vm1411, %v1365
          %1431 = vst [vmem:[#allocation2 + $0xa0] sm:$0xff] %v1366
          %1432 = vst.msk [vmem:[#allocation2 + $0xa8] sm:$0xff] %vm1411, %v1367
          %1433 = vst [vmem:[#allocation2 + $0xb0] sm:$0xff] %v1368
          %1434 = vst.msk [vmem:[#allocation2 + $0xb8] sm:$0xff] %vm1411, %v1369
          %1435 = vst [vmem:[#allocation2 + $0xc0] sm:$0xff] %v1370
          %1436 = vst.msk [vmem:[#allocation2 + $0xc8] sm:$0xff] %vm1411, %v1371
          %1437 = vst [vmem:[#allocation2 + $0xd0] sm:$0xff] %v1372
          %1438 = vst.msk [vmem:[#allocation2 + $0xd8] sm:$0xff] %vm1411, %v1373
          %1439 = vst [vmem:[#allocation2 + $0xe0] sm:$0xff] %v1374
          %1440 = vst.msk [vmem:[#allocation2 + $0xe8] sm:$0xff] %vm1411, %v1375
          %1441 = vst [vmem:[#allocation2 + $0xf0] sm:$0xff] %v1376
          %1442 = vst.msk [vmem:[#allocation2 + $0xf8] sm:$0xff] %vm1411, %v1377
          %v1443 = vmul.f32 %v1057, 3.0
          %v1444 = vmul.f32 %v1060, 3.0
          %v1445 = vmul.f32 %v1063, 3.0
          %v1446 = vmul.f32 %v1066, 3.0
          %v1447 = vmul.f32 %v1069, 3.0
          %v1448 = vmul.f32 %v1072, 3.0
          %v1449 = vmul.f32 %v1075, 3.0
          %v1450 = vmul.f32 %v1078, 3.0
          %v1451 = vmul.f32 %v1081, 3.0
          %v1452 = vmul.f32 %v1084, 3.0
          %v1453 = vmul.f32 %v1087, 3.0
          %v1454 = vmul.f32 %v1090, 3.0
          %v1455 = vmul.f32 %v1093, 3.0
          %v1456 = vmul.f32 %v1096, 3.0
          %v1457 = vmul.f32 %v1099, 3.0
          %v1458 = vmul.f32 %v1102, 3.0
          %v1459 = vmul.f32 %v1105, 3.0
          %v1460 = vmul.f32 %v1108, 3.0
          %v1461 = vmul.f32 %v1111, 3.0
          %v1462 = vmul.f32 %v1114, 3.0
          %v1463 = vmul.f32 %v1117, 3.0
          %v1464 = vmul.f32 %v1120, 3.0
          %v1465 = vmul.f32 %v1123, 3.0
          %v1466 = vmul.f32 %v1126, 3.0
          %v1467 = vmul.f32 %v1129, 3.0
          %v1468 = vmul.f32 %v1132, 3.0
          %v1469 = vmul.f32 %v1135, 3.0
          %v1470 = vmul.f32 %v1138, 3.0
          %v1471 = vmul.f32 %v1141, 3.0
          %v1472 = vmul.f32 %v1144, 3.0
          %v1473 = vmul.f32 %v1147, 3.0
          %v1474 = vmul.f32 %v1150, 3.0
          %1507 = vrot.lane.b32.xlu0 %v1443, 96
          %v1508 = vpop.permute.xlu0 %1507
          %1509 = vrot.lane.b32.xlu0 %v1444, 96
          %v1510 = vpop.permute.xlu0 %1509
          %1511 = vrot.lane.b32.xlu0 %v1445, 96
          %v1512 = vpop.permute.xlu0 %1511
          %1513 = vrot.lane.b32.xlu0 %v1446, 96
          %v1514 = vpop.permute.xlu0 %1513
          %1515 = vrot.lane.b32.xlu0 %v1447, 96
          %v1516 = vpop.permute.xlu0 %1515
          %1517 = vrot.lane.b32.xlu0 %v1448, 96
          %v1518 = vpop.permute.xlu0 %1517
          %1519 = vrot.lane.b32.xlu0 %v1449, 96
          %v1520 = vpop.permute.xlu0 %1519
          %1521 = vrot.lane.b32.xlu0 %v1450, 96
          %v1522 = vpop.permute.xlu0 %1521
          %1523 = vrot.lane.b32.xlu0 %v1451, 96
          %v1524 = vpop.permute.xlu0 %1523
          %1525 = vrot.lane.b32.xlu0 %v1452, 96
          %v1526 = vpop.permute.xlu0 %1525
          %1527 = vrot.lane.b32.xlu0 %v1453, 96
          %v1528 = vpop.permute.xlu0 %1527
          %1529 = vrot.lane.b32.xlu0 %v1454, 96
          %v1530 = vpop.permute.xlu0 %1529
          %1531 = vrot.lane.b32.xlu0 %v1455, 96
          %v1532 = vpop.permute.xlu0 %1531
          %1533 = vrot.lane.b32.xlu0 %v1456, 96
          %v1534 = vpop.permute.xlu0 %1533
          %1535 = vrot.lane.b32.xlu0 %v1457, 96
          %v1536 = vpop.permute.xlu0 %1535
          %1537 = vrot.lane.b32.xlu0 %v1458, 96
          %v1538 = vpop.permute.xlu0 %1537
          %1539 = vrot.lane.b32.xlu0 %v1459, 96
          %v1540 = vpop.permute.xlu0 %1539
          %1541 = vrot.lane.b32.xlu0 %v1460, 96
          %v1542 = vpop.permute.xlu0 %1541
          %1543 = vrot.lane.b32.xlu0 %v1461, 96
          %v1544 = vpop.permute.xlu0 %1543
          %1545 = vrot.lane.b32.xlu0 %v1462, 96
          %v1546 = vpop.permute.xlu0 %1545
          %1547 = vrot.lane.b32.xlu0 %v1463, 96
          %v1548 = vpop.permute.xlu0 %1547
          %1549 = vrot.lane.b32.xlu0 %v1464, 96
          %v1550 = vpop.permute.xlu0 %1549
          %1551 = vrot.lane.b32.xlu0 %v1465, 96
          %v1552 = vpop.permute.xlu0 %1551
          %1553 = vrot.lane.b32.xlu0 %v1466, 96
          %v1554 = vpop.permute.xlu0 %1553
          %1555 = vrot.lane.b32.xlu0 %v1467, 96
          %v1556 = vpop.permute.xlu0 %1555
          %1557 = vrot.lane.b32.xlu0 %v1468, 96
          %v1558 = vpop.permute.xlu0 %1557
          %1559 = vrot.lane.b32.xlu0 %v1469, 96
          %v1560 = vpop.permute.xlu0 %1559
          %1561 = vrot.lane.b32.xlu0 %v1470, 96
          %v1562 = vpop.permute.xlu0 %1561
          %1563 = vrot.lane.b32.xlu0 %v1471, 96
          %v1564 = vpop.permute.xlu0 %1563
          %1565 = vrot.lane.b32.xlu0 %v1472, 96
          %v1566 = vpop.permute.xlu0 %1565
          %1567 = vrot.lane.b32.xlu0 %v1473, 96
          %v1568 = vpop.permute.xlu0 %1567
          %1569 = vrot.lane.b32.xlu0 %v1474, 96
          %v1570 = vpop.permute.xlu0 %1569
          %v1603 = vadd.f32 %v1057, %v1508
          %v1604 = vadd.f32 %v1058, %v1508
          %v1605 = vadd.f32 %v1060, %v1510
          %v1606 = vadd.f32 %v1061, %v1510
          %v1607 = vadd.f32 %v1063, %v1512
          %v1608 = vadd.f32 %v1064, %v1512
          %v1609 = vadd.f32 %v1066, %v1514
          %v1610 = vadd.f32 %v1067, %v1514
          %v1611 = vadd.f32 %v1069, %v1516
          %v1612 = vadd.f32 %v1070, %v1516
          %v1613 = vadd.f32 %v1072, %v1518
          %v1614 = vadd.f32 %v1073, %v1518
          %v1615 = vadd.f32 %v1075, %v1520
          %v1616 = vadd.f32 %v1076, %v1520
          %v1617 = vadd.f32 %v1078, %v1522
          %v1618 = vadd.f32 %v1079, %v1522
          %v1619 = vadd.f32 %v1081, %v1524
          %v1620 = vadd.f32 %v1082, %v1524
          %v1621 = vadd.f32 %v1084, %v1526
          %v1622 = vadd.f32 %v1085, %v1526
          %v1623 = vadd.f32 %v1087, %v1528
          %v1624 = vadd.f32 %v1088, %v1528
          %v1625 = vadd.f32 %v1090, %v1530
          %v1626 = vadd.f32 %v1091, %v1530
          %v1627 = vadd.f32 %v1093, %v1532
          %v1628 = vadd.f32 %v1094, %v1532
          %v1629 = vadd.f32 %v1096, %v1534
          %v1630 = vadd.f32 %v1097, %v1534
          %v1631 = vadd.f32 %v1099, %v1536
          %v1632 = vadd.f32 %v1100, %v1536
          %v1633 = vadd.f32 %v1102, %v1538
          %v1634 = vadd.f32 %v1103, %v1538
          %v1635 = vadd.f32 %v1105, %v1540
          %v1636 = vadd.f32 %v1106, %v1540
          %v1637 = vadd.f32 %v1108, %v1542
          %v1638 = vadd.f32 %v1109, %v1542
          %v1639 = vadd.f32 %v1111, %v1544
          %v1640 = vadd.f32 %v1112, %v1544
          %v1641 = vadd.f32 %v1114, %v1546
          %v1642 = vadd.f32 %v1115, %v1546
          %v1643 = vadd.f32 %v1117, %v1548
          %v1644 = vadd.f32 %v1118, %v1548
          %v1645 = vadd.f32 %v1120, %v1550
          %v1646 = vadd.f32 %v1121, %v1550
          %v1647 = vadd.f32 %v1123, %v1552
          %v1648 = vadd.f32 %v1124, %v1552
          %v1649 = vadd.f32 %v1126, %v1554
          %v1650 = vadd.f32 %v1127, %v1554
          %v1651 = vadd.f32 %v1129, %v1556
          %v1652 = vadd.f32 %v1130, %v1556
          %v1653 = vadd.f32 %v1132, %v1558
          %v1654 = vadd.f32 %v1133, %v1558
          %v1655 = vadd.f32 %v1135, %v1560
          %v1656 = vadd.f32 %v1136, %v1560
          %v1657 = vadd.f32 %v1138, %v1562
          %v1658 = vadd.f32 %v1139, %v1562
          %v1659 = vadd.f32 %v1141, %v1564
          %v1660 = vadd.f32 %v1142, %v1564
          %v1661 = vadd.f32 %v1144, %v1566
          %v1662 = vadd.f32 %v1145, %v1566
          %v1663 = vadd.f32 %v1147, %v1568
          %v1664 = vadd.f32 %v1148, %v1568
          %v1665 = vadd.f32 %v1150, %v1570
          %v1666 = vadd.f32 %v1151, %v1570
          %1731 = vrot.lane.b32.xlu0 %v1603, 32
          %v1732 = vpop.permute.xlu0 %1731
          %1733 = vrot.lane.b32.xlu0 %v1604, 32
          %v1734 = vpop.permute.xlu0 %1733
          %1735 = vrot.lane.b32.xlu0 %v1605, 32
          %v1736 = vpop.permute.xlu0 %1735
          %1737 = vrot.lane.b32.xlu0 %v1606, 32
          %v1738 = vpop.permute.xlu0 %1737
          %1739 = vrot.lane.b32.xlu0 %v1607, 32
          %v1740 = vpop.permute.xlu0 %1739
          %1741 = vrot.lane.b32.xlu0 %v1608, 32
          %v1742 = vpop.permute.xlu0 %1741
          %1743 = vrot.lane.b32.xlu0 %v1609, 32
          %v1744 = vpop.permute.xlu0 %1743
          %1745 = vrot.lane.b32.xlu0 %v1610, 32
          %v1746 = vpop.permute.xlu0 %1745
          %1747 = vrot.lane.b32.xlu0 %v1611, 32
          %v1748 = vpop.permute.xlu0 %1747
          %1749 = vrot.lane.b32.xlu0 %v1612, 32
          %v1750 = vpop.permute.xlu0 %1749
          %1751 = vrot.lane.b32.xlu0 %v1613, 32
          %v1752 = vpop.permute.xlu0 %1751
          %1753 = vrot.lane.b32.xlu0 %v1614, 32
          %v1754 = vpop.permute.xlu0 %1753
          %1755 = vrot.lane.b32.xlu0 %v1615, 32
          %v1756 = vpop.permute.xlu0 %1755
          %1757 = vrot.lane.b32.xlu0 %v1616, 32
          %v1758 = vpop.permute.xlu0 %1757
          %1759 = vrot.lane.b32.xlu0 %v1617, 32
          %v1760 = vpop.permute.xlu0 %1759
          %1761 = vrot.lane.b32.xlu0 %v1618, 32
          %v1762 = vpop.permute.xlu0 %1761
          %1763 = vrot.lane.b32.xlu0 %v1619, 32
          %v1764 = vpop.permute.xlu0 %1763
          %1765 = vrot.lane.b32.xlu0 %v1620, 32
          %v1766 = vpop.permute.xlu0 %1765
          %1767 = vrot.lane.b32.xlu0 %v1621, 32
          %v1768 = vpop.permute.xlu0 %1767
          %1769 = vrot.lane.b32.xlu0 %v1622, 32
          %v1770 = vpop.permute.xlu0 %1769
          %1771 = vrot.lane.b32.xlu0 %v1623, 32
          %v1772 = vpop.permute.xlu0 %1771
          %1773 = vrot.lane.b32.xlu0 %v1624, 32
          %v1774 = vpop.permute.xlu0 %1773
          %1775 = vrot.lane.b32.xlu0 %v1625, 32
          %v1776 = vpop.permute.xlu0 %1775
          %1777 = vrot.lane.b32.xlu0 %v1626, 32
          %v1778 = vpop.permute.xlu0 %1777
          %1779 = vrot.lane.b32.xlu0 %v1627, 32
          %v1780 = vpop.permute.xlu0 %1779
          %1781 = vrot.lane.b32.xlu0 %v1628, 32
          %v1782 = vpop.permute.xlu0 %1781
          %1783 = vrot.lane.b32.xlu0 %v1629, 32
          %v1784 = vpop.permute.xlu0 %1783
          %1785 = vrot.lane.b32.xlu0 %v1630, 32
          %v1786 = vpop.permute.xlu0 %1785
          %1787 = vrot.lane.b32.xlu0 %v1631, 32
          %v1788 = vpop.permute.xlu0 %1787
          %1789 = vrot.lane.b32.xlu0 %v1632, 32
          %v1790 = vpop.permute.xlu0 %1789
          %1791 = vrot.lane.b32.xlu0 %v1633, 32
          %v1792 = vpop.permute.xlu0 %1791
          %1793 = vrot.lane.b32.xlu0 %v1634, 32
          %v1794 = vpop.permute.xlu0 %1793
          %1795 = vrot.lane.b32.xlu0 %v1635, 32
          %v1796 = vpop.permute.xlu0 %1795
          %1797 = vrot.lane.b32.xlu0 %v1636, 32
          %v1798 = vpop.permute.xlu0 %1797
          %1799 = vrot.lane.b32.xlu0 %v1637, 32
          %v1800 = vpop.permute.xlu0 %1799
          %1801 = vrot.lane.b32.xlu0 %v1638, 32
          %v1802 = vpop.permute.xlu0 %1801
          %1803 = vrot.lane.b32.xlu0 %v1639, 32
          %v1804 = vpop.permute.xlu0 %1803
          %1805 = vrot.lane.b32.xlu0 %v1640, 32
          %v1806 = vpop.permute.xlu0 %1805
          %1807 = vrot.lane.b32.xlu0 %v1641, 32
          %v1808 = vpop.permute.xlu0 %1807
          %1809 = vrot.lane.b32.xlu0 %v1642, 32
          %v1810 = vpop.permute.xlu0 %1809
          %1811 = vrot.lane.b32.xlu0 %v1643, 32
          %v1812 = vpop.permute.xlu0 %1811
          %1813 = vrot.lane.b32.xlu0 %v1644, 32
          %v1814 = vpop.permute.xlu0 %1813
          %1815 = vrot.lane.b32.xlu0 %v1645, 32
          %v1816 = vpop.permute.xlu0 %1815
          %1817 = vrot.lane.b32.xlu0 %v1646, 32
          %v1818 = vpop.permute.xlu0 %1817
          %1819 = vrot.lane.b32.xlu0 %v1647, 32
          %v1820 = vpop.permute.xlu0 %1819
          %1821 = vrot.lane.b32.xlu0 %v1648, 32
          %v1822 = vpop.permute.xlu0 %1821
          %1823 = vrot.lane.b32.xlu0 %v1649, 32
          %v1824 = vpop.permute.xlu0 %1823
          %1825 = vrot.lane.b32.xlu0 %v1650, 32
          %v1826 = vpop.permute.xlu0 %1825
          %1827 = vrot.lane.b32.xlu0 %v1651, 32
          %v1828 = vpop.permute.xlu0 %1827
          %1829 = vrot.lane.b32.xlu0 %v1652, 32
          %v1830 = vpop.permute.xlu0 %1829
          %1831 = vrot.lane.b32.xlu0 %v1653, 32
          %v1832 = vpop.permute.xlu0 %1831
          %1833 = vrot.lane.b32.xlu0 %v1654, 32
          %v1834 = vpop.permute.xlu0 %1833
          %1835 = vrot.lane.b32.xlu0 %v1655, 32
          %v1836 = vpop.permute.xlu0 %1835
          %1837 = vrot.lane.b32.xlu0 %v1656, 32
          %v1838 = vpop.permute.xlu0 %1837
          %1839 = vrot.lane.b32.xlu0 %v1657, 32
          %v1840 = vpop.permute.xlu0 %1839
          %1841 = vrot.lane.b32.xlu0 %v1658, 32
          %v1842 = vpop.permute.xlu0 %1841
          %1843 = vrot.lane.b32.xlu0 %v1659, 32
          %v1844 = vpop.permute.xlu0 %1843
          %1845 = vrot.lane.b32.xlu0 %v1660, 32
          %v1846 = vpop.permute.xlu0 %1845
          %1847 = vrot.lane.b32.xlu0 %v1661, 32
          %v1848 = vpop.permute.xlu0 %1847
          %1849 = vrot.lane.b32.xlu0 %v1662, 32
          %v1850 = vpop.permute.xlu0 %1849
          %1851 = vrot.lane.b32.xlu0 %v1663, 32
          %v1852 = vpop.permute.xlu0 %1851
          %1853 = vrot.lane.b32.xlu0 %v1664, 32
          %v1854 = vpop.permute.xlu0 %1853
          %1855 = vrot.lane.b32.xlu0 %v1665, 32
          %v1856 = vpop.permute.xlu0 %1855
          %1857 = vrot.lane.b32.xlu0 %v1666, 32
          %v1858 = vpop.permute.xlu0 %1857
          %v1859 = vsel %vm478, %v1732, %v1734
          %v1860 = vsel %vm478, %v1736, %v1738
          %v1861 = vsel %vm478, %v1740, %v1742
          %v1862 = vsel %vm478, %v1744, %v1746
          %v1863 = vsel %vm478, %v1748, %v1750
          %v1864 = vsel %vm478, %v1752, %v1754
          %v1865 = vsel %vm478, %v1756, %v1758
          %v1866 = vsel %vm478, %v1760, %v1762
          %v1867 = vsel %vm478, %v1764, %v1766
          %v1868 = vsel %vm478, %v1768, %v1770
          %v1869 = vsel %vm478, %v1772, %v1774
          %v1870 = vsel %vm478, %v1776, %v1778
          %v1871 = vsel %vm478, %v1780, %v1782
          %v1872 = vsel %vm478, %v1784, %v1786
          %v1873 = vsel %vm478, %v1788, %v1790
          %v1874 = vsel %vm478, %v1792, %v1794
          %v1875 = vsel %vm478, %v1796, %v1798
          %v1876 = vsel %vm478, %v1800, %v1802
          %v1877 = vsel %vm478, %v1804, %v1806
          %v1878 = vsel %vm478, %v1808, %v1810
          %v1879 = vsel %vm478, %v1812, %v1814
          %v1880 = vsel %vm478, %v1816, %v1818
          %v1881 = vsel %vm478, %v1820, %v1822
          %v1882 = vsel %vm478, %v1824, %v1826
          %v1883 = vsel %vm478, %v1828, %v1830
          %v1884 = vsel %vm478, %v1832, %v1834
          %v1885 = vsel %vm478, %v1836, %v1838
          %v1886 = vsel %vm478, %v1840, %v1842
          %v1887 = vsel %vm478, %v1844, %v1846
          %v1888 = vsel %vm478, %v1848, %v1850
          %v1889 = vsel %vm478, %v1852, %v1854
          %v1890 = vsel %vm478, %v1856, %v1858
          %vm1923 = vcmask 785408
          %1924 = vst.msk [vmem:[#allocation3] sm:$0xff] %vm1923, %v1859
          %1925 = vst.msk [vmem:[#allocation3 + $0x10] sm:$0xff] %vm1923, %v1860
          %1926 = vst.msk [vmem:[#allocation3 + $0x20] sm:$0xff] %vm1923, %v1861
          %1927 = vst.msk [vmem:[#allocation3 + $0x30] sm:$0xff] %vm1923, %v1862
          %1928 = vst.msk [vmem:[#allocation3 + $0x40] sm:$0xff] %vm1923, %v1863
          %1929 = vst.msk [vmem:[#allocation3 + $0x50] sm:$0xff] %vm1923, %v1864
          %1930 = vst.msk [vmem:[#allocation3 + $0x60] sm:$0xff] %vm1923, %v1865
          %1931 = vst.msk [vmem:[#allocation3 + $0x70] sm:$0xff] %vm1923, %v1866
          %1932 = vst.msk [vmem:[#allocation3 + $0x80] sm:$0xff] %vm1923, %v1867
          %1933 = vst.msk [vmem:[#allocation3 + $0x90] sm:$0xff] %vm1923, %v1868
          %1934 = vst.msk [vmem:[#allocation3 + $0xa0] sm:$0xff] %vm1923, %v1869
          %1935 = vst.msk [vmem:[#allocation3 + $0xb0] sm:$0xff] %vm1923, %v1870
          %1936 = vst.msk [vmem:[#allocation3 + $0xc0] sm:$0xff] %vm1923, %v1871
          %1937 = vst.msk [vmem:[#allocation3 + $0xd0] sm:$0xff] %vm1923, %v1872
          %1938 = vst.msk [vmem:[#allocation3 + $0xe0] sm:$0xff] %vm1923, %v1873
          %1939 = vst.msk [vmem:[#allocation3 + $0xf0] sm:$0xff] %vm1923, %v1874
          %1940 = vst.msk [vmem:[#allocation3 + $0x100] sm:$0xff] %vm1923, %v1875
          %1941 = vst.msk [vmem:[#allocation3 + $0x110] sm:$0xff] %vm1923, %v1876
          %1942 = vst.msk [vmem:[#allocation3 + $0x120] sm:$0xff] %vm1923, %v1877
          %1943 = vst.msk [vmem:[#allocation3 + $0x130] sm:$0xff] %vm1923, %v1878
          %1944 = vst.msk [vmem:[#allocation3 + $0x140] sm:$0xff] %vm1923, %v1879
          %1945 = vst.msk [vmem:[#allocation3 + $0x150] sm:$0xff] %vm1923, %v1880
          %1946 = vst.msk [vmem:[#allocation3 + $0x160] sm:$0xff] %vm1923, %v1881
          %1947 = vst.msk [vmem:[#allocation3 + $0x170] sm:$0xff] %vm1923, %v1882
          %1948 = vst.msk [vmem:[#allocation3 + $0x180] sm:$0xff] %vm1923, %v1883
          %1949 = vst.msk [vmem:[#allocation3 + $0x190] sm:$0xff] %vm1923, %v1884
          %1950 = vst.msk [vmem:[#allocation3 + $0x1a0] sm:$0xff] %vm1923, %v1885
          %1951 = vst.msk [vmem:[#allocation3 + $0x1b0] sm:$0xff] %vm1923, %v1886
          %1952 = vst.msk [vmem:[#allocation3 + $0x1c0] sm:$0xff] %vm1923, %v1887
          %1953 = vst.msk [vmem:[#allocation3 + $0x1d0] sm:$0xff] %vm1923, %v1888
          %1954 = vst.msk [vmem:[#allocation3 + $0x1e0] sm:$0xff] %vm1923, %v1889
          %1955 = vst.msk [vmem:[#allocation3 + $0x1f0] sm:$0xff] %vm1923, %v1890
          %2020 = vrot.lane.b32.xlu0 %v1058, 32
          %v2021 = vpop.permute.xlu0 %2020
          %2022 = vrot.lane.b32.xlu0 %v1059, 32
          %v2023 = vpop.permute.xlu0 %2022
          %2024 = vrot.lane.b32.xlu0 %v1061, 32
          %v2025 = vpop.permute.xlu0 %2024
          %2026 = vrot.lane.b32.xlu0 %v1062, 32
          %v2027 = vpop.permute.xlu0 %2026
          %2028 = vrot.lane.b32.xlu0 %v1064, 32
          %v2029 = vpop.permute.xlu0 %2028
          %2030 = vrot.lane.b32.xlu0 %v1065, 32
          %v2031 = vpop.permute.xlu0 %2030
          %2032 = vrot.lane.b32.xlu0 %v1067, 32
          %v2033 = vpop.permute.xlu0 %2032
          %2034 = vrot.lane.b32.xlu0 %v1068, 32
          %v2035 = vpop.permute.xlu0 %2034
          %2036 = vrot.lane.b32.xlu0 %v1070, 32
          %v2037 = vpop.permute.xlu0 %2036
          %2038 = vrot.lane.b32.xlu0 %v1071, 32
          %v2039 = vpop.permute.xlu0 %2038
          %2040 = vrot.lane.b32.xlu0 %v1073, 32
          %v2041 = vpop.permute.xlu0 %2040
          %2042 = vrot.lane.b32.xlu0 %v1074, 32
          %v2043 = vpop.permute.xlu0 %2042
          %2044 = vrot.lane.b32.xlu0 %v1076, 32
          %v2045 = vpop.permute.xlu0 %2044
          %2046 = vrot.lane.b32.xlu0 %v1077, 32
          %v2047 = vpop.permute.xlu0 %2046
          %2048 = vrot.lane.b32.xlu0 %v1079, 32
          %v2049 = vpop.permute.xlu0 %2048
          %2050 = vrot.lane.b32.xlu0 %v1080, 32
          %v2051 = vpop.permute.xlu0 %2050
          %2052 = vrot.lane.b32.xlu0 %v1082, 32
          %v2053 = vpop.permute.xlu0 %2052
          %2054 = vrot.lane.b32.xlu0 %v1083, 32
          %v2055 = vpop.permute.xlu0 %2054
          %2056 = vrot.lane.b32.xlu0 %v1085, 32
          %v2057 = vpop.permute.xlu0 %2056
          %2058 = vrot.lane.b32.xlu0 %v1086, 32
          %v2059 = vpop.permute.xlu0 %2058
          %2060 = vrot.lane.b32.xlu0 %v1088, 32
          %v2061 = vpop.permute.xlu0 %2060
          %2062 = vrot.lane.b32.xlu0 %v1089, 32
          %v2063 = vpop.permute.xlu0 %2062
          %2064 = vrot.lane.b32.xlu0 %v1091, 32
          %v2065 = vpop.permute.xlu0 %2064
          %2066 = vrot.lane.b32.xlu0 %v1092, 32
          %v2067 = vpop.permute.xlu0 %2066
          %2068 = vrot.lane.b32.xlu0 %v1094, 32
          %v2069 = vpop.permute.xlu0 %2068
          %2070 = vrot.lane.b32.xlu0 %v1095, 32
          %v2071 = vpop.permute.xlu0 %2070
          %2072 = vrot.lane.b32.xlu0 %v1097, 32
          %v2073 = vpop.permute.xlu0 %2072
          %2074 = vrot.lane.b32.xlu0 %v1098, 32
          %v2075 = vpop.permute.xlu0 %2074
          %2076 = vrot.lane.b32.xlu0 %v1100, 32
          %v2077 = vpop.permute.xlu0 %2076
          %2078 = vrot.lane.b32.xlu0 %v1101, 32
          %v2079 = vpop.permute.xlu0 %2078
          %2080 = vrot.lane.b32.xlu0 %v1103, 32
          %v2081 = vpop.permute.xlu0 %2080
          %2082 = vrot.lane.b32.xlu0 %v1104, 32
          %v2083 = vpop.permute.xlu0 %2082
          %2084 = vrot.lane.b32.xlu0 %v1106, 32
          %v2085 = vpop.permute.xlu0 %2084
          %2086 = vrot.lane.b32.xlu0 %v1107, 32
          %v2087 = vpop.permute.xlu0 %2086
          %2088 = vrot.lane.b32.xlu0 %v1109, 32
          %v2089 = vpop.permute.xlu0 %2088
          %2090 = vrot.lane.b32.xlu0 %v1110, 32
          %v2091 = vpop.permute.xlu0 %2090
          %2092 = vrot.lane.b32.xlu0 %v1112, 32
          %v2093 = vpop.permute.xlu0 %2092
          %2094 = vrot.lane.b32.xlu0 %v1113, 32
          %v2095 = vpop.permute.xlu0 %2094
          %2096 = vrot.lane.b32.xlu0 %v1115, 32
          %v2097 = vpop.permute.xlu0 %2096
          %2098 = vrot.lane.b32.xlu0 %v1116, 32
          %v2099 = vpop.permute.xlu0 %2098
          %2100 = vrot.lane.b32.xlu0 %v1118, 32
          %v2101 = vpop.permute.xlu0 %2100
          %2102 = vrot.lane.b32.xlu0 %v1119, 32
          %v2103 = vpop.permute.xlu0 %2102
          %2104 = vrot.lane.b32.xlu0 %v1121, 32
          %v2105 = vpop.permute.xlu0 %2104
          %2106 = vrot.lane.b32.xlu0 %v1122, 32
          %v2107 = vpop.permute.xlu0 %2106
          %2108 = vrot.lane.b32.xlu0 %v1124, 32
          %v2109 = vpop.permute.xlu0 %2108
          %2110 = vrot.lane.b32.xlu0 %v1125, 32
          %v2111 = vpop.permute.xlu0 %2110
          %2112 = vrot.lane.b32.xlu0 %v1127, 32
          %v2113 = vpop.permute.xlu0 %2112
          %2114 = vrot.lane.b32.xlu0 %v1128, 32
          %v2115 = vpop.permute.xlu0 %2114
          %2116 = vrot.lane.b32.xlu0 %v1130, 32
          %v2117 = vpop.permute.xlu0 %2116
          %2118 = vrot.lane.b32.xlu0 %v1131, 32
          %v2119 = vpop.permute.xlu0 %2118
          %2120 = vrot.lane.b32.xlu0 %v1133, 32
          %v2121 = vpop.permute.xlu0 %2120
          %2122 = vrot.lane.b32.xlu0 %v1134, 32
          %v2123 = vpop.permute.xlu0 %2122
          %2124 = vrot.lane.b32.xlu0 %v1136, 32
          %v2125 = vpop.permute.xlu0 %2124
          %2126 = vrot.lane.b32.xlu0 %v1137, 32
          %v2127 = vpop.permute.xlu0 %2126
          %2128 = vrot.lane.b32.xlu0 %v1139, 32
          %v2129 = vpop.permute.xlu0 %2128
          %2130 = vrot.lane.b32.xlu0 %v1140, 32
          %v2131 = vpop.permute.xlu0 %2130
          %2132 = vrot.lane.b32.xlu0 %v1142, 32
          %v2133 = vpop.permute.xlu0 %2132
          %2134 = vrot.lane.b32.xlu0 %v1143, 32
          %v2135 = vpop.permute.xlu0 %2134
          %2136 = vrot.lane.b32.xlu0 %v1145, 32
          %v2137 = vpop.permute.xlu0 %2136
          %2138 = vrot.lane.b32.xlu0 %v1146, 32
          %v2139 = vpop.permute.xlu0 %2138
          %2140 = vrot.lane.b32.xlu0 %v1148, 32
          %v2141 = vpop.permute.xlu0 %2140
          %2142 = vrot.lane.b32.xlu0 %v1149, 32
          %v2143 = vpop.permute.xlu0 %2142
          %2144 = vrot.lane.b32.xlu0 %v1151, 32
          %v2145 = vpop.permute.xlu0 %2144
          %2146 = vrot.lane.b32.xlu0 %v1152, 32
          %v2147 = vpop.permute.xlu0 %2146
          %v2148 = vsel %vm478, %v2021, %v2023
          %v2149 = vsel %vm478, %v2025, %v2027
          %v2150 = vsel %vm478, %v2029, %v2031
          %v2151 = vsel %vm478, %v2033, %v2035
          %v2152 = vsel %vm478, %v2037, %v2039
          %v2153 = vsel %vm478, %v2041, %v2043
          %v2154 = vsel %vm478, %v2045, %v2047
          %v2155 = vsel %vm478, %v2049, %v2051
          %v2156 = vsel %vm478, %v2053, %v2055
          %v2157 = vsel %vm478, %v2057, %v2059
          %v2158 = vsel %vm478, %v2061, %v2063
          %v2159 = vsel %vm478, %v2065, %v2067
          %v2160 = vsel %vm478, %v2069, %v2071
          %v2161 = vsel %vm478, %v2073, %v2075
          %v2162 = vsel %vm478, %v2077, %v2079
          %v2163 = vsel %vm478, %v2081, %v2083
          %v2164 = vsel %vm478, %v2085, %v2087
          %v2165 = vsel %vm478, %v2089, %v2091
          %v2166 = vsel %vm478, %v2093, %v2095
          %v2167 = vsel %vm478, %v2097, %v2099
          %v2168 = vsel %vm478, %v2101, %v2103
          %v2169 = vsel %vm478, %v2105, %v2107
          %v2170 = vsel %vm478, %v2109, %v2111
          %v2171 = vsel %vm478, %v2113, %v2115
          %v2172 = vsel %vm478, %v2117, %v2119
          %v2173 = vsel %vm478, %v2121, %v2123
          %v2174 = vsel %vm478, %v2125, %v2127
          %v2175 = vsel %vm478, %v2129, %v2131
          %v2176 = vsel %vm478, %v2133, %v2135
          %v2177 = vsel %vm478, %v2137, %v2139
          %v2178 = vsel %vm478, %v2141, %v2143
          %v2179 = vsel %vm478, %v2145, %v2147
          %vm2244 = vcmask 1048320
          %2245 = vst.msk [vmem:[#allocation3] sm:$0xff] %vm2244, %v2021
          %2246 = vst.msk [vmem:[#allocation3 + $0x8] sm:$0xff] %vm1411, %v2148
          %2247 = vst.msk [vmem:[#allocation3 + $0x10] sm:$0xff] %vm2244, %v2025
          %2248 = vst.msk [vmem:[#allocation3 + $0x18] sm:$0xff] %vm1411, %v2149
          %2249 = vst.msk [vmem:[#allocation3 + $0x20] sm:$0xff] %vm2244, %v2029
          %2250 = vst.msk [vmem:[#allocation3 + $0x28] sm:$0xff] %vm1411, %v2150
          %2251 = vst.msk [vmem:[#allocation3 + $0x30] sm:$0xff] %vm2244, %v2033
          %2252 = vst.msk [vmem:[#allocation3 + $0x38] sm:$0xff] %vm1411, %v2151
          %2253 = vst.msk [vmem:[#allocation3 + $0x40] sm:$0xff] %vm2244, %v2037
          %2254 = vst.msk [vmem:[#allocation3 + $0x48] sm:$0xff] %vm1411, %v2152
          %2255 = vst.msk [vmem:[#allocation3 + $0x50] sm:$0xff] %vm2244, %v2041
          %2256 = vst.msk [vmem:[#allocation3 + $0x58] sm:$0xff] %vm1411, %v2153
          %2257 = vst.msk [vmem:[#allocation3 + $0x60] sm:$0xff] %vm2244, %v2045
          %2258 = vst.msk [vmem:[#allocation3 + $0x68] sm:$0xff] %vm1411, %v2154
          %2259 = vst.msk [vmem:[#allocation3 + $0x70] sm:$0xff] %vm2244, %v2049
          %2260 = vst.msk [vmem:[#allocation3 + $0x78] sm:$0xff] %vm1411, %v2155
          %2261 = vst.msk [vmem:[#allocation3 + $0x80] sm:$0xff] %vm2244, %v2053
          %2262 = vst.msk [vmem:[#allocation3 + $0x88] sm:$0xff] %vm1411, %v2156
          %2263 = vst.msk [vmem:[#allocation3 + $0x90] sm:$0xff] %vm2244, %v2057
          %2264 = vst.msk [vmem:[#allocation3 + $0x98] sm:$0xff] %vm1411, %v2157
          %2265 = vst.msk [vmem:[#allocation3 + $0xa0] sm:$0xff] %vm2244, %v2061
          %2266 = vst.msk [vmem:[#allocation3 + $0xa8] sm:$0xff] %vm1411, %v2158
          %2267 = vst.msk [vmem:[#allocation3 + $0xb0] sm:$0xff] %vm2244, %v2065
          %2268 = vst.msk [vmem:[#allocation3 + $0xb8] sm:$0xff] %vm1411, %v2159
          %2269 = vst.msk [vmem:[#allocation3 + $0xc0] sm:$0xff] %vm2244, %v2069
          %2270 = vst.msk [vmem:[#allocation3 + $0xc8] sm:$0xff] %vm1411, %v2160
          %2271 = vst.msk [vmem:[#allocation3 + $0xd0] sm:$0xff] %vm2244, %v2073
          %2272 = vst.msk [vmem:[#allocation3 + $0xd8] sm:$0xff] %vm1411, %v2161
          %2273 = vst.msk [vmem:[#allocation3 + $0xe0] sm:$0xff] %vm2244, %v2077
          %2274 = vst.msk [vmem:[#allocation3 + $0xe8] sm:$0xff] %vm1411, %v2162
          %2275 = vst.msk [vmem:[#allocation3 + $0xf0] sm:$0xff] %vm2244, %v2081
          %2276 = vst.msk [vmem:[#allocation3 + $0xf8] sm:$0xff] %vm1411, %v2163
          %2277 = vst.msk [vmem:[#allocation3 + $0x100] sm:$0xff] %vm2244, %v2085
          %2278 = vst.msk [vmem:[#allocation3 + $0x108] sm:$0xff] %vm1411, %v2164
          %2279 = vst.msk [vmem:[#allocation3 + $0x110] sm:$0xff] %vm2244, %v2089
          %2280 = vst.msk [vmem:[#allocation3 + $0x118] sm:$0xff] %vm1411, %v2165
          %2281 = vst.msk [vmem:[#allocation3 + $0x120] sm:$0xff] %vm2244, %v2093
          %2282 = vst.msk [vmem:[#allocation3 + $0x128] sm:$0xff] %vm1411, %v2166
          %2283 = vst.msk [vmem:[#allocation3 + $0x130] sm:$0xff] %vm2244, %v2097
          %2284 = vst.msk [vmem:[#allocation3 + $0x138] sm:$0xff] %vm1411, %v2167
          %2285 = vst.msk [vmem:[#allocation3 + $0x140] sm:$0xff] %vm2244, %v2101
          %2286 = vst.msk [vmem:[#allocation3 + $0x148] sm:$0xff] %vm1411, %v2168
          %2287 = vst.msk [vmem:[#allocation3 + $0x150] sm:$0xff] %vm2244, %v2105
          %2288 = vst.msk [vmem:[#allocation3 + $0x158] sm:$0xff] %vm1411, %v2169
          %2289 = vst.msk [vmem:[#allocation3 + $0x160] sm:$0xff] %vm2244, %v2109
          %2290 = vst.msk [vmem:[#allocation3 + $0x168] sm:$0xff] %vm1411, %v2170
          %2291 = vst.msk [vmem:[#allocation3 + $0x170] sm:$0xff] %vm2244, %v2113
          %2292 = vst.msk [vmem:[#allocation3 + $0x178] sm:$0xff] %vm1411, %v2171
          %2293 = vst.msk [vmem:[#allocation3 + $0x180] sm:$0xff] %vm2244, %v2117
          %2294 = vst.msk [vmem:[#allocation3 + $0x188] sm:$0xff] %vm1411, %v2172
          %2295 = vst.msk [vmem:[#allocation3 + $0x190] sm:$0xff] %vm2244, %v2121
          %2296 = vst.msk [vmem:[#allocation3 + $0x198] sm:$0xff] %vm1411, %v2173
          %2297 = vst.msk [vmem:[#allocation3 + $0x1a0] sm:$0xff] %vm2244, %v2125
          %2298 = vst.msk [vmem:[#allocation3 + $0x1a8] sm:$0xff] %vm1411, %v2174
          %2299 = vst.msk [vmem:[#allocation3 + $0x1b0] sm:$0xff] %vm2244, %v2129
          %2300 = vst.msk [vmem:[#allocation3 + $0x1b8] sm:$0xff] %vm1411, %v2175
          %2301 = vst.msk [vmem:[#allocation3 + $0x1c0] sm:$0xff] %vm2244, %v2133
          %2302 = vst.msk [vmem:[#allocation3 + $0x1c8] sm:$0xff] %vm1411, %v2176
          %2303 = vst.msk [vmem:[#allocation3 + $0x1d0] sm:$0xff] %vm2244, %v2137
          %2304 = vst.msk [vmem:[#allocation3 + $0x1d8] sm:$0xff] %vm1411, %v2177
          %2305 = vst.msk [vmem:[#allocation3 + $0x1e0] sm:$0xff] %vm2244, %v2141
          %2306 = vst.msk [vmem:[#allocation3 + $0x1e8] sm:$0xff] %vm1411, %v2178
          %2307 = vst.msk [vmem:[#allocation3 + $0x1f0] sm:$0xff] %vm2244, %v2145
          %2308 = vst.msk [vmem:[#allocation3 + $0x1f8] sm:$0xff] %vm1411, %v2179
        $region97: #{tpu_custom_call.1} parent=80 // pred_fallthru
          _
        // Predicated region
        $region98: #{tpu_custom_call.1} parent=80 // pred_check
          %p2309 = pneg %p412
        $region99: #{tpu_custom_call.1} parent=80 // pred_check_branch
          %2311 = sbr.rel (%p2309) target = $region101
        $region100: #{tpu_custom_call.1} parent=80 // pred_region
          %2312 = vst [vmem:[#allocation4] sm:$0xff] 0.0
          %vm2313 = vcmask 523264
          %2314 = vst.msk [vmem:[#allocation4 + $0x8] sm:$0xff] %vm2313, 0.0
          %2315 = vst [vmem:[#allocation4 + $0x10] sm:$0xff] 0.0
          %2316 = vst.msk [vmem:[#allocation4 + $0x18] sm:$0xff] %vm2313, 0.0
          %2317 = vst [vmem:[#allocation4 + $0x20] sm:$0xff] 0.0
          %2318 = vst.msk [vmem:[#allocation4 + $0x28] sm:$0xff] %vm2313, 0.0
          %2319 = vst [vmem:[#allocation4 + $0x30] sm:$0xff] 0.0
          %2320 = vst.msk [vmem:[#allocation4 + $0x38] sm:$0xff] %vm2313, 0.0
          %2321 = vst [vmem:[#allocation4 + $0x40] sm:$0xff] 0.0
          %2322 = vst.msk [vmem:[#allocation4 + $0x48] sm:$0xff] %vm2313, 0.0
          %2323 = vst [vmem:[#allocation4 + $0x50] sm:$0xff] 0.0
          %2324 = vst.msk [vmem:[#allocation4 + $0x58] sm:$0xff] %vm2313, 0.0
          %2325 = vst [vmem:[#allocation4 + $0x60] sm:$0xff] 0.0
          %2326 = vst.msk [vmem:[#allocation4 + $0x68] sm:$0xff] %vm2313, 0.0
          %2327 = vst [vmem:[#allocation4 + $0x70] sm:$0xff] 0.0
          %2328 = vst.msk [vmem:[#allocation4 + $0x78] sm:$0xff] %vm2313, 0.0
          %2329 = vst [vmem:[#allocation4 + $0x80] sm:$0xff] 0.0
          %2330 = vst.msk [vmem:[#allocation4 + $0x88] sm:$0xff] %vm2313, 0.0
          %2331 = vst [vmem:[#allocation4 + $0x90] sm:$0xff] 0.0
          %2332 = vst.msk [vmem:[#allocation4 + $0x98] sm:$0xff] %vm2313, 0.0
          %2333 = vst [vmem:[#allocation4 + $0xa0] sm:$0xff] 0.0
          %2334 = vst.msk [vmem:[#allocation4 + $0xa8] sm:$0xff] %vm2313, 0.0
          %2335 = vst [vmem:[#allocation4 + $0xb0] sm:$0xff] 0.0
          %2336 = vst.msk [vmem:[#allocation4 + $0xb8] sm:$0xff] %vm2313, 0.0
          %2337 = vst [vmem:[#allocation4 + $0xc0] sm:$0xff] 0.0
          %2338 = vst.msk [vmem:[#allocation4 + $0xc8] sm:$0xff] %vm2313, 0.0
          %2339 = vst [vmem:[#allocation4 + $0xd0] sm:$0xff] 0.0
          %2340 = vst.msk [vmem:[#allocation4 + $0xd8] sm:$0xff] %vm2313, 0.0
          %2341 = vst [vmem:[#allocation4 + $0xe0] sm:$0xff] 0.0
          %2342 = vst.msk [vmem:[#allocation4 + $0xe8] sm:$0xff] %vm2313, 0.0
          %2343 = vst [vmem:[#allocation4 + $0xf0] sm:$0xff] 0.0
          %2344 = vst.msk [vmem:[#allocation4 + $0xf8] sm:$0xff] %vm2313, 0.0
        $region101: #{tpu_custom_call.1} parent=80 // pred_fallthru
          _
        %s2345 = smul.u32 %s406, 256
        %s2346 = smul.u32 %s27, 128
        %s2347 = sadd.s32 %s2345, %s2346
        %v2348 = vld [vmem:[#allocation4] sm:$0xff]
        %v2349 = vld [vmem:[#allocation4 + $0x8] sm:$0xff]
        %v2350 = vld [vmem:[#allocation4 + $0x10] sm:$0xff]
        %v2351 = vld [vmem:[#allocation4 + $0x18] sm:$0xff]
        %v2352 = vld [vmem:[#allocation4 + $0x20] sm:$0xff]
        %v2353 = vld [vmem:[#allocation4 + $0x28] sm:$0xff]
        %v2354 = vld [vmem:[#allocation4 + $0x30] sm:$0xff]
        %v2355 = vld [vmem:[#allocation4 + $0x38] sm:$0xff]
        %v2356 = vld [vmem:[#allocation4 + $0x40] sm:$0xff]
        %v2357 = vld [vmem:[#allocation4 + $0x48] sm:$0xff]
        %v2358 = vld [vmem:[#allocation4 + $0x50] sm:$0xff]
        %v2359 = vld [vmem:[#allocation4 + $0x58] sm:$0xff]
        %v2360 = vld [vmem:[#allocation4 + $0x60] sm:$0xff]
        %v2361 = vld [vmem:[#allocation4 + $0x68] sm:$0xff]
        %v2362 = vld [vmem:[#allocation4 + $0x70] sm:$0xff]
        %v2363 = vld [vmem:[#allocation4 + $0x78] sm:$0xff]
        %v2364 = vld [vmem:[#allocation4 + $0x80] sm:$0xff]
        %v2365 = vld [vmem:[#allocation4 + $0x88] sm:$0xff]
        %v2366 = vld [vmem:[#allocation4 + $0x90] sm:$0xff]
        %v2367 = vld [vmem:[#allocation4 + $0x98] sm:$0xff]
        %v2368 = vld [vmem:[#allocation4 + $0xa0] sm:$0xff]
        %v2369 = vld [vmem:[#allocation4 + $0xa8] sm:$0xff]
        %v2370 = vld [vmem:[#allocation4 + $0xb0] sm:$0xff]
        %v2371 = vld [vmem:[#allocation4 + $0xb8] sm:$0xff]
        %v2372 = vld [vmem:[#allocation4 + $0xc0] sm:$0xff]
        %v2373 = vld [vmem:[#allocation4 + $0xc8] sm:$0xff]
        %v2374 = vld [vmem:[#allocation4 + $0xd0] sm:$0xff]
        %v2375 = vld [vmem:[#allocation4 + $0xd8] sm:$0xff]
        %v2376 = vld [vmem:[#allocation4 + $0xe0] sm:$0xff]
        %v2377 = vld [vmem:[#allocation4 + $0xe8] sm:$0xff]
        %v2378 = vld [vmem:[#allocation4 + $0xf0] sm:$0xff]
        %v2379 = vld [vmem:[#allocation4 + $0xf8] sm:$0xff]
        %v2380 = vld [vmem:[%s367] sm:$0xf]
        %v2381 = vld [vmem:[%s367 + $0x4] sm:$0xf]
        %v2382 = vld [vmem:[%s367 + $0x8] sm:$0xf]
        %v2383 = vld [vmem:[%s367 + $0xc] sm:$0xf]
        %v2384 = vld [vmem:[%s367 + $0x10] sm:$0xf]
        %v2385 = vld [vmem:[%s367 + $0x14] sm:$0xf]
        %v2386 = vld [vmem:[%s367 + $0x18] sm:$0xf]
        %v2387 = vld [vmem:[%s367 + $0x1c] sm:$0xf]
        %v2388 = vld [vmem:[%s367 + $0x20] sm:$0xf]
        %v2389 = vld [vmem:[%s367 + $0x24] sm:$0xf]
        %v2390 = vld [vmem:[%s367 + $0x28] sm:$0xf]
        %v2391 = vld [vmem:[%s367 + $0x2c] sm:$0xf]
        %v2392 = vld [vmem:[%s367 + $0x30] sm:$0xf]
        %v2393 = vld [vmem:[%s367 + $0x34] sm:$0xf]
        %v2394 = vld [vmem:[%s367 + $0x38] sm:$0xf]
        %v2395 = vld [vmem:[%s367 + $0x3c] sm:$0xf]
        %s2396 = sshra.s32 %s2347, 4
        %s2397 = sand.u32 %s2347, 15
        %s2398 = smul.u32 %s2396, 2
        %s2399 = smul.addr %s2398, 8
        %s2400 = scalar_lea.vmem [#allocation2], %s2399
        %v2401 = vld [vmem:[%s2400] sm:$0xff]
        %v2402 = vld [vmem:[%s2400 + $0x8] sm:$0xff]
        %v2403 = vld [vmem:[%s2400 + $0x10] sm:$0xff]
        %v2404 = vld [vmem:[%s2400 + $0x18] sm:$0xff]
        %v2405 = vld [vmem:[%s2400 + $0x20] sm:$0xff]
        %v2406 = vld [vmem:[%s2400 + $0x28] sm:$0xff]
        %v2407 = vld [vmem:[%s2400 + $0x30] sm:$0xff]
        %v2408 = vld [vmem:[%s2400 + $0x38] sm:$0xff]
        %v2409 = vld [vmem:[%s2400 + $0x40] sm:$0xff]
        %v2410 = vld [vmem:[%s2400 + $0x48] sm:$0xff]
        %v2411 = vld [vmem:[%s2400 + $0x50] sm:$0xff]
        %v2412 = vld [vmem:[%s2400 + $0x58] sm:$0xff]
        %v2413 = vld [vmem:[%s2400 + $0x60] sm:$0xff]
        %v2414 = vld [vmem:[%s2400 + $0x68] sm:$0xff]
        %v2415 = vld [vmem:[%s2400 + $0x70] sm:$0xff]
        %v2416 = vld [vmem:[%s2400 + $0x78] sm:$0xff]
        %v2433 = vunpack.c.l.b16 %v2380
        %v2434 = vunpack.c.l.b16 %v2381
        %v2435 = vunpack.c.l.b16 %v2382
        %v2436 = vunpack.c.l.b16 %v2383
        %v2437 = vunpack.c.l.b16 %v2384
        %v2438 = vunpack.c.l.b16 %v2385
        %v2439 = vunpack.c.l.b16 %v2386
        %v2440 = vunpack.c.l.b16 %v2387
        %v2441 = vunpack.c.l.b16 %v2388
        %v2442 = vunpack.c.l.b16 %v2389
        %v2443 = vunpack.c.l.b16 %v2390
        %v2444 = vunpack.c.l.b16 %v2391
        %v2445 = vunpack.c.l.b16 %v2392
        %v2446 = vunpack.c.l.b16 %v2393
        %v2447 = vunpack.c.l.b16 %v2394
        %v2448 = vunpack.c.l.b16 %v2395
        %v2449 = vpack.c.b16 %v2434, %v2433
        %v2450 = vpack.c.b16 %v2436, %v2435
        %v2451 = vpack.c.b16 %v2438, %v2437
        %v2452 = vpack.c.b16 %v2440, %v2439
        %v2453 = vpack.c.b16 %v2442, %v2441
        %v2454 = vpack.c.b16 %v2444, %v2443
        %v2455 = vpack.c.b16 %v2446, %v2445
        %v2456 = vpack.c.b16 %v2448, %v2447
        %2465 = vmatprep.subr.bf16.mxu0 %v2402
        %2466 = vmatpush1.bf16.msra.mxu0 %v2401
        %2467 = vmatprep.subr.bf16.mxu0 %v2404
        %2468 = vmatpush1.bf16.msra.mxu0 %v2403
        %2469 = vmatprep.subr.bf16.mxu0 %v2406
        %2470 = vmatpush1.bf16.msra.mxu0 %v2405
        %2471 = vmatprep.subr.bf16.mxu0 %v2408
        %2472 = vmatpush1.bf16.msra.mxu0 %v2407
        %2473 = vmatprep.subr.bf16.mxu0 %v2410
        %2474 = vmatpush1.bf16.msra.mxu0 %v2409
        %2475 = vmatprep.subr.bf16.mxu0 %v2412
        %2476 = vmatpush1.bf16.msra.mxu0 %v2411
        %2477 = vmatprep.subr.bf16.mxu0 %v2414
        %2478 = vmatpush1.bf16.msra.mxu0 %v2413
        %2479 = vmatprep.subr.bf16.mxu0 %v2416
        %2480 = vmatpush1.bf16.msra.mxu0 %v2415
        %2481 = vmatprep.subr.bf16.mxu0 0
        %2482 = vmatpush1.bf16.msra.mxu0 0
        %2483 = vmatprep.subr.bf16.mxu0 0
        %2484 = vmatpush1.bf16.msra.mxu0 0
        %2485 = vmatprep.subr.bf16.mxu0 0
        %2486 = vmatpush1.bf16.msra.mxu0 0
        %2487 = vmatprep.subr.bf16.mxu0 0
        %2488 = vmatpush1.bf16.msra.mxu0 0
        %2489 = vmatprep.subr.bf16.mxu0 0
        %2490 = vmatpush1.bf16.msra.mxu0 0
        %2491 = vmatprep.subr.bf16.mxu0 0
        %2492 = vmatpush1.bf16.msra.mxu0 0
        %2493 = vmatprep.subr.bf16.mxu0 0
        %2494 = vmatpush1.bf16.msra.mxu0 0
        %2495 = vmatprep.subr.bf16.mxu0 0
        %2496 = vmatpush1.bf16.msra.mxu0 0
        %2497 = vmatprep.mubr.bf16.mxu0 0
        %2498 = vmatmul.mubr.bf16.gmra.mrb[0].mxu0 %v2449
        %v2499 = vpop.f32.mrb[0].mxu0
        %v2500 = vadd.f32 0.0, %v2499
        %v2501 = vpop.f32.mrb[0].mxu0
        %v2502 = vadd.f32 0.0, %v2501
        %v2503 = vpop.f32.mrb[0].mxu0
        %v2504 = vadd.f32 0.0, %v2503
        %v2505 = vpop.f32.mrb[0].mxu0
        %v2506 = vadd.f32 0.0, %v2505
        %2507 = vmatprep.mubr.bf16.mxu0 0
        %2508 = vmatmul.mubr.bf16.gmra.mrb[0].mxu0 %v2450
        %v2509 = vpop.f32.mrb[0].mxu0
        %v2510 = vadd.f32 0.0, %v2509
        %v2511 = vpop.f32.mrb[0].mxu0
        %v2512 = vadd.f32 0.0, %v2511
        %v2513 = vpop.f32.mrb[0].mxu0
        %v2514 = vadd.f32 0.0, %v2513
        %v2515 = vpop.f32.mrb[0].mxu0
        %v2516 = vadd.f32 0.0, %v2515
        %2517 = vmatprep.mubr.bf16.mxu0 0
        %2518 = vmatmul.mubr.bf16.gmra.mrb[0].mxu0 %v2451
        %v2519 = vpop.f32.mrb[0].mxu0
        %v2520 = vadd.f32 0.0, %v2519
        %v2521 = vpop.f32.mrb[0].mxu0
        %v2522 = vadd.f32 0.0, %v2521
        %v2523 = vpop.f32.mrb[0].mxu0
        %v2524 = vadd.f32 0.0, %v2523
        %v2525 = vpop.f32.mrb[0].mxu0
        %v2526 = vadd.f32 0.0, %v2525
        %2527 = vmatprep.mubr.bf16.mxu0 0
        %2528 = vmatmul.mubr.bf16.gmra.mrb[0].mxu0 %v2452
        %v2529 = vpop.f32.mrb[0].mxu0
        %v2530 = vadd.f32 0.0, %v2529
        %v2531 = vpop.f32.mrb[0].mxu0
        %v2532 = vadd.f32 0.0, %v2531
        %v2533 = vpop.f32.mrb[0].mxu0
        %v2534 = vadd.f32 0.0, %v2533
        %v2535 = vpop.f32.mrb[0].mxu0
        %v2536 = vadd.f32 0.0, %v2535
        %2537 = vmatprep.mubr.bf16.mxu0 0
        %2538 = vmatmul.mubr.bf16.gmra.mrb[0].mxu0 %v2453
        %v2539 = vpop.f32.mrb[0].mxu0
        %v2540 = vadd.f32 0.0, %v2539
        %v2541 = vpop.f32.mrb[0].mxu0
        %v2542 = vadd.f32 0.0, %v2541
        %v2543 = vpop.f32.mrb[0].mxu0
        %v2544 = vadd.f32 0.0, %v2543
        %v2545 = vpop.f32.mrb[0].mxu0
        %v2546 = vadd.f32 0.0, %v2545
        %2547 = vmatprep.mubr.bf16.mxu0 0
        %2548 = vmatmul.mubr.bf16.gmra.mrb[0].mxu0 %v2454
        %v2549 = vpop.f32.mrb[0].mxu0
        %v2550 = vadd.f32 0.0, %v2549
        %v2551 = vpop.f32.mrb[0].mxu0
        %v2552 = vadd.f32 0.0, %v2551
        %v2553 = vpop.f32.mrb[0].mxu0
        %v2554 = vadd.f32 0.0, %v2553
        %v2555 = vpop.f32.mrb[0].mxu0
        %v2556 = vadd.f32 0.0, %v2555
        %2557 = vmatprep.mubr.bf16.mxu0 0
        %2558 = vmatmul.mubr.bf16.gmra.mrb[0].mxu0 %v2455
        %v2559 = vpop.f32.mrb[0].mxu0
        %v2560 = vadd.f32 0.0, %v2559
        %v2561 = vpop.f32.mrb[0].mxu0
        %v2562 = vadd.f32 0.0, %v2561
        %v2563 = vpop.f32.mrb[0].mxu0
        %v2564 = vadd.f32 0.0, %v2563
        %v2565 = vpop.f32.mrb[0].mxu0
        %v2566 = vadd.f32 0.0, %v2565
        %2567 = vmatprep.mubr.bf16.mxu0 0
        %2568 = vmatmul.mubr.bf16.gmra.mrb[0].mxu0 %v2456
        %v2569 = vpop.f32.mrb[0].mxu0
        %v2570 = vadd.f32 0.0, %v2569
        %v2571 = vpop.f32.mrb[0].mxu0
        %v2572 = vadd.f32 0.0, %v2571
        %v2573 = vpop.f32.mrb[0].mxu0
        %v2574 = vadd.f32 0.0, %v2573
        %v2575 = vpop.f32.mrb[0].mxu0
        %v2576 = vadd.f32 0.0, %v2575
        %2577 = vdwg.mxu0
        %v2578 = vadd.f32 %v2348, %v2500
        %v2579 = vadd.f32 %v2349, %v2502
        %v2580 = vadd.f32 %v2350, %v2504
        %v2581 = vadd.f32 %v2351, %v2506
        %v2582 = vadd.f32 %v2352, %v2510
        %v2583 = vadd.f32 %v2353, %v2512
        %v2584 = vadd.f32 %v2354, %v2514
        %v2585 = vadd.f32 %v2355, %v2516
        %v2586 = vadd.f32 %v2356, %v2520
        %v2587 = vadd.f32 %v2357, %v2522
        %v2588 = vadd.f32 %v2358, %v2524
        %v2589 = vadd.f32 %v2359, %v2526
        %v2590 = vadd.f32 %v2360, %v2530
        %v2591 = vadd.f32 %v2361, %v2532
        %v2592 = vadd.f32 %v2362, %v2534
        %v2593 = vadd.f32 %v2363, %v2536
        %v2594 = vadd.f32 %v2364, %v2540
        %v2595 = vadd.f32 %v2365, %v2542
        %v2596 = vadd.f32 %v2366, %v2544
        %v2597 = vadd.f32 %v2367, %v2546
        %v2598 = vadd.f32 %v2368, %v2550
        %v2599 = vadd.f32 %v2369, %v2552
        %v2600 = vadd.f32 %v2370, %v2554
        %v2601 = vadd.f32 %v2371, %v2556
        %v2602 = vadd.f32 %v2372, %v2560
        %v2603 = vadd.f32 %v2373, %v2562
        %v2604 = vadd.f32 %v2374, %v2564
        %v2605 = vadd.f32 %v2375, %v2566
        %v2606 = vadd.f32 %v2376, %v2570
        %v2607 = vadd.f32 %v2377, %v2572
        %v2608 = vadd.f32 %v2378, %v2574
        %v2609 = vadd.f32 %v2379, %v2576
        %2610 = vst [vmem:[#allocation4] sm:$0xff] %v2578
        %vm2611 = vcmask 523264
        %2612 = vst.msk [vmem:[#allocation4 + $0x8] sm:$0xff] %vm2611, %v2579
        %2613 = vst [vmem:[#allocation4 + $0x10] sm:$0xff] %v2580
        %2614 = vst.msk [vmem:[#allocation4 + $0x18] sm:$0xff] %vm2611, %v2581
        %2615 = vst [vmem:[#allocation4 + $0x20] sm:$0xff] %v2582
        %2616 = vst.msk [vmem:[#allocation4 + $0x28] sm:$0xff] %vm2611, %v2583
        %2617 = vst [vmem:[#allocation4 + $0x30] sm:$0xff] %v2584
        %2618 = vst.msk [vmem:[#allocation4 + $0x38] sm:$0xff] %vm2611, %v2585
        %2619 = vst [vmem:[#allocation4 + $0x40] sm:$0xff] %v2586
        %2620 = vst.msk [vmem:[#allocation4 + $0x48] sm:$0xff] %vm2611, %v2587
        %2621 = vst [vmem:[#allocation4 + $0x50] sm:$0xff] %v2588
        %2622 = vst.msk [vmem:[#allocation4 + $0x58] sm:$0xff] %vm2611, %v2589
        %2623 = vst [vmem:[#allocation4 + $0x60] sm:$0xff] %v2590
        %2624 = vst.msk [vmem:[#allocation4 + $0x68] sm:$0xff] %vm2611, %v2591
        %2625 = vst [vmem:[#allocation4 + $0x70] sm:$0xff] %v2592
        %2626 = vst.msk [vmem:[#allocation4 + $0x78] sm:$0xff] %vm2611, %v2593
        %2627 = vst [vmem:[#allocation4 + $0x80] sm:$0xff] %v2594
        %2628 = vst.msk [vmem:[#allocation4 + $0x88] sm:$0xff] %vm2611, %v2595
        %2629 = vst [vmem:[#allocation4 + $0x90] sm:$0xff] %v2596
        %2630 = vst.msk [vmem:[#allocation4 + $0x98] sm:$0xff] %vm2611, %v2597
        %2631 = vst [vmem:[#allocation4 + $0xa0] sm:$0xff] %v2598
        %2632 = vst.msk [vmem:[#allocation4 + $0xa8] sm:$0xff] %vm2611, %v2599
        %2633 = vst [vmem:[#allocation4 + $0xb0] sm:$0xff] %v2600
        %2634 = vst.msk [vmem:[#allocation4 + $0xb8] sm:$0xff] %vm2611, %v2601
        %2635 = vst [vmem:[#allocation4 + $0xc0] sm:$0xff] %v2602
        %2636 = vst.msk [vmem:[#allocation4 + $0xc8] sm:$0xff] %vm2611, %v2603
        %2637 = vst [vmem:[#allocation4 + $0xd0] sm:$0xff] %v2604
        %2638 = vst.msk [vmem:[#allocation4 + $0xd8] sm:$0xff] %vm2611, %v2605
        %2639 = vst [vmem:[#allocation4 + $0xe0] sm:$0xff] %v2606
        %2640 = vst.msk [vmem:[#allocation4 + $0xe8] sm:$0xff] %vm2611, %v2607
        %2641 = vst [vmem:[#allocation4 + $0xf0] sm:$0xff] %v2608
        %2642 = vst.msk [vmem:[#allocation4 + $0xf8] sm:$0xff] %vm2611, %v2609
        %p2643 = scmp.eq.s32.totalorder %s27, 1
        // Predicated region
        $region102: #{tpu_custom_call.1} parent=80 // pred_check
          %p2644 = pneg %p2643
        $region103: #{tpu_custom_call.1} parent=80 // pred_check_branch
          %2646 = sbr.rel (%p2644) target = $region105
        $region104: #{tpu_custom_call.1} parent=80 // pred_region
          %s2647 = smul.u32 %s26, 128
          %s2648 = smul.u32 %s407, 256
          %s2649 = sadd.s32 %s2648, %s2647
          %v2650 = vld [vmem:[#allocation4] sm:$0xff]
          %v2651 = vld [vmem:[#allocation4 + $0x8] sm:$0xff]
          %v2652 = vld [vmem:[#allocation4 + $0x10] sm:$0xff]
          %v2653 = vld [vmem:[#allocation4 + $0x18] sm:$0xff]
          %v2654 = vld [vmem:[#allocation4 + $0x20] sm:$0xff]
          %v2655 = vld [vmem:[#allocation4 + $0x28] sm:$0xff]
          %v2656 = vld [vmem:[#allocation4 + $0x30] sm:$0xff]
          %v2657 = vld [vmem:[#allocation4 + $0x38] sm:$0xff]
          %v2658 = vld [vmem:[#allocation4 + $0x40] sm:$0xff]
          %v2659 = vld [vmem:[#allocation4 + $0x48] sm:$0xff]
          %v2660 = vld [vmem:[#allocation4 + $0x50] sm:$0xff]
          %v2661 = vld [vmem:[#allocation4 + $0x58] sm:$0xff]
          %v2662 = vld [vmem:[#allocation4 + $0x60] sm:$0xff]
          %v2663 = vld [vmem:[#allocation4 + $0x68] sm:$0xff]
          %v2664 = vld [vmem:[#allocation4 + $0x70] sm:$0xff]
          %v2665 = vld [vmem:[#allocation4 + $0x78] sm:$0xff]
          %v2666 = vld [vmem:[#allocation4 + $0x80] sm:$0xff]
          %v2667 = vld [vmem:[#allocation4 + $0x88] sm:$0xff]
          %v2668 = vld [vmem:[#allocation4 + $0x90] sm:$0xff]
          %v2669 = vld [vmem:[#allocation4 + $0x98] sm:$0xff]
          %v2670 = vld [vmem:[#allocation4 + $0xa0] sm:$0xff]
          %v2671 = vld [vmem:[#allocation4 + $0xa8] sm:$0xff]
          %v2672 = vld [vmem:[#allocation4 + $0xb0] sm:$0xff]
          %v2673 = vld [vmem:[#allocation4 + $0xb8] sm:$0xff]
          %v2674 = vld [vmem:[#allocation4 + $0xc0] sm:$0xff]
          %v2675 = vld [vmem:[#allocation4 + $0xc8] sm:$0xff]
          %v2676 = vld [vmem:[#allocation4 + $0xd0] sm:$0xff]
          %v2677 = vld [vmem:[#allocation4 + $0xd8] sm:$0xff]
          %v2678 = vld [vmem:[#allocation4 + $0xe0] sm:$0xff]
          %v2679 = vld [vmem:[#allocation4 + $0xe8] sm:$0xff]
          %v2680 = vld [vmem:[#allocation4 + $0xf0] sm:$0xff]
          %v2681 = vld [vmem:[#allocation4 + $0xf8] sm:$0xff]
          %v2682 = vpack.c.bf16 %v2652, %v2650
          %v2683 = vpack.c.bf16 %v2653, %v2651
          %v2684 = vpack.c.bf16 %v2656, %v2654
          %v2685 = vpack.c.bf16 %v2657, %v2655
          %v2686 = vpack.c.bf16 %v2660, %v2658
          %v2687 = vpack.c.bf16 %v2661, %v2659
          %v2688 = vpack.c.bf16 %v2664, %v2662
          %v2689 = vpack.c.bf16 %v2665, %v2663
          %v2690 = vpack.c.bf16 %v2668, %v2666
          %v2691 = vpack.c.bf16 %v2669, %v2667
          %v2692 = vpack.c.bf16 %v2672, %v2670
          %v2693 = vpack.c.bf16 %v2673, %v2671
          %v2694 = vpack.c.bf16 %v2676, %v2674
          %v2695 = vpack.c.bf16 %v2677, %v2675
          %v2696 = vpack.c.bf16 %v2680, %v2678
          %v2697 = vpack.c.bf16 %v2681, %v2679
          %s2698 = sshra.s32 %s2649, 4
          %s2699 = sand.u32 %s2649, 15
          %s2700 = smul.u32 %s2698, 2
          %s2701 = smul.addr %s2700, 8
          %s2702 = scalar_lea.vmem [#allocation2], %s2701
          %2703 = vst [vmem:[%s2702] sm:$0xff] %v2682
          %2704 = vst.msk [vmem:[%s2702 + $0x8] sm:$0xff] %vm2611, %v2683
          %2705 = vst [vmem:[%s2702 + $0x10] sm:$0xff] %v2684
          %2706 = vst.msk [vmem:[%s2702 + $0x18] sm:$0xff] %vm2611, %v2685
          %2707 = vst [vmem:[%s2702 + $0x20] sm:$0xff] %v2686
          %2708 = vst.msk [vmem:[%s2702 + $0x28] sm:$0xff] %vm2611, %v2687
          %2709 = vst [vmem:[%s2702 + $0x30] sm:$0xff] %v2688
          %2710 = vst.msk [vmem:[%s2702 + $0x38] sm:$0xff] %vm2611, %v2689
          %2711 = vst [vmem:[%s2702 + $0x40] sm:$0xff] %v2690
          %2712 = vst.msk [vmem:[%s2702 + $0x48] sm:$0xff] %vm2611, %v2691
          %2713 = vst [vmem:[%s2702 + $0x50] sm:$0xff] %v2692
          %2714 = vst.msk [vmem:[%s2702 + $0x58] sm:$0xff] %vm2611, %v2693
          %2715 = vst [vmem:[%s2702 + $0x60] sm:$0xff] %v2694
          %2716 = vst.msk [vmem:[%s2702 + $0x68] sm:$0xff] %vm2611, %v2695
          %2717 = vst [vmem:[%s2702 + $0x70] sm:$0xff] %v2696
          %2718 = vst.msk [vmem:[%s2702 + $0x78] sm:$0xff] %vm2611, %v2697
          %p2719 = scmp.lt.s32.totalorder %s25, 2
          // Predicated region
          $region106: #{tpu_custom_call.1} parent=104 // pred_check
            %p2720 = pneg %p2719
          $region107: #{tpu_custom_call.1} parent=104 // pred_check_branch
            %2722 = sbr.rel (%p2720) target = $region109
          $region108: #{tpu_custom_call.1} parent=104 // pred_region
            %s2723 = sshra.s32 %s2647, 3
            %s2724 = sand.u32 %s2647, 7
            %s2725 = smul.u32 %s2723, 2
            %s2726 = smul.addr %s2725, 8
            %s2727 = scalar_lea.vmem [#allocation3], %s2726
            %v2728 = vld [vmem:[%s2727] sm:$0xff]
            %v2729 = vld [vmem:[%s2727 + $0x10] sm:$0xff]
            %v2730 = vld [vmem:[%s2727 + $0x20] sm:$0xff]
            %v2731 = vld [vmem:[%s2727 + $0x30] sm:$0xff]
            %v2732 = vld [vmem:[%s2727 + $0x40] sm:$0xff]
            %v2733 = vld [vmem:[%s2727 + $0x50] sm:$0xff]
            %v2734 = vld [vmem:[%s2727 + $0x60] sm:$0xff]
            %v2735 = vld [vmem:[%s2727 + $0x70] sm:$0xff]
            %v2736 = vld [vmem:[%s2727 + $0x80] sm:$0xff]
            %v2737 = vld [vmem:[%s2727 + $0x90] sm:$0xff]
            %v2738 = vld [vmem:[%s2727 + $0xa0] sm:$0xff]
            %v2739 = vld [vmem:[%s2727 + $0xb0] sm:$0xff]
            %v2740 = vld [vmem:[%s2727 + $0xc0] sm:$0xff]
            %v2741 = vld [vmem:[%s2727 + $0xd0] sm:$0xff]
            %v2742 = vld [vmem:[%s2727 + $0xe0] sm:$0xff]
            %v2743 = vld [vmem:[%s2727 + $0xf0] sm:$0xff]
            %v2744 = vld [vmem:[#allocation4] sm:$0xff]
            %v2745 = vld [vmem:[#allocation4 + $0x10] sm:$0xff]
            %v2746 = vld [vmem:[#allocation4 + $0x20] sm:$0xff]
            %v2747 = vld [vmem:[#allocation4 + $0x30] sm:$0xff]
            %v2748 = vld [vmem:[#allocation4 + $0x40] sm:$0xff]
            %v2749 = vld [vmem:[#allocation4 + $0x50] sm:$0xff]
            %v2750 = vld [vmem:[#allocation4 + $0x60] sm:$0xff]
            %v2751 = vld [vmem:[#allocation4 + $0x70] sm:$0xff]
            %v2752 = vld [vmem:[#allocation4 + $0x80] sm:$0xff]
            %v2753 = vld [vmem:[#allocation4 + $0x90] sm:$0xff]
            %v2754 = vld [vmem:[#allocation4 + $0xa0] sm:$0xff]
            %v2755 = vld [vmem:[#allocation4 + $0xb0] sm:$0xff]
            %v2756 = vld [vmem:[#allocation4 + $0xc0] sm:$0xff]
            %v2757 = vld [vmem:[#allocation4 + $0xd0] sm:$0xff]
            %v2758 = vld [vmem:[#allocation4 + $0xe0] sm:$0xff]
            %v2759 = vld [vmem:[#allocation4 + $0xf0] sm:$0xff]
            %v2760 = vadd.f32 %v2728, %v2744
            %v2761 = vadd.f32 %v2729, %v2745
            %v2762 = vadd.f32 %v2730, %v2746
            %v2763 = vadd.f32 %v2731, %v2747
            %v2764 = vadd.f32 %v2732, %v2748
            %v2765 = vadd.f32 %v2733, %v2749
            %v2766 = vadd.f32 %v2734, %v2750
            %v2767 = vadd.f32 %v2735, %v2751
            %v2768 = vadd.f32 %v2736, %v2752
            %v2769 = vadd.f32 %v2737, %v2753
            %v2770 = vadd.f32 %v2738, %v2754
            %v2771 = vadd.f32 %v2739, %v2755
            %v2772 = vadd.f32 %v2740, %v2756
            %v2773 = vadd.f32 %v2741, %v2757
            %v2774 = vadd.f32 %v2742, %v2758
            %v2775 = vadd.f32 %v2743, %v2759
            %vm2776 = vcmask 785408
            %2777 = vst.msk [vmem:[%s2727] sm:$0xff] %vm2776, %v2760
            %2778 = vst.msk [vmem:[%s2727 + $0x10] sm:$0xff] %vm2776, %v2761
            %2779 = vst.msk [vmem:[%s2727 + $0x20] sm:$0xff] %vm2776, %v2762
            %2780 = vst.msk [vmem:[%s2727 + $0x30] sm:$0xff] %vm2776, %v2763
            %2781 = vst.msk [vmem:[%s2727 + $0x40] sm:$0xff] %vm2776, %v2764
            %2782 = vst.msk [vmem:[%s2727 + $0x50] sm:$0xff] %vm2776, %v2765
            %2783 = vst.msk [vmem:[%s2727 + $0x60] sm:$0xff] %vm2776, %v2766
            %2784 = vst.msk [vmem:[%s2727 + $0x70] sm:$0xff] %vm2776, %v2767
            %2785 = vst.msk [vmem:[%s2727 + $0x80] sm:$0xff] %vm2776, %v2768
            %2786 = vst.msk [vmem:[%s2727 + $0x90] sm:$0xff] %vm2776, %v2769
            %2787 = vst.msk [vmem:[%s2727 + $0xa0] sm:$0xff] %vm2776, %v2770
            %2788 = vst.msk [vmem:[%s2727 + $0xb0] sm:$0xff] %vm2776, %v2771
            %2789 = vst.msk [vmem:[%s2727 + $0xc0] sm:$0xff] %vm2776, %v2772
            %2790 = vst.msk [vmem:[%s2727 + $0xd0] sm:$0xff] %vm2776, %v2773
            %2791 = vst.msk [vmem:[%s2727 + $0xe0] sm:$0xff] %vm2776, %v2774
            %2792 = vst.msk [vmem:[%s2727 + $0xf0] sm:$0xff] %vm2776, %v2775
          $region109: #{tpu_custom_call.1} parent=104 // pred_fallthru
            _
          %p2793 = scmp.lt.s32.totalorder %s25, 4
          // Predicated region
          $region110: #{tpu_custom_call.1} parent=104 // pred_check
            %p2794 = pneg %p2793
          $region111: #{tpu_custom_call.1} parent=104 // pred_check_branch
            %2796 = sbr.rel (%p2794) target = $region113
          $region112: #{tpu_custom_call.1} parent=104 // pred_region
            %s2797 = sshra.s32 %s2647, 3
            %s2798 = sand.u32 %s2647, 7
            %s2799 = smul.u32 %s2797, 2
            %s2800 = smul.addr %s2799, 8
            %s2801 = scalar_lea.vmem [#allocation3], %s2800
            %v2802 = vld [vmem:[%s2801] sm:$0xff]
            %v2803 = vld [vmem:[%s2801 + $0x8] sm:$0xff]
            %v2804 = vld [vmem:[%s2801 + $0x10] sm:$0xff]
            %v2805 = vld [vmem:[%s2801 + $0x18] sm:$0xff]
            %v2806 = vld [vmem:[%s2801 + $0x20] sm:$0xff]
            %v2807 = vld [vmem:[%s2801 + $0x28] sm:$0xff]
            %v2808 = vld [vmem:[%s2801 + $0x30] sm:$0xff]
            %v2809 = vld [vmem:[%s2801 + $0x38] sm:$0xff]
            %v2810 = vld [vmem:[%s2801 + $0x40] sm:$0xff]
            %v2811 = vld [vmem:[%s2801 + $0x48] sm:$0xff]
            %v2812 = vld [vmem:[%s2801 + $0x50] sm:$0xff]
            %v2813 = vld [vmem:[%s2801 + $0x58] sm:$0xff]
            %v2814 = vld [vmem:[%s2801 + $0x60] sm:$0xff]
            %v2815 = vld [vmem:[%s2801 + $0x68] sm:$0xff]
            %v2816 = vld [vmem:[%s2801 + $0x70] sm:$0xff]
            %v2817 = vld [vmem:[%s2801 + $0x78] sm:$0xff]
            %v2818 = vld [vmem:[%s2801 + $0x80] sm:$0xff]
            %v2819 = vld [vmem:[%s2801 + $0x88] sm:$0xff]
            %v2820 = vld [vmem:[%s2801 + $0x90] sm:$0xff]
            %v2821 = vld [vmem:[%s2801 + $0x98] sm:$0xff]
            %v2822 = vld [vmem:[%s2801 + $0xa0] sm:$0xff]
            %v2823 = vld [vmem:[%s2801 + $0xa8] sm:$0xff]
            %v2824 = vld [vmem:[%s2801 + $0xb0] sm:$0xff]
            %v2825 = vld [vmem:[%s2801 + $0xb8] sm:$0xff]
            %v2826 = vld [vmem:[%s2801 + $0xc0] sm:$0xff]
            %v2827 = vld [vmem:[%s2801 + $0xc8] sm:$0xff]
            %v2828 = vld [vmem:[%s2801 + $0xd0] sm:$0xff]
            %v2829 = vld [vmem:[%s2801 + $0xd8] sm:$0xff]
            %v2830 = vld [vmem:[%s2801 + $0xe0] sm:$0xff]
            %v2831 = vld [vmem:[%s2801 + $0xe8] sm:$0xff]
            %v2832 = vld [vmem:[%s2801 + $0xf0] sm:$0xff]
            %v2833 = vld [vmem:[%s2801 + $0xf8] sm:$0xff]
            %v2834 = vld [vmem:[#allocation4] sm:$0xff]
            %v2835 = vld [vmem:[#allocation4 + $0x8] sm:$0xff]
            %v2836 = vld [vmem:[#allocation4 + $0x10] sm:$0xff]
            %v2837 = vld [vmem:[#allocation4 + $0x18] sm:$0xff]
            %v2838 = vld [vmem:[#allocation4 + $0x20] sm:$0xff]
            %v2839 = vld [vmem:[#allocation4 + $0x28] sm:$0xff]
            %v2840 = vld [vmem:[#allocation4 + $0x30] sm:$0xff]
            %v2841 = vld [vmem:[#allocation4 + $0x38] sm:$0xff]
            %v2842 = vld [vmem:[#allocation4 + $0x40] sm:$0xff]
            %v2843 = vld [vmem:[#allocation4 + $0x48] sm:$0xff]
            %v2844 = vld [vmem:[#allocation4 + $0x50] sm:$0xff]
            %v2845 = vld [vmem:[#allocation4 + $0x58] sm:$0xff]
            %v2846 = vld [vmem:[#allocation4 + $0x60] sm:$0xff]
            %v2847 = vld [vmem:[#allocation4 + $0x68] sm:$0xff]
            %v2848 = vld [vmem:[#allocation4 + $0x70] sm:$0xff]
            %v2849 = vld [vmem:[#allocation4 + $0x78] sm:$0xff]
            %v2850 = vld [vmem:[#allocation4 + $0x80] sm:$0xff]
            %v2851 = vld [vmem:[#allocation4 + $0x88] sm:$0xff]
            %v2852 = vld [vmem:[#allocation4 + $0x90] sm:$0xff]
            %v2853 = vld [vmem:[#allocation4 + $0x98] sm:$0xff]
            %v2854 = vld [vmem:[#allocation4 + $0xa0] sm:$0xff]
            %v2855 = vld [vmem:[#allocation4 + $0xa8] sm:$0xff]
            %v2856 = vld [vmem:[#allocation4 + $0xb0] sm:$0xff]
            %v2857 = vld [vmem:[#allocation4 + $0xb8] sm:$0xff]
            %v2858 = vld [vmem:[#allocation4 + $0xc0] sm:$0xff]
            %v2859 = vld [vmem:[#allocation4 + $0xc8] sm:$0xff]
            %v2860 = vld [vmem:[#allocation4 + $0xd0] sm:$0xff]
            %v2861 = vld [vmem:[#allocation4 + $0xd8] sm:$0xff]
            %v2862 = vld [vmem:[#allocation4 + $0xe0] sm:$0xff]
            %v2863 = vld [vmem:[#allocation4 + $0xe8] sm:$0xff]
            %v2864 = vld [vmem:[#allocation4 + $0xf0] sm:$0xff]
            %v2865 = vld [vmem:[#allocation4 + $0xf8] sm:$0xff]
            %v2866 = vadd.f32 %v2802, %v2834
            %v2867 = vadd.f32 %v2803, %v2835
            %v2868 = vadd.f32 %v2804, %v2836
            %v2869 = vadd.f32 %v2805, %v2837
            %v2870 = vadd.f32 %v2806, %v2838
            %v2871 = vadd.f32 %v2807, %v2839
            %v2872 = vadd.f32 %v2808, %v2840
            %v2873 = vadd.f32 %v2809, %v2841
            %v2874 = vadd.f32 %v2810, %v2842
            %v2875 = vadd.f32 %v2811, %v2843
            %v2876 = vadd.f32 %v2812, %v2844
            %v2877 = vadd.f32 %v2813, %v2845
            %v2878 = vadd.f32 %v2814, %v2846
            %v2879 = vadd.f32 %v2815, %v2847
            %v2880 = vadd.f32 %v2816, %v2848
            %v2881 = vadd.f32 %v2817, %v2849
            %v2882 = vadd.f32 %v2818, %v2850
            %v2883 = vadd.f32 %v2819, %v2851
            %v2884 = vadd.f32 %v2820, %v2852
            %v2885 = vadd.f32 %v2821, %v2853
            %v2886 = vadd.f32 %v2822, %v2854
            %v2887 = vadd.f32 %v2823, %v2855
            %v2888 = vadd.f32 %v2824, %v2856
            %v2889 = vadd.f32 %v2825, %v2857
            %v2890 = vadd.f32 %v2826, %v2858
            %v2891 = vadd.f32 %v2827, %v2859
            %v2892 = vadd.f32 %v2828, %v2860
            %v2893 = vadd.f32 %v2829, %v2861
            %v2894 = vadd.f32 %v2830, %v2862
            %v2895 = vadd.f32 %v2831, %v2863
            %v2896 = vadd.f32 %v2832, %v2864
            %v2897 = vadd.f32 %v2833, %v2865
            %vm2898 = vcmask 1048320
            %2899 = vst.msk [vmem:[%s2801] sm:$0xff] %vm2898, %v2866
            %2900 = vst.msk [vmem:[%s2801 + $0x8] sm:$0xff] %vm2611, %v2867
            %2901 = vst.msk [vmem:[%s2801 + $0x10] sm:$0xff] %vm2898, %v2868
            %2902 = vst.msk [vmem:[%s2801 + $0x18] sm:$0xff] %vm2611, %v2869
            %2903 = vst.msk [vmem:[%s2801 + $0x20] sm:$0xff] %vm2898, %v2870
            %2904 = vst.msk [vmem:[%s2801 + $0x28] sm:$0xff] %vm2611, %v2871
            %2905 = vst.msk [vmem:[%s2801 + $0x30] sm:$0xff] %vm2898, %v2872
            %2906 = vst.msk [vmem:[%s2801 + $0x38] sm:$0xff] %vm2611, %v2873
            %2907 = vst.msk [vmem:[%s2801 + $0x40] sm:$0xff] %vm2898, %v2874
            %2908 = vst.msk [vmem:[%s2801 + $0x48] sm:$0xff] %vm2611, %v2875
            %2909 = vst.msk [vmem:[%s2801 + $0x50] sm:$0xff] %vm2898, %v2876
            %2910 = vst.msk [vmem:[%s2801 + $0x58] sm:$0xff] %vm2611, %v2877
            %2911 = vst.msk [vmem:[%s2801 + $0x60] sm:$0xff] %vm2898, %v2878
            %2912 = vst.msk [vmem:[%s2801 + $0x68] sm:$0xff] %vm2611, %v2879
            %2913 = vst.msk [vmem:[%s2801 + $0x70] sm:$0xff] %vm2898, %v2880
            %2914 = vst.msk [vmem:[%s2801 + $0x78] sm:$0xff] %vm2611, %v2881
            %2915 = vst.msk [vmem:[%s2801 + $0x80] sm:$0xff] %vm2898, %v2882
            %2916 = vst.msk [vmem:[%s2801 + $0x88] sm:$0xff] %vm2611, %v2883
            %2917 = vst.msk [vmem:[%s2801 + $0x90] sm:$0xff] %vm2898, %v2884
            %2918 = vst.msk [vmem:[%s2801 + $0x98] sm:$0xff] %vm2611, %v2885
            %2919 = vst.msk [vmem:[%s2801 + $0xa0] sm:$0xff] %vm2898, %v2886
            %2920 = vst.msk [vmem:[%s2801 + $0xa8] sm:$0xff] %vm2611, %v2887
            %2921 = vst.msk [vmem:[%s2801 + $0xb0] sm:$0xff] %vm2898, %v2888
            %2922 = vst.msk [vmem:[%s2801 + $0xb8] sm:$0xff] %vm2611, %v2889
            %2923 = vst.msk [vmem:[%s2801 + $0xc0] sm:$0xff] %vm2898, %v2890
            %2924 = vst.msk [vmem:[%s2801 + $0xc8] sm:$0xff] %vm2611, %v2891
            %2925 = vst.msk [vmem:[%s2801 + $0xd0] sm:$0xff] %vm2898, %v2892
            %2926 = vst.msk [vmem:[%s2801 + $0xd8] sm:$0xff] %vm2611, %v2893
            %2927 = vst.msk [vmem:[%s2801 + $0xe0] sm:$0xff] %vm2898, %v2894
            %2928 = vst.msk [vmem:[%s2801 + $0xe8] sm:$0xff] %vm2611, %v2895
            %2929 = vst.msk [vmem:[%s2801 + $0xf0] sm:$0xff] %vm2898, %v2896
            %2930 = vst.msk [vmem:[%s2801 + $0xf8] sm:$0xff] %vm2611, %v2897
          $region113: #{tpu_custom_call.1} parent=104 // pred_fallthru
            _
          %p2931 = scmp.eq.s32.totalorder %s25, 3
          // Predicated region
          $region114: #{tpu_custom_call.1} parent=104 // pred_check
            %p2932 = pneg %p2931
          $region115: #{tpu_custom_call.1} parent=104 // pred_check_branch
            %2934 = sbr.rel (%p2932) target = $region117
          $region116: #{tpu_custom_call.1} parent=104 // pred_region
            %s2935 = sshra.s32 %s2647, 3
            %s2936 = sand.u32 %s2647, 7
            %s2937 = smul.u32 %s2935, 2
            %s2938 = smul.addr %s2937, 8
            %s2939 = scalar_lea.vmem [#allocation3], %s2938
            %v2940 = vld [vmem:[%s2939] sm:$0xff]
            %v2941 = vld [vmem:[%s2939 + $0x10] sm:$0xff]
            %v2942 = vld [vmem:[%s2939 + $0x20] sm:$0xff]
            %v2943 = vld [vmem:[%s2939 + $0x30] sm:$0xff]
            %v2944 = vld [vmem:[%s2939 + $0x40] sm:$0xff]
            %v2945 = vld [vmem:[%s2939 + $0x50] sm:$0xff]
            %v2946 = vld [vmem:[%s2939 + $0x60] sm:$0xff]
            %v2947 = vld [vmem:[%s2939 + $0x70] sm:$0xff]
            %v2948 = vld [vmem:[%s2939 + $0x80] sm:$0xff]
            %v2949 = vld [vmem:[%s2939 + $0x90] sm:$0xff]
            %v2950 = vld [vmem:[%s2939 + $0xa0] sm:$0xff]
            %v2951 = vld [vmem:[%s2939 + $0xb0] sm:$0xff]
            %v2952 = vld [vmem:[%s2939 + $0xc0] sm:$0xff]
            %v2953 = vld [vmem:[%s2939 + $0xd0] sm:$0xff]
            %v2954 = vld [vmem:[%s2939 + $0xe0] sm:$0xff]
            %v2955 = vld [vmem:[%s2939 + $0xf0] sm:$0xff]
            %v2956 = vmul.f32 %v2940, 0.33333334
            %v2957 = vmul.f32 %v2941, 0.33333334
            %v2958 = vmul.f32 %v2942, 0.33333334
            %v2959 = vmul.f32 %v2943, 0.33333334
            %v2960 = vmul.f32 %v2944, 0.33333334
            %v2961 = vmul.f32 %v2945, 0.33333334
            %v2962 = vmul.f32 %v2946, 0.33333334
            %v2963 = vmul.f32 %v2947, 0.33333334
            %v2964 = vmul.f32 %v2948, 0.33333334
            %v2965 = vmul.f32 %v2949, 0.33333334
            %v2966 = vmul.f32 %v2950, 0.33333334
            %v2967 = vmul.f32 %v2951, 0.33333334
            %v2968 = vmul.f32 %v2952, 0.33333334
            %v2969 = vmul.f32 %v2953, 0.33333334
            %v2970 = vmul.f32 %v2954, 0.33333334
            %v2971 = vmul.f32 %v2955, 0.33333334
            %v2972 = vld [vmem:[%s2939 + $0x8] sm:$0xff]
            %v2973 = vld [vmem:[%s2939 + $0x18] sm:$0xff]
            %v2974 = vld [vmem:[%s2939 + $0x28] sm:$0xff]
            %v2975 = vld [vmem:[%s2939 + $0x38] sm:$0xff]
            %v2976 = vld [vmem:[%s2939 + $0x48] sm:$0xff]
            %v2977 = vld [vmem:[%s2939 + $0x58] sm:$0xff]
            %v2978 = vld [vmem:[%s2939 + $0x68] sm:$0xff]
            %v2979 = vld [vmem:[%s2939 + $0x78] sm:$0xff]
            %v2980 = vld [vmem:[%s2939 + $0x88] sm:$0xff]
            %v2981 = vld [vmem:[%s2939 + $0x98] sm:$0xff]
            %v2982 = vld [vmem:[%s2939 + $0xa8] sm:$0xff]
            %v2983 = vld [vmem:[%s2939 + $0xb8] sm:$0xff]
            %v2984 = vld [vmem:[%s2939 + $0xc8] sm:$0xff]
            %v2985 = vld [vmem:[%s2939 + $0xd8] sm:$0xff]
            %v2986 = vld [vmem:[%s2939 + $0xe8] sm:$0xff]
            %v2987 = vld [vmem:[%s2939 + $0xf8] sm:$0xff]
            %v2988 = vmul.f32 %v2940, 0.2
            %v2989 = vmul.f32 %v2972, 0.2
            %v2990 = vmul.f32 %v2941, 0.2
            %v2991 = vmul.f32 %v2973, 0.2
            %v2992 = vmul.f32 %v2942, 0.2
            %v2993 = vmul.f32 %v2974, 0.2
            %v2994 = vmul.f32 %v2943, 0.2
            %v2995 = vmul.f32 %v2975, 0.2
            %v2996 = vmul.f32 %v2944, 0.2
            %v2997 = vmul.f32 %v2976, 0.2
            %v2998 = vmul.f32 %v2945, 0.2
            %v2999 = vmul.f32 %v2977, 0.2
            %v3000 = vmul.f32 %v2946, 0.2
            %v3001 = vmul.f32 %v2978, 0.2
            %v3002 = vmul.f32 %v2947, 0.2
            %v3003 = vmul.f32 %v2979, 0.2
            %v3004 = vmul.f32 %v2948, 0.2
            %v3005 = vmul.f32 %v2980, 0.2
            %v3006 = vmul.f32 %v2949, 0.2
            %v3007 = vmul.f32 %v2981, 0.2
            %v3008 = vmul.f32 %v2950, 0.2
            %v3009 = vmul.f32 %v2982, 0.2
            %v3010 = vmul.f32 %v2951, 0.2
            %v3011 = vmul.f32 %v2983, 0.2
            %v3012 = vmul.f32 %v2952, 0.2
            %v3013 = vmul.f32 %v2984, 0.2
            %v3014 = vmul.f32 %v2953, 0.2
            %v3015 = vmul.f32 %v2985, 0.2
            %v3016 = vmul.f32 %v2954, 0.2
            %v3017 = vmul.f32 %v2986, 0.2
            %v3018 = vmul.f32 %v2955, 0.2
            %v3019 = vmul.f32 %v2987, 0.2
            %3052 = vrot.lane.b32.xlu0 %v2988, 32
            %v3053 = vpop.permute.xlu0 %3052
            %3054 = vrot.lane.b32.xlu0 %v2989, 32
            %v3055 = vpop.permute.xlu0 %3054
            %3056 = vrot.lane.b32.xlu0 %v2990, 32
            %v3057 = vpop.permute.xlu0 %3056
            %3058 = vrot.lane.b32.xlu0 %v2991, 32
            %v3059 = vpop.permute.xlu0 %3058
            %3060 = vrot.lane.b32.xlu0 %v2992, 32
            %v3061 = vpop.permute.xlu0 %3060
            %3062 = vrot.lane.b32.xlu0 %v2993, 32
            %v3063 = vpop.permute.xlu0 %3062
            %3064 = vrot.lane.b32.xlu0 %v2994, 32
            %v3065 = vpop.permute.xlu0 %3064
            %3066 = vrot.lane.b32.xlu0 %v2995, 32
            %v3067 = vpop.permute.xlu0 %3066
            %3068 = vrot.lane.b32.xlu0 %v2996, 32
            %v3069 = vpop.permute.xlu0 %3068
            %3070 = vrot.lane.b32.xlu0 %v2997, 32
            %v3071 = vpop.permute.xlu0 %3070
            %3072 = vrot.lane.b32.xlu0 %v2998, 32
            %v3073 = vpop.permute.xlu0 %3072
            %3074 = vrot.lane.b32.xlu0 %v2999, 32
            %v3075 = vpop.permute.xlu0 %3074
            %3076 = vrot.lane.b32.xlu0 %v3000, 32
            %v3077 = vpop.permute.xlu0 %3076
            %3078 = vrot.lane.b32.xlu0 %v3001, 32
            %v3079 = vpop.permute.xlu0 %3078
            %3080 = vrot.lane.b32.xlu0 %v3002, 32
            %v3081 = vpop.permute.xlu0 %3080
            %3082 = vrot.lane.b32.xlu0 %v3003, 32
            %v3083 = vpop.permute.xlu0 %3082
            %3084 = vrot.lane.b32.xlu0 %v3004, 32
            %v3085 = vpop.permute.xlu0 %3084
            %3086 = vrot.lane.b32.xlu0 %v3005, 32
            %v3087 = vpop.permute.xlu0 %3086
            %3088 = vrot.lane.b32.xlu0 %v3006, 32
            %v3089 = vpop.permute.xlu0 %3088
            %3090 = vrot.lane.b32.xlu0 %v3007, 32
            %v3091 = vpop.permute.xlu0 %3090
            %3092 = vrot.lane.b32.xlu0 %v3008, 32
            %v3093 = vpop.permute.xlu0 %3092
            %3094 = vrot.lane.b32.xlu0 %v3009, 32
            %v3095 = vpop.permute.xlu0 %3094
            %3096 = vrot.lane.b32.xlu0 %v3010, 32
            %v3097 = vpop.permute.xlu0 %3096
            %3098 = vrot.lane.b32.xlu0 %v3011, 32
            %v3099 = vpop.permute.xlu0 %3098
            %3100 = vrot.lane.b32.xlu0 %v3012, 32
            %v3101 = vpop.permute.xlu0 %3100
            %3102 = vrot.lane.b32.xlu0 %v3013, 32
            %v3103 = vpop.permute.xlu0 %3102
            %3104 = vrot.lane.b32.xlu0 %v3014, 32
            %v3105 = vpop.permute.xlu0 %3104
            %3106 = vrot.lane.b32.xlu0 %v3015, 32
            %v3107 = vpop.permute.xlu0 %3106
            %3108 = vrot.lane.b32.xlu0 %v3016, 32
            %v3109 = vpop.permute.xlu0 %3108
            %3110 = vrot.lane.b32.xlu0 %v3017, 32
            %v3111 = vpop.permute.xlu0 %3110
            %3112 = vrot.lane.b32.xlu0 %v3018, 32
            %v3113 = vpop.permute.xlu0 %3112
            %3114 = vrot.lane.b32.xlu0 %v3019, 32
            %v3115 = vpop.permute.xlu0 %3114
            %vm3116 = vcmask 261120
            %v3117 = vsel %vm3116, %v3053, %v3055
            %v3118 = vsel %vm3116, %v3057, %v3059
            %v3119 = vsel %vm3116, %v3061, %v3063
            %v3120 = vsel %vm3116, %v3065, %v3067
            %v3121 = vsel %vm3116, %v3069, %v3071
            %v3122 = vsel %vm3116, %v3073, %v3075
            %v3123 = vsel %vm3116, %v3077, %v3079
            %v3124 = vsel %vm3116, %v3081, %v3083
            %v3125 = vsel %vm3116, %v3085, %v3087
            %v3126 = vsel %vm3116, %v3089, %v3091
            %v3127 = vsel %vm3116, %v3093, %v3095
            %v3128 = vsel %vm3116, %v3097, %v3099
            %v3129 = vsel %vm3116, %v3101, %v3103
            %v3130 = vsel %vm3116, %v3105, %v3107
            %v3131 = vsel %vm3116, %v3109, %v3111
            %v3132 = vsel %vm3116, %v3113, %v3115
            %v3149 = vadd.f32 %v2956, %v3117
            %v3150 = vadd.f32 %v2957, %v3118
            %v3151 = vadd.f32 %v2958, %v3119
            %v3152 = vadd.f32 %v2959, %v3120
            %v3153 = vadd.f32 %v2960, %v3121
            %v3154 = vadd.f32 %v2961, %v3122
            %v3155 = vadd.f32 %v2962, %v3123
            %v3156 = vadd.f32 %v2963, %v3124
            %v3157 = vadd.f32 %v2964, %v3125
            %v3158 = vadd.f32 %v2965, %v3126
            %v3159 = vadd.f32 %v2966, %v3127
            %v3160 = vadd.f32 %v2967, %v3128
            %v3161 = vadd.f32 %v2968, %v3129
            %v3162 = vadd.f32 %v2969, %v3130
            %v3163 = vadd.f32 %v2970, %v3131
            %v3164 = vadd.f32 %v2971, %v3132
            %v3165 = vld [vmem:[#allocation9] sm:$0xff]
            %v3166 = vld [vmem:[#allocation9 + $0x8] sm:$0xff]
            %v3167 = vld [vmem:[#allocation9 + $0x10] sm:$0xff]
            %v3168 = vld [vmem:[#allocation9 + $0x18] sm:$0xff]
            %v3169 = vld [vmem:[#allocation9 + $0x20] sm:$0xff]
            %v3170 = vld [vmem:[#allocation9 + $0x28] sm:$0xff]
            %v3171 = vld [vmem:[#allocation9 + $0x30] sm:$0xff]
            %v3172 = vld [vmem:[#allocation9 + $0x38] sm:$0xff]
            %v3173 = vld [vmem:[#allocation9 + $0x40] sm:$0xff]
            %v3174 = vld [vmem:[#allocation9 + $0x48] sm:$0xff]
            %v3175 = vld [vmem:[#allocation9 + $0x50] sm:$0xff]
            %v3176 = vld [vmem:[#allocation9 + $0x58] sm:$0xff]
            %v3177 = vld [vmem:[%s5] sm:$0x1]
            %v3179 = vlaneseq
            %v3180 = vshrl.u32 %v3179, 7
            %v3181 = vsub.s32 0, %v3180
            %v3182 = vrot.slane %v3177, %v3181
            %vm3184 = vcmask 785408
            %v3186 = vsel %vm3184, %v3149, 0
            %v3189 = vsel %vm3184, %v3150, 0
            %v3192 = vsel %vm3184, %v3151, 0
            %v3195 = vsel %vm3184, %v3152, 0
            %v3198 = vsel %vm3184, %v3153, 0
            %v3201 = vsel %vm3184, %v3154, 0
            %v3204 = vsel %vm3184, %v3155, 0
            %v3207 = vsel %vm3184, %v3156, 0
            %v3210 = vsel %vm3184, %v3157, 0
            %v3213 = vsel %vm3184, %v3158, 0
            %v3216 = vsel %vm3184, %v3159, 0
            %v3219 = vsel %vm3184, %v3160, 0
            %v3222 = vsel %vm3184, %v3161, 0
            %v3225 = vsel %vm3184, %v3162, 0
            %v3228 = vsel %vm3184, %v3163, 0
            %v3231 = vsel %vm3184, %v3164, 0
            %3233 = vmatprep.subr.mxu0 0.0
            %3234 = vmatpush1.msra.mxu0 %v3165
            %3235 = vmatprep.subr.mxu0 0.0
            %3236 = vmatpush1.msra.mxu0 %v3166
            %3237 = vmatprep.subr.mxu0 0.0
            %3238 = vmatpush1.msra.mxu0 %v3167
            %3239 = vmatprep.subr.mxu0 0.0
            %3240 = vmatpush1.msra.mxu0 %v3168
            %3241 = vmatprep.subr.mxu0 0.0
            %3242 = vmatpush1.msra.mxu0 %v3169
            %3243 = vmatprep.subr.mxu0 0.0
            %3244 = vmatpush1.msra.mxu0 %v3170
            %3245 = vmatprep.subr.mxu0 0.0
            %3246 = vmatpush1.msra.mxu0 %v3171
            %3247 = vmatprep.subr.mxu0 0.0
            %3248 = vmatpush1.msra.mxu0 %v3172
            %3249 = vmatprep.subr.mxu0 0.0
            %3250 = vmatpush1.msra.mxu0 %v3173
            %3251 = vmatprep.subr.mxu0 0.0
            %3252 = vmatpush1.msra.mxu0 %v3174
            %3253 = vmatprep.subr.mxu0 0.0
            %3254 = vmatpush1.msra.mxu0 %v3175
            %3255 = vmatprep.subr.mxu0 0.0
            %3256 = vmatpush1.msra.mxu0 %v3176
            %3257 = vmatprep.subr.mxu0 0.0
            %3258 = vmatpush1.msra.mxu0 0.0
            %3259 = vmatprep.subr.mxu0 0.0
            %3260 = vmatpush1.msra.mxu0 0.0
            %3261 = vmatprep.subr.mxu0 0.0
            %3262 = vmatpush1.msra.mxu0 0.0
            %3263 = vmatprep.subr.mxu0 0.0
            %3264 = vmatpush1.msra.mxu0 0.0
            %3265 = vmatprep.subr.mxu0 0.0
            %3266 = vmatpush1.msra.mxu0 0.0
            %3267 = vmatprep.subr.mxu0 0.0
            %3268 = vmatpush1.msra.mxu0 0.0
            %3269 = vmatprep.subr.mxu0 0.0
            %3270 = vmatpush1.msra.mxu0 0.0
            %3271 = vmatprep.subr.mxu0 0.0
            %3272 = vmatpush1.msra.mxu0 0.0
            %3273 = vmatprep.subr.mxu0 0.0
            %3274 = vmatpush1.msra.mxu0 0.0
            %3275 = vmatprep.subr.mxu0 0.0
            %3276 = vmatpush1.msra.mxu0 0.0
            %3277 = vmatprep.subr.mxu0 0.0
            %3278 = vmatpush1.msra.mxu0 0.0
            %3279 = vmatprep.subr.mxu0 0.0
            %3280 = vmatpush1.msra.mxu0 0.0
            %3281 = vmatprep.subr.mxu0 0.0
            %3282 = vmatpush1.msra.mxu0 0.0
            %3283 = vmatprep.subr.mxu0 0.0
            %3284 = vmatpush1.msra.mxu0 0.0
            %3285 = vmatprep.subr.mxu0 0.0
            %3286 = vmatpush1.msra.mxu0 0.0
            %3287 = vmatprep.subr.mxu0 0.0
            %3288 = vmatpush1.msra.mxu0 0.0
            %3289 = vmatprep.subr.mxu0 0.0
            %3290 = vmatpush1.msra.mxu0 0.0
            %3291 = vmatprep.subr.mxu0 0.0
            %3292 = vmatpush1.msra.mxu0 0.0
            %3293 = vmatprep.subr.mxu0 0.0
            %3294 = vmatpush1.msra.mxu0 0.0
            %3295 = vmatprep.subr.mxu0 0.0
            %3296 = vmatpush1.msra.mxu0 0.0
            %3297 = vmatprep.mubr.f32.mxu0 0.0
            %3298 = vmatmul.mubr.f32.gmra.mrb[0].mxu0 %v3186
            %v3299 = vpop.f32.mrb[0].mxu0
            %v3300 = vadd.f32 %v3182, %v3299
            %v3301 = vpop.f32.mrb[0].mxu0
            %3302 = vmatprep.mubr.f32.mxu0 0.0
            %3303 = vmatmul.mubr.f32.gmra.mrb[0].mxu0 %v3189
            %v3304 = vpop.f32.mrb[0].mxu0
            %v3305 = vadd.f32 %v3182, %v3304
            %v3306 = vpop.f32.mrb[0].mxu0
            %3307 = vmatprep.mubr.f32.mxu0 0.0
            %3308 = vmatmul.mubr.f32.gmra.mrb[0].mxu0 %v3192
            %v3309 = vpop.f32.mrb[0].mxu0
            %v3310 = vadd.f32 %v3182, %v3309
            %v3311 = vpop.f32.mrb[0].mxu0
            %3312 = vmatprep.mubr.f32.mxu0 0.0
            %3313 = vmatmul.mubr.f32.gmra.mrb[0].mxu0 %v3195
            %v3314 = vpop.f32.mrb[0].mxu0
            %v3315 = vadd.f32 %v3182, %v3314
            %v3316 = vpop.f32.mrb[0].mxu0
            %3317 = vmatprep.mubr.f32.mxu0 0.0
            %3318 = vmatmul.mubr.f32.gmra.mrb[0].mxu0 %v3198
            %v3319 = vpop.f32.mrb[0].mxu0
            %v3320 = vadd.f32 %v3182, %v3319
            %v3321 = vpop.f32.mrb[0].mxu0
            %3322 = vmatprep.mubr.f32.mxu0 0.0
            %3323 = vmatmul.mubr.f32.gmra.mrb[0].mxu0 %v3201
            %v3324 = vpop.f32.mrb[0].mxu0
            %v3325 = vadd.f32 %v3182, %v3324
            %v3326 = vpop.f32.mrb[0].mxu0
            %3327 = vmatprep.mubr.f32.mxu0 0.0
            %3328 = vmatmul.mubr.f32.gmra.mrb[0].mxu0 %v3204
            %v3329 = vpop.f32.mrb[0].mxu0
            %v3330 = vadd.f32 %v3182, %v3329
            %v3331 = vpop.f32.mrb[0].mxu0
            %3332 = vmatprep.mubr.f32.mxu0 0.0
            %3333 = vmatmul.mubr.f32.gmra.mrb[0].mxu0 %v3207
            %v3334 = vpop.f32.mrb[0].mxu0
            %v3335 = vadd.f32 %v3182, %v3334
            %v3336 = vpop.f32.mrb[0].mxu0
            %3337 = vmatprep.mubr.f32.mxu0 0.0
            %3338 = vmatmul.mubr.f32.gmra.mrb[0].mxu0 %v3210
            %v3339 = vpop.f32.mrb[0].mxu0
            %v3340 = vadd.f32 %v3182, %v3339
            %v3341 = vpop.f32.mrb[0].mxu0
            %3342 = vmatprep.mubr.f32.mxu0 0.0
            %3343 = vmatmul.mubr.f32.gmra.mrb[0].mxu0 %v3213
            %v3344 = vpop.f32.mrb[0].mxu0
            %v3345 = vadd.f32 %v3182, %v3344
            %v3346 = vpop.f32.mrb[0].mxu0
            %3347 = vmatprep.mubr.f32.mxu0 0.0
            %3348 = vmatmul.mubr.f32.gmra.mrb[0].mxu0 %v3216
            %v3349 = vpop.f32.mrb[0].mxu0
            %v3350 = vadd.f32 %v3182, %v3349
            %v3351 = vpop.f32.mrb[0].mxu0
            %3352 = vmatprep.mubr.f32.mxu0 0.0
            %3353 = vmatmul.mubr.f32.gmra.mrb[0].mxu0 %v3219
            %v3354 = vpop.f32.mrb[0].mxu0
            %v3355 = vadd.f32 %v3182, %v3354
            %v3356 = vpop.f32.mrb[0].mxu0
            %3357 = vmatprep.mubr.f32.mxu0 0.0
            %3358 = vmatmul.mubr.f32.gmra.mrb[0].mxu0 %v3222
            %v3359 = vpop.f32.mrb[0].mxu0
            %v3360 = vadd.f32 %v3182, %v3359
            %v3361 = vpop.f32.mrb[0].mxu0
            %3362 = vmatprep.mubr.f32.mxu0 0.0
            %3363 = vmatmul.mubr.f32.gmra.mrb[0].mxu0 %v3225
            %v3364 = vpop.f32.mrb[0].mxu0
            %v3365 = vadd.f32 %v3182, %v3364
            %v3366 = vpop.f32.mrb[0].mxu0
            %3367 = vmatprep.mubr.f32.mxu0 0.0
            %3368 = vmatmul.mubr.f32.gmra.mrb[0].mxu0 %v3228
            %v3369 = vpop.f32.mrb[0].mxu0
            %v3370 = vadd.f32 %v3182, %v3369
            %v3371 = vpop.f32.mrb[0].mxu0
            %3372 = vmatprep.mubr.f32.mxu0 0.0
            %3373 = vmatmul.mubr.f32.gmra.mrb[0].mxu0 %v3231
            %v3374 = vpop.f32.mrb[0].mxu0
            %v3375 = vadd.f32 %v3182, %v3374
            %v3376 = vpop.f32.mrb[0].mxu0
            %3377 = vdwg.mxu0
            %s3378 = scalar_lea.vmem [#allocation11], %s2647
            %3379 = vst [vmem:[%s3378] sm:$0xff] %v3300
            %3380 = vst [vmem:[%s3378 + $0x8] sm:$0xff] %v3305
            %3381 = vst [vmem:[%s3378 + $0x10] sm:$0xff] %v3310
            %3382 = vst [vmem:[%s3378 + $0x18] sm:$0xff] %v3315
            %3383 = vst [vmem:[%s3378 + $0x20] sm:$0xff] %v3320
            %3384 = vst [vmem:[%s3378 + $0x28] sm:$0xff] %v3325
            %3385 = vst [vmem:[%s3378 + $0x30] sm:$0xff] %v3330
            %3386 = vst [vmem:[%s3378 + $0x38] sm:$0xff] %v3335
            %3387 = vst [vmem:[%s3378 + $0x40] sm:$0xff] %v3340
            %3388 = vst [vmem:[%s3378 + $0x48] sm:$0xff] %v3345
            %3389 = vst [vmem:[%s3378 + $0x50] sm:$0xff] %v3350
            %3390 = vst [vmem:[%s3378 + $0x58] sm:$0xff] %v3355
            %3391 = vst [vmem:[%s3378 + $0x60] sm:$0xff] %v3360
            %3392 = vst [vmem:[%s3378 + $0x68] sm:$0xff] %v3365
            %3393 = vst [vmem:[%s3378 + $0x70] sm:$0xff] %v3370
            %3394 = vst [vmem:[%s3378 + $0x78] sm:$0xff] %v3375
          $region117: #{tpu_custom_call.1} parent=104 // pred_fallthru
            _
        $region105: #{tpu_custom_call.1} parent=80 // pred_fallthru
          _
        // Predicated region
        $region118: #{tpu_custom_call.1} parent=80 // pred_check
          %p3395 = pneg %p185
        $region119: #{tpu_custom_call.1} parent=80 // pred_check_branch
          %3397 = sbr.rel (%p3395) target = $region121
        $region120: #{tpu_custom_call.1} parent=80 // pred_region
          %s3399 = ssub.s32 4096, 4096
          %3400 = vsyncadd [#allocation7], %s3399
          %s3401 = sshll.u32 [#allocation11], 4
          %s3402 = int_to_ptr.vmem [resolvable:$true] %s3401
          %3407 = dma.vmem_to_hbm [thread:$0]  %s3402, 4096, %s6, [#allocation7], 128, 128, 8
        $region121: #{tpu_custom_call.1} parent=80 // pred_fallthru
          _
        // Predicated region
        $region122: #{tpu_custom_call.1} parent=80 // pred_check
          %p3408 = pneg %p185
        $region123: #{tpu_custom_call.1} parent=80 // pred_check_branch
          %3410 = sbr.rel (%p3408) target = $region125
        $region124: #{tpu_custom_call.1} parent=80 // pred_region
          %3411 = dma.done [#allocation7], 4096
        $region125: #{tpu_custom_call.1} parent=80 // pred_fallthru
          _
      $region81: #{tpu_custom_call.1} parent=5 // pred_fallthru
        _
      %p3412 = scmp.le.s32.totalorder 2, %s15
      // Predicated region
      $region126: #{tpu_custom_call.1} parent=5 // pred_check
        %p3413 = pneg %p3412
      $region127: #{tpu_custom_call.1} parent=5 // pred_check_branch
        %3415 = sbr.rel (%p3413) target = $region129
      $region128: #{tpu_custom_call.1} parent=5 // pred_region
        %s3416 = ssub.s32 %s15, 2
      $region129: #{tpu_custom_call.1} parent=5 // pred_fallthru
        _
    $region6: #{tpu_custom_call.1} parent=1 // loop_footer
      %s19 = sadd.s32 1, %s15
    $region7: #{tpu_custom_call.1} parent=1 // loop_footer_branch
      %14 = sbr.rel target = $region3
    $region8: #{tpu_custom_call.1} parent=1 // loop_exit
      _
    %3417 = vsyncpa [#allocation6], 1
    %s3418 = scalar_lea.sflag [#allocation6], 1
    %3419 = vsyncpa %s3418, 1
    %3420 = vsyncpa [#allocation10], 1
    %3421 = vsyncpa [#allocation7], 1
    %s3422 = scalar_lea.sflag [#allocation7], 1
    %3423 = vsyncpa %s3422, 1

</llo_original>
